<compile_context>
chip_gen: v7x
topology: tpu7x:2x2x1
jax: 0.10.0
libtpu: 0.0.40
codegen_flags: <defaults>
</compile_context>

<pallas_src>
import math
import jax
import jax.numpy as jnp
from jax.experimental import pallas as pl
from jax.experimental.pallas import tpu as pltpu

# ---------------- config (small, consistent with the forward) ----------------
ENC_IMG_SIZE = 32            # image_encoder.img_size
PATCH = 4                    # patch-embed conv kernel == stride
IN_CH = 3
PE_FEATS = 128               # PositionEmbeddingRandom(128)
EMBED = 2 * PE_FEATS         # 256, so image_pe and image_embedding channels match
HIDDEN = 64
NUM_MASKS = 2
HP = ENC_IMG_SIZE // PATCH   # 8   encoder token grid
T = HP * HP                  # 64  tokens
PP = PATCH * PATCH           # 16  pixels per patch (per channel)
CP = IN_CH * PP              # 48  patch-embed contraction size


# ------------- bilinear-resize weights (F.interpolate, align_corners=False) --------
def _interp_matrix(out_size, in_size):
    """Row-interpolation matrix reproducing torch bilinear, align_corners=False."""
    i = jnp.arange(out_size, dtype=jnp.float32)
    src = (i + 0.5) * (in_size / out_size) - 0.5
    src = jnp.maximum(src, 0.0)
    i0 = jnp.minimum(jnp.floor(src).astype(jnp.int32), in_size - 1)
    i1 = jnp.minimum(i0 + 1, in_size - 1)
    lam = src - i0.astype(jnp.float32)
    w = jnp.zeros((out_size, in_size), jnp.float32)
    rows = jnp.arange(out_size)
    w = w.at[rows, i0].add(1.0 - lam)
    w = w.at[rows, i1].add(lam)
    return w


def _kron_resize_matrix(out_h, out_w, in_h, in_w):
    """K (out_h*out_w, in_h*in_w): flat separable bilinear resize, row = oh*out_w+ow."""
    wr = _interp_matrix(out_h, in_h)           # (out_h, in_h)
    wc = _interp_matrix(out_w, in_w)           # (out_w, in_w)
    return jnp.einsum("oi,pj->opij", wr, wc).reshape(out_h * out_w, in_h * in_w)


def _downsample_patch_matrix(in_h, in_w):
    """(in_h*in_w, T*PP) resize matrix whose output columns are ordered
    (token t = kh*HP+kw, patch pixel p = ph*PATCH+pw): patch-major layout."""
    k = _kron_resize_matrix(ENC_IMG_SIZE, ENC_IMG_SIZE, in_h, in_w)   # (1024, in_hw)
    kt = k.T                                                          # cols (oh, ow)
    kt = kt.reshape(in_h * in_w, HP, PATCH, HP, PATCH)                # (in, kh, ph, kw, pw)
    kt = kt.transpose(0, 1, 3, 2, 4).reshape(in_h * in_w, T * PP)     # cols (kh, kw, ph, pw)
    return kt
    # TODO(synk): switch to the separable (Wr, Wc) two-matmul form before scaling
    # the input resolution (the dense Kronecker matrix grows as (H*W)x(T*PP) and
    # would blow v7x's 64 MiB VMEM at realistic image sizes).


# ---------------- kernel 1: bilinear resize, patch-major bf16 output ----------------
def _resize_kernel(x_ref, k_ref, o_ref):
    # one lane-dense Kronecker matmul: (B*C, H*W) @ (H*W, T*PP)
    acc = jnp.dot(x_ref[...].astype(jnp.bfloat16), k_ref[...],
                  preferred_element_type=jnp.float32)
    o_ref[...] = acc.astype(jnp.bfloat16)


def resize_to_patches(x2, kdt):
    cb, hw = x2.shape
    tp = kdt.shape[1]
    ce = pl.CostEstimate(flops=2 * cb * hw * tp,
                         transcendentals=0,
                         bytes_accessed=cb * hw * 4 + hw * tp * 2 + cb * tp * 2)
    return pl.pallas_call(
        _resize_kernel,
        out_shape=jax.ShapeDtypeStruct((cb, tp), jnp.bfloat16),
        grid=(1,),
        in_specs=[pl.BlockSpec((cb, hw), lambda i: (0, 0)),
                  pl.BlockSpec((hw, tp), lambda i: (0, 0))],
        out_specs=pl.BlockSpec((cb, tp), lambda i: (0, 0)),
        compiler_params=pltpu.CompilerParams(dimension_semantics=("arbitrary",)),
        cost_estimate=ce,
    )(x2, kdt)


# ------- kernel 2: patch-embed + PE + decoder MLP + IoU head + mask upsample --------
def fused_head(xrt, params, kut, batch):
    E, Hd, M, F = EMBED, HIDDEN, NUM_MASKS, PE_FEATS
    BT = batch * T
    out_hw = kut.shape[1]
    two_pi = 2.0 * math.pi

    def kernel(xrt_ref, pwt_ref, pb_ref, g_ref, w1t_ref, b1_ref,
               w2t_ref, b2_ref, iw_ref, ib_ref, kut_ref,
               mask_ref, iou_ref):
        bf16 = jnp.bfloat16
        f32 = jnp.float32

        # --- image_encoder patch embedding, feature-major: (E, C*PP) @ (C*PP, B*T)
        emb_t = jnp.dot(pwt_ref[...].astype(bf16), xrt_ref[...],
                        preferred_element_type=f32) + pb_ref[...]            # (E, BT)

        # --- pe_layer: PositionEmbeddingRandom on the HPxHP token grid (in VMEM)
        ti = jax.lax.broadcasted_iota(jnp.int32, (F, T), 1).astype(f32)       # token idx
        ty = jnp.floor(ti * (1.0 / HP))
        tx = ti - ty * HP
        cy = (ty + 0.5) * (2.0 / HP) - 1.0                                    # in [-1, 1]
        cx = (tx + 0.5) * (2.0 / HP) - 1.0
        proj = (cx * g_ref[:, 0:1] + cy * g_ref[:, 1:2]) * two_pi             # (F, T)
        pe_t = jnp.concatenate([jnp.sin(proj), jnp.cos(proj)], axis=0)        # (E, T)
        pe_bt = jnp.concatenate([pe_t] * batch, axis=1)                       # (E, BT)

        # --- mask_decoder MLP on (image_embedding + image_pe), feature-major
        tok_t = (emb_t + pe_bt).astype(bf16)
        h_t = jnp.dot(w1t_ref[...].astype(bf16), tok_t,
                      preferred_element_type=f32) + b1_ref[...]               # (Hd, BT)
        h_t = jnp.maximum(h_t, 0.0).astype(bf16)
        m_t = jnp.dot(w2t_ref[...].astype(bf16), h_t,
                      preferred_element_type=f32) + b2_ref[...]               # (M, BT)

        # --- bilinear mask upsample: ONE MXU matmul + ONE unmasked lane-dense store
        mask_lhs = jnp.concatenate(
            [m_t[:, b * T:(b + 1) * T] for b in range(batch)], axis=0)        # (B*M, T)
        mask_ref[...] = jnp.dot(mask_lhs.astype(bf16), kut_ref[...],
                                preferred_element_type=f32)                   # (B*M, out_hw)

        # --- IoU head: per-batch mean pool of the embedding, then linear
        rows = []
        for b in range(batch):
            pooled_b = jnp.mean(emb_t[:, b * T:(b + 1) * T],
                                axis=1, keepdims=True)                        # (E, 1)
            rows.append(jnp.sum(pooled_b * iw_ref[...],
                                axis=0, keepdims=True))                       # (1, M)
        iou_ref[...] = jnp.concatenate(rows, axis=0) + ib_ref[...]            # (B, M)

    flops = 2 * (E * CP * BT + Hd * E * BT + M * Hd * BT + batch * M * T * out_hw)
    bytes_accessed = (CP * BT * 2 + E * CP * 4 + E * 4 + F * 2 * 4 +
                      Hd * E * 4 + Hd * 4 + M * Hd * 4 + M * 4 +
                      E * M * 4 + M * 4 + T * out_hw * 2 +
                      batch * M * out_hw * 4 + batch * M * 4)
    ce = pl.CostEstimate(flops=flops, transcendentals=2 * F * T,
                         bytes_accessed=bytes_accessed)

    # TODO(synk): on v7x, add a leading grid axis over B*T tiles with
    # dimension_semantics=("parallel", ...) once batch/token counts grow past toy size.
    return pl.pallas_call(
        kernel,
        out_shape=(jax.ShapeDtypeStruct((batch * M, out_hw), jnp.float32),
                   jax.ShapeDtypeStruct((batch, M), jnp.float32)),
        grid=(1,),
        in_specs=[pl.BlockSpec((CP, BT), lambda i: (0, 0)),
                  pl.BlockSpec((E, CP), lambda i: (0, 0)),
                  pl.BlockSpec((E, 1), lambda i: (0, 0)),
                  pl.BlockSpec((F, 2), lambda i: (0, 0)),
                  pl.BlockSpec((Hd, E), lambda i: (0, 0)),
                  pl.BlockSpec((Hd, 1), lambda i: (0, 0)),
                  pl.BlockSpec((M, Hd), lambda i: (0, 0)),
                  pl.BlockSpec((M, 1), lambda i: (0, 0)),
                  pl.BlockSpec((E, M), lambda i: (0, 0)),
                  pl.BlockSpec((1, M), lambda i: (0, 0)),
                  pl.BlockSpec((T, out_hw), lambda i: (0, 0))],
        out_specs=(pl.BlockSpec((batch * M, out_hw), lambda i: (0, 0)),
                   pl.BlockSpec((batch, M), lambda i: (0, 0))),
        compiler_params=pltpu.CompilerParams(dimension_semantics=("arbitrary",)),
        cost_estimate=ce,
    )(xrt, params["patch_w_t"], params["patch_b"], params["pe_gauss"],
      params["dec_w1_t"], params["dec_b1"], params["dec_w2_t"], params["dec_b2"],
      params["iou_w"], params["iou_b"], kut)


# ---------------- AutoSamSeg.forward ---------------------------------------------
def auto_sam_seg_forward(x, params):
    B, C, H, W = x.shape
    original_size = x.shape[-1]   # matches the PyTorch module (assumes square input)

    # constants derived only from static shapes (constant-folded by XLA), bf16
    kdt = _downsample_patch_matrix(H, W).astype(jnp.bfloat16)            # (H*W, T*PP)
    if HP == original_size:       # "if mask.shape[-1] != original_size" in the module
        kut = jnp.eye(T, dtype=jnp.bfloat16)                             # no upsample
    else:
        kut = _kron_resize_matrix(original_size, original_size,
                                  HP, HP).T.astype(jnp.bfloat16)         # (T, orig^2)

    # 1) F.interpolate(x, (img_size, img_size), bilinear, align_corners=False),
    #    emitted directly in patch-major column order (kernel 1).
    x2 = x.reshape(B * C, H * W)                 # rows (b, c) -- free reshape, no transpose
    xr = resize_to_patches(x2, kdt)              # (B*C, T*PP) bf16, 1024 lanes

    # the single small relayout between the kernels: (B,C,T,PP) -> (C*PP, B*T)
    # so kernel 2 can run one K=C*PP patch-embed matmul (feature-major).
    xrt = xr.reshape(B, C, T, PP).transpose(1, 3, 0, 2).reshape(C * PP, B * T)

    # 2-5) image_encoder (patch embed) + pe_layer + mask_decoder + mask upsample,
    #      all fused in kernel 2.
    mask_flat, iou_pred = fused_head(xrt, params, kut, B)
    mask = mask_flat.reshape(B, NUM_MASKS, original_size, original_size)
    return mask, iou_pred


# ---------------- deterministic parameter init -------------------------------------
def init_params(key):
    # weights stored in the feature-major layouts the fused kernel consumes
    # (conv weight as (out, in*k*k); linear weights as (out, in) like nn.Linear.weight;
    #  pe_gauss stored as (F, 2) = transpose of SAM's (2, F) gaussian matrix).
    ks = jax.random.split(key, 5)
    return dict(
        patch_w_t=jax.random.normal(ks[0], (EMBED, CP), jnp.float32) * 0.02,
        patch_b=jnp.zeros((EMBED, 1), jnp.float32),
        pe_gauss=jax.random.normal(ks[1], (PE_FEATS, 2), jnp.float32),   # scale=1.0, as in SAM
        dec_w1_t=jax.random.normal(ks[2], (HIDDEN, EMBED), jnp.float32) * 0.02,
        dec_b1=jnp.zeros((HIDDEN, 1), jnp.float32),
        dec_w2_t=jax.random.normal(ks[3], (NUM_MASKS, HIDDEN), jnp.float32) * 0.02,
        dec_b2=jnp.zeros((NUM_MASKS, 1), jnp.float32),
        iou_w=jax.random.normal(ks[4], (EMBED, NUM_MASKS), jnp.float32) * 0.02,
        iou_b=jnp.zeros((1, NUM_MASKS), jnp.float32),
    )


if __name__ == "__main__":
    key = jax.random.PRNGKey(0)
    kx, kp = jax.random.split(key)
    x = jax.random.normal(kx, (2, IN_CH, 16, 16), jnp.float32)   # NCHW, original_size=16
    params = init_params(kp)

    mask, iou_pred = jax.jit(auto_sam_seg_forward)(x, params)
    jax.block_until_ready((mask, iou_pred))

    assert mask.shape == (2, NUM_MASKS, 16, 16)
    assert iou_pred.shape == (2, NUM_MASKS)
    assert mask.dtype == jnp.float32 and iou_pred.dtype == jnp.float32
    assert bool(jnp.isfinite(mask).all()) and bool(jnp.isfinite(iou_pred).all())
    print("KERNEL_OK")
</pallas_src>

<mosaic_0001>
module attributes {stable_mosaic.version = 11 : i64} {
  func.func private @main(%arg0: i32) attributes {dimension_semantics = [#tpu.dimension_semantics<core_parallel>], iteration_bounds = array<i64: 2>, tpu.core_type = #tpu.core_type<sc_scalar_subcore>, window_params = []} {
    return
  }
}

module attributes {stable_mosaic.version = 11 : i64} {
  func.func private @main(%arg0: i32) attributes {dimension_semantics = [#tpu.dimension_semantics<core_parallel>], iteration_bounds = array<i64: 2>, tpu.core_type = #tpu.core_type<sc_scalar_subcore>, window_params = []} {
    return
  }
}

module attributes {stable_mosaic.version = 11 : i64} {
  func.func @_resize_kernel(%arg0: i32, %arg1: memref<6x256xf32, #tpu.memory_space<vmem>>, %arg2: memref<256x1024xbf16, #tpu.memory_space<vmem>>, %arg3: memref<6x1024xbf16, #tpu.memory_space<vmem>>) attributes {dimension_semantics = [#tpu.dimension_semantics<arbitrary>], iteration_bounds = array<i64: 1>, scalar_prefetch = 0 : i64, scratch_operands = 0 : i64, tpu.core_type = #tpu.core_type<tc>, window_params = [{pipeline_mode = #tpu.pipeline_mode<synchronous>, transform_indices = @transform_0, window_bounds = array<i64: 6, 256>}, {pipeline_mode = #tpu.pipeline_mode<synchronous>, transform_indices = @transform_1, window_bounds = array<i64: 256, 1024>}, {pipeline_mode = #tpu.pipeline_mode<synchronous>, transform_indices = @transform_2, window_bounds = array<i64: 6, 1024>}]} {
    %c0 = arith.constant 0 : index
    %c0_0 = arith.constant 0 : index
    %0 = vector.load %arg1[%c0, %c0_0] : memref<6x256xf32, #tpu.memory_space<vmem>>, vector<6x256xf32>
    %1 = arith.truncf %0 : vector<6x256xf32> to vector<6x256xbf16>
    %c0_1 = arith.constant 0 : index
    %c0_2 = arith.constant 0 : index
    %2 = vector.load %arg2[%c0_1, %c0_2] : memref<256x1024xbf16, #tpu.memory_space<vmem>>, vector<256x1024xbf16>
    %cst = arith.constant dense<0.000000e+00> : vector<6x1024xf32>
    %3 = tpu.matmul %1, %2, %cst {dimension_numbers = #tpu.dot_dimension_numbers<[1], [0], [0], [1], [0, 0, 1, 1], [], []>} : vector<6x256xbf16>, vector<256x1024xbf16>, vector<6x1024xf32> -> vector<6x1024xf32>
    %4 = arith.truncf %3 : vector<6x1024xf32> to vector<6x1024xbf16>
    %c0_3 = arith.constant 0 : index
    %c0_4 = arith.constant 0 : index
    %5 = vector.load %arg3[%c0_3, %c0_4] : memref<6x1024xbf16, #tpu.memory_space<vmem>>, vector<6x1024xbf16>
    tpu.vector_store %arg3[%c0_3, %c0_4], %4 {strides = array<i32>} : memref<6x1024xbf16, #tpu.memory_space<vmem>>, vector<6x1024xbf16>,
    return
  }
  func.func @transform_0(%arg0: i32) -> (i32, i32) {
    %c0_i32 = arith.constant 0 : i32
    %c0_i32_0 = arith.constant 0 : i32
    %c0_i32_1 = arith.constant 0 : i32
    return %c0_i32, %c0_i32_0 : i32, i32
  }
  func.func @transform_1(%arg0: i32) -> (i32, i32) {
    %c0_i32 = arith.constant 0 : i32
    %c0_i32_0 = arith.constant 0 : i32
    %c0_i32_1 = arith.constant 0 : i32
    return %c0_i32, %c0_i32_0 : i32, i32
  }
  func.func @transform_2(%arg0: i32) -> (i32, i32) {
    %c0_i32 = arith.constant 0 : i32
    %c0_i32_0 = arith.constant 0 : i32
    %c0_i32_1 = arith.constant 0 : i32
    return %c0_i32, %c0_i32_0 : i32, i32
  }
}

module attributes {stable_mosaic.version = 11 : i64} {
  func.func @kernel(%arg0: i32, %arg1: memref<48x128xbf16, #tpu.memory_space<vmem>>, %arg2: memref<256x48xf32, #tpu.memory_space<vmem>>, %arg3: memref<256x1xf32, #tpu.memory_space<vmem>>, %arg4: memref<128x2xf32, #tpu.memory_space<vmem>>, %arg5: memref<64x256xf32, #tpu.memory_space<vmem>>, %arg6: memref<64x1xf32, #tpu.memory_space<vmem>>, %arg7: memref<2x64xf32, #tpu.memory_space<vmem>>, %arg8: memref<2x1xf32, #tpu.memory_space<vmem>>, %arg9: memref<256x2xf32, #tpu.memory_space<vmem>>, %arg10: memref<1x2xf32, #tpu.memory_space<vmem>>, %arg11: memref<64x256xbf16, #tpu.memory_space<vmem>>, %arg12: memref<4x256xf32, #tpu.memory_space<vmem>>, %arg13: memref<2x2xf32, #tpu.memory_space<vmem>>) attributes {dimension_semantics = [#tpu.dimension_semantics<arbitrary>], iteration_bounds = array<i64: 1>, scalar_prefetch = 0 : i64, scratch_operands = 0 : i64, tpu.core_type = #tpu.core_type<tc>, window_params = [{pipeline_mode = #tpu.pipeline_mode<synchronous>, transform_indices = @transform_0, window_bounds = array<i64: 48, 128>}, {pipeline_mode = #tpu.pipeline_mode<synchronous>, transform_indices = @transform_1, window_bounds = array<i64: 256, 48>}, {pipeline_mode = #tpu.pipeline_mode<synchronous>, transform_indices = @transform_2, window_bounds = array<i64: 256, 1>}, {pipeline_mode = #tpu.pipeline_mode<synchronous>, transform_indices = @transform_3, window_bounds = array<i64: 128, 2>}, {pipeline_mode = #tpu.pipeline_mode<synchronous>, transform_indices = @transform_4, window_bounds = array<i64: 64, 256>}, {pipeline_mode = #tpu.pipeline_mode<synchronous>, transform_indices = @transform_5, window_bounds = array<i64: 64, 1>}, {pipeline_mode = #tpu.pipeline_mode<synchronous>, transform_indices = @transform_6, window_bounds = array<i64: 2, 64>}, {pipeline_mode = #tpu.pipeline_mode<synchronous>, transform_indices = @transform_7, window_bounds = array<i64: 2, 1>}, {pipeline_mode = #tpu.pipeline_mode<synchronous>, transform_indices = @transform_8, window_bounds = array<i64: 256, 2>}, {pipeline_mode = #tpu.pipeline_mode<synchronous>, transform_indices = @transform_9, window_bounds = array<i64: 1, 2>}, {pipeline_mode = #tpu.pipeline_mode<synchronous>, transform_indices = @transform_10, window_bounds = array<i64: 64, 256>}, {pipeline_mode = #tpu.pipeline_mode<synchronous>, transform_indices = @transform_11, window_bounds = array<i64: 4, 256>}, {pipeline_mode = #tpu.pipeline_mode<synchronous>, transform_indices = @transform_12, window_bounds = array<i64: 2, 2>}]} {
    %c0 = arith.constant 0 : index
    %c0_0 = arith.constant 0 : index
    %0 = vector.load %arg2[%c0, %c0_0] : memref<256x48xf32, #tpu.memory_space<vmem>>, vector<256x48xf32>
    %1 = arith.truncf %0 : vector<256x48xf32> to vector<256x48xbf16>
    %c0_1 = arith.constant 0 : index
    %c0_2 = arith.constant 0 : index
    %2 = vector.load %arg1[%c0_1, %c0_2] : memref<48x128xbf16, #tpu.memory_space<vmem>>, vector<48x128xbf16>
    %cst = arith.constant dense<0.000000e+00> : vector<256x128xf32>
    %3 = tpu.matmul %1, %2, %cst {dimension_numbers = #tpu.dot_dimension_numbers<[1], [0], [0], [1], [0, 0, 1, 1], [], []>} : vector<256x48xbf16>, vector<48x128xbf16>, vector<256x128xf32> -> vector<256x128xf32>
    %c0_3 = arith.constant 0 : index
    %c0_4 = arith.constant 0 : index
    %4 = vector.load %arg3[%c0_3, %c0_4] : memref<256x1xf32, #tpu.memory_space<vmem>>, vector<256x1xf32>
    %5 = vector.broadcast %4 : vector<256x1xf32> to vector<256x128xf32>
    %6 = arith.addf %3, %5 : vector<256x128xf32>
    %7 = tpu.iota {dimensions = array<i32: 1>} : vector<128x64xi32>
    %8 = arith.sitofp %7 : vector<128x64xi32> to vector<128x64xf32>
    %cst_5 = arith.constant 1.250000e-01 : f32
    %9 = vector.broadcast %cst_5 : f32 to vector<128x64xf32>
    %10 = arith.mulf %8, %9 : vector<128x64xf32>
    %11 = math.floor %10 : vector<128x64xf32>
    %cst_6 = arith.constant 8.000000e+00 : f32
    %12 = vector.broadcast %cst_6 : f32 to vector<128x64xf32>
    %13 = arith.mulf %11, %12 : vector<128x64xf32>
    %14 = arith.subf %8, %13 : vector<128x64xf32>
    %cst_7 = arith.constant 5.000000e-01 : f32
    %15 = vector.broadcast %cst_7 : f32 to vector<128x64xf32>
    %16 = arith.addf %11, %15 : vector<128x64xf32>
    %cst_8 = arith.constant 2.500000e-01 : f32
    %17 = vector.broadcast %cst_8 : f32 to vector<128x64xf32>
    %18 = arith.mulf %16, %17 : vector<128x64xf32>
    %cst_9 = arith.constant 1.000000e+00 : f32
    %19 = vector.broadcast %cst_9 : f32 to vector<128x64xf32>
    %20 = arith.subf %18, %19 : vector<128x64xf32>
    %cst_10 = arith.constant 5.000000e-01 : f32
    %21 = vector.broadcast %cst_10 : f32 to vector<128x64xf32>
    %22 = arith.addf %14, %21 : vector<128x64xf32>
    %cst_11 = arith.constant 2.500000e-01 : f32
    %23 = vector.broadcast %cst_11 : f32 to vector<128x64xf32>
    %24 = arith.mulf %22, %23 : vector<128x64xf32>
    %cst_12 = arith.constant 1.000000e+00 : f32
    %25 = vector.broadcast %cst_12 : f32 to vector<128x64xf32>
    %26 = arith.subf %24, %25 : vector<128x64xf32>
    %c0_13 = arith.constant 0 : index
    %c0_14 = arith.constant 0 : index
    %27 = vector.load %arg4[%c0_13, %c0_14] : memref<128x2xf32, #tpu.memory_space<vmem>>, vector<128x1xf32>
    %28 = vector.broadcast %27 : vector<128x1xf32> to vector<128x64xf32>
    %29 = arith.mulf %26, %28 : vector<128x64xf32>
    %c0_15 = arith.constant 0 : index
    %c1 = arith.constant 1 : index
    %30 = vector.load %arg4[%c0_15, %c1] : memref<128x2xf32, #tpu.memory_space<vmem>>, vector<128x1xf32>
    %31 = vector.broadcast %30 : vector<128x1xf32> to vector<128x64xf32>
    %32 = arith.mulf %20, %31 : vector<128x64xf32>
    %33 = arith.addf %29, %32 : vector<128x64xf32>
    %cst_16 = arith.constant 6.28318548 : f32
    %34 = vector.broadcast %cst_16 : f32 to vector<128x64xf32>
    %35 = arith.mulf %33, %34 : vector<128x64xf32>
    %36 = math.sin %35 : vector<128x64xf32>
    %37 = math.cos %35 : vector<128x64xf32>
    %38 = tpu.concatenate %36, %37 in 0 : vector<128x64xf32>, vector<128x64xf32> -> vector<256x64xf32>
    %39 = tpu.concatenate %38, %38 in 1 : vector<256x64xf32>, vector<256x64xf32> -> vector<256x128xf32>
    %40 = arith.addf %6, %39 : vector<256x128xf32>
    %41 = arith.truncf %40 : vector<256x128xf32> to vector<256x128xbf16>
    %c0_17 = arith.constant 0 : index
    %c0_18 = arith.constant 0 : index
    %42 = vector.load %arg5[%c0_17, %c0_18] : memref<64x256xf32, #tpu.memory_space<vmem>>, vector<64x256xf32>
    %43 = arith.truncf %42 : vector<64x256xf32> to vector<64x256xbf16>
    %cst_19 = arith.constant dense<0.000000e+00> : vector<64x128xf32>
    %44 = tpu.matmul %43, %41, %cst_19 {dimension_numbers = #tpu.dot_dimension_numbers<[1], [0], [0], [1], [0, 0, 1, 1], [], []>} : vector<64x256xbf16>, vector<256x128xbf16>, vector<64x128xf32> -> vector<64x128xf32>
    %c0_20 = arith.constant 0 : index
    %c0_21 = arith.constant 0 : index
    %45 = vector.load %arg6[%c0_20, %c0_21] : memref<64x1xf32, #tpu.memory_space<vmem>>, vector<64x1xf32>
    %46 = vector.broadcast %45 : vector<64x1xf32> to vector<64x128xf32>
    %47 = arith.addf %44, %46 : vector<64x128xf32>
    %cst_22 = arith.constant 0.000000e+00 : f32
    %48 = vector.broadcast %cst_22 : f32 to vector<64x128xf32>
    %49 = arith.maximumf %47, %48 : vector<64x128xf32>
    %50 = arith.truncf %49 : vector<64x128xf32> to vector<64x128xbf16>
    %c0_23 = arith.constant 0 : index
    %c0_24 = arith.constant 0 : index
    %51 = vector.load %arg7[%c0_23, %c0_24] : memref<2x64xf32, #tpu.memory_space<vmem>>, vector<2x64xf32>
    %52 = arith.truncf %51 : vector<2x64xf32> to vector<2x64xbf16>
    %cst_25 = arith.constant dense<0.000000e+00> : vector<2x128xf32>
    %53 = tpu.matmul %52, %50, %cst_25 {dimension_numbers = #tpu.dot_dimension_numbers<[1], [0], [0], [1], [0, 0, 1, 1], [], []>} : vector<2x64xbf16>, vector<64x128xbf16>, vector<2x128xf32> -> vector<2x128xf32>
    %c0_26 = arith.constant 0 : index
    %c0_27 = arith.constant 0 : index
    %54 = vector.load %arg8[%c0_26, %c0_27] : memref<2x1xf32, #tpu.memory_space<vmem>>, vector<2x1xf32>
    %55 = vector.broadcast %54 : vector<2x1xf32> to vector<2x128xf32>
    %56 = arith.addf %53, %55 : vector<2x128xf32>
    %57 = vector.extract_strided_slice %56 {offsets = [0, 0], sizes = [2, 64], strides = [1, 1]} : vector<2x128xf32> to vector<2x64xf32>
    %58 = vector.extract_strided_slice %56 {offsets = [0, 64], sizes = [2, 64], strides = [1, 1]} : vector<2x128xf32> to vector<2x64xf32>
    %59 = tpu.concatenate %57, %58 in 0 : vector<2x64xf32>, vector<2x64xf32> -> vector<4x64xf32>
    %60 = arith.truncf %59 : vector<4x64xf32> to vector<4x64xbf16>
    %c0_28 = arith.constant 0 : index
    %c0_29 = arith.constant 0 : index
    %61 = vector.load %arg11[%c0_28, %c0_29] : memref<64x256xbf16, #tpu.memory_space<vmem>>, vector<64x256xbf16>
    %cst_30 = arith.constant dense<0.000000e+00> : vector<4x256xf32>
    %62 = tpu.matmul %60, %61, %cst_30 {dimension_numbers = #tpu.dot_dimension_numbers<[1], [0], [0], [1], [0, 0, 1, 1], [], []>} : vector<4x64xbf16>, vector<64x256xbf16>, vector<4x256xf32> -> vector<4x256xf32>
    %c0_31 = arith.constant 0 : index
    %c0_32 = arith.constant 0 : index
    %63 = vector.load %arg12[%c0_31, %c0_32] : memref<4x256xf32, #tpu.memory_space<vmem>>, vector<4x256xf32>
    tpu.vector_store %arg12[%c0_31, %c0_32], %62 {strides = array<i32>} : memref<4x256xf32, #tpu.memory_space<vmem>>, vector<4x256xf32>,
    %64 = vector.extract_strided_slice %6 {offsets = [0, 0], sizes = [256, 64], strides = [1, 1]} : vector<256x128xf32> to vector<256x64xf32>
    %cst_33 = arith.constant dense<0.000000e+00> : vector<256xf32>
    %65 = vector.multi_reduction <add>, %64, %cst_33 [1] : vector<256x64xf32> to vector<256xf32>
    %66 = vector.shape_cast %65 : vector<256xf32> to vector<256x1xf32>
    %cst_34 = arith.constant 6.400000e+01 : f32
    %67 = vector.broadcast %cst_34 : f32 to vector<256x1xf32>
    %68 = arith.divf %66, %67 : vector<256x1xf32>
    %c0_35 = arith.constant 0 : index
    %c0_36 = arith.constant 0 : index
    %69 = vector.load %arg9[%c0_35, %c0_36] : memref<256x2xf32, #tpu.memory_space<vmem>>, vector<256x2xf32>
    %70 = vector.broadcast %68 : vector<256x1xf32> to vector<256x2xf32>
    %71 = arith.mulf %70, %69 : vector<256x2xf32>
    %cst_37 = arith.constant dense<0.000000e+00> : vector<2xf32>
    %72 = vector.multi_reduction <add>, %71, %cst_37 [0] : vector<256x2xf32> to vector<2xf32>
    %73 = vector.shape_cast %72 : vector<2xf32> to vector<1x2xf32>
    %74 = vector.extract_strided_slice %6 {offsets = [0, 64], sizes = [256, 64], strides = [1, 1]} : vector<256x128xf32> to vector<256x64xf32>
    %cst_38 = arith.constant dense<0.000000e+00> : vector<256xf32>
    %75 = vector.multi_reduction <add>, %74, %cst_38 [1] : vector<256x64xf32> to vector<256xf32>
    %76 = vector.shape_cast %75 : vector<256xf32> to vector<256x1xf32>
    %cst_39 = arith.constant 6.400000e+01 : f32
    %77 = vector.broadcast %cst_39 : f32 to vector<256x1xf32>
    %78 = arith.divf %76, %77 : vector<256x1xf32>
    %c0_40 = arith.constant 0 : index
    %c0_41 = arith.constant 0 : index
    %79 = vector.load %arg9[%c0_40, %c0_41] : memref<256x2xf32, #tpu.memory_space<vmem>>, vector<256x2xf32>
    %80 = vector.broadcast %78 : vector<256x1xf32> to vector<256x2xf32>
    %81 = arith.mulf %80, %79 : vector<256x2xf32>
    %cst_42 = arith.constant dense<0.000000e+00> : vector<2xf32>
    %82 = vector.multi_reduction <add>, %81, %cst_42 [0] : vector<256x2xf32> to vector<2xf32>
    %83 = vector.shape_cast %82 : vector<2xf32> to vector<1x2xf32>
    %84 = tpu.concatenate %73, %83 in 0 : vector<1x2xf32>, vector<1x2xf32> -> vector<2x2xf32>
    %c0_43 = arith.constant 0 : index
    %c0_44 = arith.constant 0 : index
    %85 = vector.load %arg10[%c0_43, %c0_44] : memref<1x2xf32, #tpu.memory_space<vmem>>, vector<1x2xf32>
    %86 = vector.broadcast %85 : vector<1x2xf32> to vector<2x2xf32>
    %87 = arith.addf %84, %86 : vector<2x2xf32>
    %c0_45 = arith.constant 0 : index
    %c0_46 = arith.constant 0 : index
    %88 = vector.load %arg13[%c0_45, %c0_46] : memref<2x2xf32, #tpu.memory_space<vmem>>, vector<2x2xf32>
    tpu.vector_store %arg13[%c0_45, %c0_46], %87 {strides = array<i32>} : memref<2x2xf32, #tpu.memory_space<vmem>>, vector<2x2xf32>,
    return
  }
  func.func @transform_0(%arg0: i32) -> (i32, i32) {
    %c0_i32 = arith.constant 0 : i32
    %c0_i32_0 = arith.constant 0 : i32
    %c0_i32_1 = arith.constant 0 : i32
    return %c0_i32, %c0_i32_0 : i32, i32
  }
  func.func @transform_1(%arg0: i32) -> (i32, i32) {
    %c0_i32 = arith.constant 0 : i32
    %c0_i32_0 = arith.constant 0 : i32
    %c0_i32_1 = arith.constant 0 : i32
    return %c0_i32, %c0_i32_0 : i32, i32
  }
  func.func @transform_2(%arg0: i32) -> (i32, i32) {
    %c0_i32 = arith.constant 0 : i32
    %c0_i32_0 = arith.constant 0 : i32
    %c0_i32_1 = arith.constant 0 : i32
    return %c0_i32, %c0_i32_0 : i32, i32
  }
  func.func @transform_3(%arg0: i32) -> (i32, i32) {
    %c0_i32 = arith.constant 0 : i32
    %c0_i32_0 = arith.constant 0 : i32
    %c0_i32_1 = arith.constant 0 : i32
    return %c0_i32, %c0_i32_0 : i32, i32
  }
  func.func @transform_4(%arg0: i32) -> (i32, i32) {
    %c0_i32 = arith.constant 0 : i32
    %c0_i32_0 = arith.constant 0 : i32
    %c0_i32_1 = arith.constant 0 : i32
    return %c0_i32, %c0_i32_0 : i32, i32
  }
  func.func @transform_5(%arg0: i32) -> (i32, i32) {
    %c0_i32 = arith.constant 0 : i32
    %c0_i32_0 = arith.constant 0 : i32
    %c0_i32_1 = arith.constant 0 : i32
    return %c0_i32, %c0_i32_0 : i32, i32
  }
  func.func @transform_6(%arg0: i32) -> (i32, i32) {
    %c0_i32 = arith.constant 0 : i32
    %c0_i32_0 = arith.constant 0 : i32
    %c0_i32_1 = arith.constant 0 : i32
    return %c0_i32, %c0_i32_0 : i32, i32
  }
  func.func @transform_7(%arg0: i32) -> (i32, i32) {
    %c0_i32 = arith.constant 0 : i32
    %c0_i32_0 = arith.constant 0 : i32
    %c0_i32_1 = arith.constant 0 : i32
    return %c0_i32, %c0_i32_0 : i32, i32
  }
  func.func @transform_8(%arg0: i32) -> (i32, i32) {
    %c0_i32 = arith.constant 0 : i32
    %c0_i32_0 = arith.constant 0 : i32
    %c0_i32_1 = arith.constant 0 : i32
    return %c0_i32, %c0_i32_0 : i32, i32
  }
  func.func @transform_9(%arg0: i32) -> (i32, i32) {
    %c0_i32 = arith.constant 0 : i32
    %c0_i32_0 = arith.constant 0 : i32
    %c0_i32_1 = arith.constant 0 : i32
    return %c0_i32, %c0_i32_0 : i32, i32
  }
  func.func @transform_10(%arg0: i32) -> (i32, i32) {
    %c0_i32 = arith.constant 0 : i32
    %c0_i32_0 = arith.constant 0 : i32
    %c0_i32_1 = arith.constant 0 : i32
    return %c0_i32, %c0_i32_0 : i32, i32
  }
  func.func @transform_11(%arg0: i32) -> (i32, i32) {
    %c0_i32 = arith.constant 0 : i32
    %c0_i32_0 = arith.constant 0 : i32
    %c0_i32_1 = arith.constant 0 : i32
    return %c0_i32, %c0_i32_0 : i32, i32
  }
  func.func @transform_12(%arg0: i32) -> (i32, i32) {
    %c0_i32 = arith.constant 0 : i32
    %c0_i32_0 = arith.constant 0 : i32
    %c0_i32_1 = arith.constant 0 : i32
    return %c0_i32, %c0_i32_0 : i32, i32
  }
}

</mosaic_0001>

<llo_original>
// kernel: auto_sam_seg_forward.2
$region0: #{auto_sam_seg_forward.2}
  #allocation0 [shape = 'u32[]', space=smem, size = 0x4, offset = 0x4, fixed_abs, tag = 'smem constant byte address 0x4 - core index']
  #allocation1 [shape = 'u32[144,128]{1,0:T(1,128)}', space=vmem, size = 0x12000, scoped, tag = 'internal scratch']
  %s0 = inlined_call_operand.vmem [shape: f32[6,256], index: 0, kind: input, shape index: {}]
  %s1 = inlined_call_operand.vmem [shape: bf16[256,1024], index: 1, kind: input, shape index: {}]
  %s2 = inlined_call_operand.vmem [shape: bf16[6,1024], index: 2, kind: output, shape index: {}]
  %s3 = sld [smem:[#allocation0]]
  $region18: #{auto_sam_seg_forward.2} parent=0
    _
  %s5 = ssub.s32 1, %s3
  %s6 = scalar_select 0, %s5, %s3
  // Predicated region
  $region2: #{auto_sam_seg_forward.2} parent=0 // pred_check
    _
  $region3: #{auto_sam_seg_forward.2} parent=0 // pred_check_branch
    %8 = sbr.rel (0) target = $region5
  $region4: #{auto_sam_seg_forward.2} parent=0 // pred_region
    _
  $region5: #{auto_sam_seg_forward.2} parent=0 // pred_fallthru
    _
  // Predicated region
  $region6: #{auto_sam_seg_forward.2} parent=0 // pred_check
    _
  $region7: #{auto_sam_seg_forward.2} parent=0 // pred_check_branch
    %10 = sbr.rel (0) target = $region9
  $region8: #{auto_sam_seg_forward.2} parent=0 // pred_region
    _
  $region9: #{auto_sam_seg_forward.2} parent=0 // pred_fallthru
    _
  %v11 = vld [vmem:[%s0] sm:$0x3f]
  %v12 = vld [vmem:[%s0 + $0x8] sm:$0x3f]
  %v13 = vpack.c.bf16 %v11, %v11
  %v14 = vpack.c.bf16 %v12, %v12
  %v15 = vld [vmem:[%s1] sm:$0xff]
  %v16 = vld [vmem:[%s1 + $0x8] sm:$0xff]
  %v17 = vld [vmem:[%s1 + $0x10] sm:$0xff]
  %v18 = vld [vmem:[%s1 + $0x18] sm:$0xff]
  %v19 = vld [vmem:[%s1 + $0x20] sm:$0xff]
  %v20 = vld [vmem:[%s1 + $0x28] sm:$0xff]
  %v21 = vld [vmem:[%s1 + $0x30] sm:$0xff]
  %v22 = vld [vmem:[%s1 + $0x38] sm:$0xff]
  %v23 = vld [vmem:[%s1 + $0x40] sm:$0xff]
  %v24 = vld [vmem:[%s1 + $0x48] sm:$0xff]
  %v25 = vld [vmem:[%s1 + $0x50] sm:$0xff]
  %v26 = vld [vmem:[%s1 + $0x58] sm:$0xff]
  %v27 = vld [vmem:[%s1 + $0x60] sm:$0xff]
  %v28 = vld [vmem:[%s1 + $0x68] sm:$0xff]
  %v29 = vld [vmem:[%s1 + $0x70] sm:$0xff]
  %v30 = vld [vmem:[%s1 + $0x78] sm:$0xff]
  %v31 = vld [vmem:[%s1 + $0x80] sm:$0xff]
  %v32 = vld [vmem:[%s1 + $0x88] sm:$0xff]
  %v33 = vld [vmem:[%s1 + $0x90] sm:$0xff]
  %v34 = vld [vmem:[%s1 + $0x98] sm:$0xff]
  %v35 = vld [vmem:[%s1 + $0xa0] sm:$0xff]
  %v36 = vld [vmem:[%s1 + $0xa8] sm:$0xff]
  %v37 = vld [vmem:[%s1 + $0xb0] sm:$0xff]
  %v38 = vld [vmem:[%s1 + $0xb8] sm:$0xff]
  %v39 = vld [vmem:[%s1 + $0xc0] sm:$0xff]
  %v40 = vld [vmem:[%s1 + $0xc8] sm:$0xff]
  %v41 = vld [vmem:[%s1 + $0xd0] sm:$0xff]
  %v42 = vld [vmem:[%s1 + $0xd8] sm:$0xff]
  %v43 = vld [vmem:[%s1 + $0xe0] sm:$0xff]
  %v44 = vld [vmem:[%s1 + $0xe8] sm:$0xff]
  %v45 = vld [vmem:[%s1 + $0xf0] sm:$0xff]
  %v46 = vld [vmem:[%s1 + $0xf8] sm:$0xff]
  %v47 = vld [vmem:[%s1 + $0x100] sm:$0xff]
  %v48 = vld [vmem:[%s1 + $0x108] sm:$0xff]
  %v49 = vld [vmem:[%s1 + $0x110] sm:$0xff]
  %v50 = vld [vmem:[%s1 + $0x118] sm:$0xff]
  %v51 = vld [vmem:[%s1 + $0x120] sm:$0xff]
  %v52 = vld [vmem:[%s1 + $0x128] sm:$0xff]
  %v53 = vld [vmem:[%s1 + $0x130] sm:$0xff]
  %v54 = vld [vmem:[%s1 + $0x138] sm:$0xff]
  %v55 = vld [vmem:[%s1 + $0x140] sm:$0xff]
  %v56 = vld [vmem:[%s1 + $0x148] sm:$0xff]
  %v57 = vld [vmem:[%s1 + $0x150] sm:$0xff]
  %v58 = vld [vmem:[%s1 + $0x158] sm:$0xff]
  %v59 = vld [vmem:[%s1 + $0x160] sm:$0xff]
  %v60 = vld [vmem:[%s1 + $0x168] sm:$0xff]
  %v61 = vld [vmem:[%s1 + $0x170] sm:$0xff]
  %v62 = vld [vmem:[%s1 + $0x178] sm:$0xff]
  %v63 = vld [vmem:[%s1 + $0x180] sm:$0xff]
  %v64 = vld [vmem:[%s1 + $0x188] sm:$0xff]
  %v65 = vld [vmem:[%s1 + $0x190] sm:$0xff]
  %v66 = vld [vmem:[%s1 + $0x198] sm:$0xff]
  %v67 = vld [vmem:[%s1 + $0x1a0] sm:$0xff]
  %v68 = vld [vmem:[%s1 + $0x1a8] sm:$0xff]
  %v69 = vld [vmem:[%s1 + $0x1b0] sm:$0xff]
  %v70 = vld [vmem:[%s1 + $0x1b8] sm:$0xff]
  %v71 = vld [vmem:[%s1 + $0x1c0] sm:$0xff]
  %v72 = vld [vmem:[%s1 + $0x1c8] sm:$0xff]
  %v73 = vld [vmem:[%s1 + $0x1d0] sm:$0xff]
  %v74 = vld [vmem:[%s1 + $0x1d8] sm:$0xff]
  %v75 = vld [vmem:[%s1 + $0x1e0] sm:$0xff]
  %v76 = vld [vmem:[%s1 + $0x1e8] sm:$0xff]
  %v77 = vld [vmem:[%s1 + $0x1f0] sm:$0xff]
  %v78 = vld [vmem:[%s1 + $0x1f8] sm:$0xff]
  %v79 = vld [vmem:[%s1 + $0x200] sm:$0xff]
  %v80 = vld [vmem:[%s1 + $0x208] sm:$0xff]
  %v81 = vld [vmem:[%s1 + $0x210] sm:$0xff]
  %v82 = vld [vmem:[%s1 + $0x218] sm:$0xff]
  %v83 = vld [vmem:[%s1 + $0x220] sm:$0xff]
  %v84 = vld [vmem:[%s1 + $0x228] sm:$0xff]
  %v85 = vld [vmem:[%s1 + $0x230] sm:$0xff]
  %v86 = vld [vmem:[%s1 + $0x238] sm:$0xff]
  %v87 = vld [vmem:[%s1 + $0x240] sm:$0xff]
  %v88 = vld [vmem:[%s1 + $0x248] sm:$0xff]
  %v89 = vld [vmem:[%s1 + $0x250] sm:$0xff]
  %v90 = vld [vmem:[%s1 + $0x258] sm:$0xff]
  %v91 = vld [vmem:[%s1 + $0x260] sm:$0xff]
  %v92 = vld [vmem:[%s1 + $0x268] sm:$0xff]
  %v93 = vld [vmem:[%s1 + $0x270] sm:$0xff]
  %v94 = vld [vmem:[%s1 + $0x278] sm:$0xff]
  %v95 = vld [vmem:[%s1 + $0x280] sm:$0xff]
  %v96 = vld [vmem:[%s1 + $0x288] sm:$0xff]
  %v97 = vld [vmem:[%s1 + $0x290] sm:$0xff]
  %v98 = vld [vmem:[%s1 + $0x298] sm:$0xff]
  %v99 = vld [vmem:[%s1 + $0x2a0] sm:$0xff]
  %v100 = vld [vmem:[%s1 + $0x2a8] sm:$0xff]
  %v101 = vld [vmem:[%s1 + $0x2b0] sm:$0xff]
  %v102 = vld [vmem:[%s1 + $0x2b8] sm:$0xff]
  %v103 = vld [vmem:[%s1 + $0x2c0] sm:$0xff]
  %v104 = vld [vmem:[%s1 + $0x2c8] sm:$0xff]
  %v105 = vld [vmem:[%s1 + $0x2d0] sm:$0xff]
  %v106 = vld [vmem:[%s1 + $0x2d8] sm:$0xff]
  %v107 = vld [vmem:[%s1 + $0x2e0] sm:$0xff]
  %v108 = vld [vmem:[%s1 + $0x2e8] sm:$0xff]
  %v109 = vld [vmem:[%s1 + $0x2f0] sm:$0xff]
  %v110 = vld [vmem:[%s1 + $0x2f8] sm:$0xff]
  %v111 = vld [vmem:[%s1 + $0x300] sm:$0xff]
  %v112 = vld [vmem:[%s1 + $0x308] sm:$0xff]
  %v113 = vld [vmem:[%s1 + $0x310] sm:$0xff]
  %v114 = vld [vmem:[%s1 + $0x318] sm:$0xff]
  %v115 = vld [vmem:[%s1 + $0x320] sm:$0xff]
  %v116 = vld [vmem:[%s1 + $0x328] sm:$0xff]
  %v117 = vld [vmem:[%s1 + $0x330] sm:$0xff]
  %v118 = vld [vmem:[%s1 + $0x338] sm:$0xff]
  %v119 = vld [vmem:[%s1 + $0x340] sm:$0xff]
  %v120 = vld [vmem:[%s1 + $0x348] sm:$0xff]
  %v121 = vld [vmem:[%s1 + $0x350] sm:$0xff]
  %v122 = vld [vmem:[%s1 + $0x358] sm:$0xff]
  %v123 = vld [vmem:[%s1 + $0x360] sm:$0xff]
  %v124 = vld [vmem:[%s1 + $0x368] sm:$0xff]
  %v125 = vld [vmem:[%s1 + $0x370] sm:$0xff]
  %v126 = vld [vmem:[%s1 + $0x378] sm:$0xff]
  %v127 = vld [vmem:[%s1 + $0x380] sm:$0xff]
  %v128 = vld [vmem:[%s1 + $0x388] sm:$0xff]
  %v129 = vld [vmem:[%s1 + $0x390] sm:$0xff]
  %v130 = vld [vmem:[%s1 + $0x398] sm:$0xff]
  %v131 = vld [vmem:[%s1 + $0x3a0] sm:$0xff]
  %v132 = vld [vmem:[%s1 + $0x3a8] sm:$0xff]
  %v133 = vld [vmem:[%s1 + $0x3b0] sm:$0xff]
  %v134 = vld [vmem:[%s1 + $0x3b8] sm:$0xff]
  %v135 = vld [vmem:[%s1 + $0x3c0] sm:$0xff]
  %v136 = vld [vmem:[%s1 + $0x3c8] sm:$0xff]
  %v137 = vld [vmem:[%s1 + $0x3d0] sm:$0xff]
  %v138 = vld [vmem:[%s1 + $0x3d8] sm:$0xff]
  %v139 = vld [vmem:[%s1 + $0x3e0] sm:$0xff]
  %v140 = vld [vmem:[%s1 + $0x3e8] sm:$0xff]
  %v141 = vld [vmem:[%s1 + $0x3f0] sm:$0xff]
  %v142 = vld [vmem:[%s1 + $0x3f8] sm:$0xff]
  %v271 = vunpack.c.l.b16 %v15
  %v272 = vunpack.c.h.b16 %v15
  %v273 = vunpack.c.l.b16 %v16
  %v274 = vunpack.c.h.b16 %v16
  %v275 = vunpack.c.l.b16 %v17
  %v276 = vunpack.c.h.b16 %v17
  %v277 = vunpack.c.l.b16 %v18
  %v278 = vunpack.c.h.b16 %v18
  %v279 = vunpack.c.l.b16 %v19
  %v280 = vunpack.c.h.b16 %v19
  %v281 = vunpack.c.l.b16 %v20
  %v282 = vunpack.c.h.b16 %v20
  %v283 = vunpack.c.l.b16 %v21
  %v284 = vunpack.c.h.b16 %v21
  %v285 = vunpack.c.l.b16 %v22
  %v286 = vunpack.c.h.b16 %v22
  %v287 = vunpack.c.l.b16 %v23
  %v288 = vunpack.c.h.b16 %v23
  %v289 = vunpack.c.l.b16 %v24
  %v290 = vunpack.c.h.b16 %v24
  %v291 = vunpack.c.l.b16 %v25
  %v292 = vunpack.c.h.b16 %v25
  %v293 = vunpack.c.l.b16 %v26
  %v294 = vunpack.c.h.b16 %v26
  %v295 = vunpack.c.l.b16 %v27
  %v296 = vunpack.c.h.b16 %v27
  %v297 = vunpack.c.l.b16 %v28
  %v298 = vunpack.c.h.b16 %v28
  %v299 = vunpack.c.l.b16 %v29
  %v300 = vunpack.c.h.b16 %v29
  %v301 = vunpack.c.l.b16 %v30
  %v302 = vunpack.c.h.b16 %v30
  %v303 = vunpack.c.l.b16 %v31
  %v304 = vunpack.c.h.b16 %v31
  %v305 = vunpack.c.l.b16 %v32
  %v306 = vunpack.c.h.b16 %v32
  %v307 = vunpack.c.l.b16 %v33
  %v308 = vunpack.c.h.b16 %v33
  %v309 = vunpack.c.l.b16 %v34
  %v310 = vunpack.c.h.b16 %v34
  %v311 = vunpack.c.l.b16 %v35
  %v312 = vunpack.c.h.b16 %v35
  %v313 = vunpack.c.l.b16 %v36
  %v314 = vunpack.c.h.b16 %v36
  %v315 = vunpack.c.l.b16 %v37
  %v316 = vunpack.c.h.b16 %v37
  %v317 = vunpack.c.l.b16 %v38
  %v318 = vunpack.c.h.b16 %v38
  %v319 = vunpack.c.l.b16 %v39
  %v320 = vunpack.c.h.b16 %v39
  %v321 = vunpack.c.l.b16 %v40
  %v322 = vunpack.c.h.b16 %v40
  %v323 = vunpack.c.l.b16 %v41
  %v324 = vunpack.c.h.b16 %v41
  %v325 = vunpack.c.l.b16 %v42
  %v326 = vunpack.c.h.b16 %v42
  %v327 = vunpack.c.l.b16 %v43
  %v328 = vunpack.c.h.b16 %v43
  %v329 = vunpack.c.l.b16 %v44
  %v330 = vunpack.c.h.b16 %v44
  %v331 = vunpack.c.l.b16 %v45
  %v332 = vunpack.c.h.b16 %v45
  %v333 = vunpack.c.l.b16 %v46
  %v334 = vunpack.c.h.b16 %v46
  %v335 = vunpack.c.l.b16 %v47
  %v336 = vunpack.c.h.b16 %v47
  %v337 = vunpack.c.l.b16 %v48
  %v338 = vunpack.c.h.b16 %v48
  %v339 = vunpack.c.l.b16 %v49
  %v340 = vunpack.c.h.b16 %v49
  %v341 = vunpack.c.l.b16 %v50
  %v342 = vunpack.c.h.b16 %v50
  %v343 = vunpack.c.l.b16 %v51
  %v344 = vunpack.c.h.b16 %v51
  %v345 = vunpack.c.l.b16 %v52
  %v346 = vunpack.c.h.b16 %v52
  %v347 = vunpack.c.l.b16 %v53
  %v348 = vunpack.c.h.b16 %v53
  %v349 = vunpack.c.l.b16 %v54
  %v350 = vunpack.c.h.b16 %v54
  %v351 = vunpack.c.l.b16 %v55
  %v352 = vunpack.c.h.b16 %v55
  %v353 = vunpack.c.l.b16 %v56
  %v354 = vunpack.c.h.b16 %v56
  %v355 = vunpack.c.l.b16 %v57
  %v356 = vunpack.c.h.b16 %v57
  %v357 = vunpack.c.l.b16 %v58
  %v358 = vunpack.c.h.b16 %v58
  %v359 = vunpack.c.l.b16 %v59
  %v360 = vunpack.c.h.b16 %v59
  %v361 = vunpack.c.l.b16 %v60
  %v362 = vunpack.c.h.b16 %v60
  %v363 = vunpack.c.l.b16 %v61
  %v364 = vunpack.c.h.b16 %v61
  %v365 = vunpack.c.l.b16 %v62
  %v366 = vunpack.c.h.b16 %v62
  %v367 = vunpack.c.l.b16 %v63
  %v368 = vunpack.c.h.b16 %v63
  %v369 = vunpack.c.l.b16 %v64
  %v370 = vunpack.c.h.b16 %v64
  %v371 = vunpack.c.l.b16 %v65
  %v372 = vunpack.c.h.b16 %v65
  %v373 = vunpack.c.l.b16 %v66
  %v374 = vunpack.c.h.b16 %v66
  %v375 = vunpack.c.l.b16 %v67
  %v376 = vunpack.c.h.b16 %v67
  %v377 = vunpack.c.l.b16 %v68
  %v378 = vunpack.c.h.b16 %v68
  %v379 = vunpack.c.l.b16 %v69
  %v380 = vunpack.c.h.b16 %v69
  %v381 = vunpack.c.l.b16 %v70
  %v382 = vunpack.c.h.b16 %v70
  %v383 = vunpack.c.l.b16 %v71
  %v384 = vunpack.c.h.b16 %v71
  %v385 = vunpack.c.l.b16 %v72
  %v386 = vunpack.c.h.b16 %v72
  %v387 = vunpack.c.l.b16 %v73
  %v388 = vunpack.c.h.b16 %v73
  %v389 = vunpack.c.l.b16 %v74
  %v390 = vunpack.c.h.b16 %v74
  %v391 = vunpack.c.l.b16 %v75
  %v392 = vunpack.c.h.b16 %v75
  %v393 = vunpack.c.l.b16 %v76
  %v394 = vunpack.c.h.b16 %v76
  %v395 = vunpack.c.l.b16 %v77
  %v396 = vunpack.c.h.b16 %v77
  %v397 = vunpack.c.l.b16 %v78
  %v398 = vunpack.c.h.b16 %v78
  %v399 = vunpack.c.l.b16 %v79
  %v400 = vunpack.c.h.b16 %v79
  %v401 = vunpack.c.l.b16 %v80
  %v402 = vunpack.c.h.b16 %v80
  %v403 = vunpack.c.l.b16 %v81
  %v404 = vunpack.c.h.b16 %v81
  %v405 = vunpack.c.l.b16 %v82
  %v406 = vunpack.c.h.b16 %v82
  %v407 = vunpack.c.l.b16 %v83
  %v408 = vunpack.c.h.b16 %v83
  %v409 = vunpack.c.l.b16 %v84
  %v410 = vunpack.c.h.b16 %v84
  %v411 = vunpack.c.l.b16 %v85
  %v412 = vunpack.c.h.b16 %v85
  %v413 = vunpack.c.l.b16 %v86
  %v414 = vunpack.c.h.b16 %v86
  %v415 = vunpack.c.l.b16 %v87
  %v416 = vunpack.c.h.b16 %v87
  %v417 = vunpack.c.l.b16 %v88
  %v418 = vunpack.c.h.b16 %v88
  %v419 = vunpack.c.l.b16 %v89
  %v420 = vunpack.c.h.b16 %v89
  %v421 = vunpack.c.l.b16 %v90
  %v422 = vunpack.c.h.b16 %v90
  %v423 = vunpack.c.l.b16 %v91
  %v424 = vunpack.c.h.b16 %v91
  %v425 = vunpack.c.l.b16 %v92
  %v426 = vunpack.c.h.b16 %v92
  %v427 = vunpack.c.l.b16 %v93
  %v428 = vunpack.c.h.b16 %v93
  %v429 = vunpack.c.l.b16 %v94
  %v430 = vunpack.c.h.b16 %v94
  %v431 = vunpack.c.l.b16 %v95
  %v432 = vunpack.c.h.b16 %v95
  %v433 = vunpack.c.l.b16 %v96
  %v434 = vunpack.c.h.b16 %v96
  %v435 = vunpack.c.l.b16 %v97
  %v436 = vunpack.c.h.b16 %v97
  %v437 = vunpack.c.l.b16 %v98
  %v438 = vunpack.c.h.b16 %v98
  %v439 = vunpack.c.l.b16 %v99
  %v440 = vunpack.c.h.b16 %v99
  %v441 = vunpack.c.l.b16 %v100
  %v442 = vunpack.c.h.b16 %v100
  %v443 = vunpack.c.l.b16 %v101
  %v444 = vunpack.c.h.b16 %v101
  %v445 = vunpack.c.l.b16 %v102
  %v446 = vunpack.c.h.b16 %v102
  %v447 = vunpack.c.l.b16 %v103
  %v448 = vunpack.c.h.b16 %v103
  %v449 = vunpack.c.l.b16 %v104
  %v450 = vunpack.c.h.b16 %v104
  %v451 = vunpack.c.l.b16 %v105
  %v452 = vunpack.c.h.b16 %v105
  %v453 = vunpack.c.l.b16 %v106
  %v454 = vunpack.c.h.b16 %v106
  %v455 = vunpack.c.l.b16 %v107
  %v456 = vunpack.c.h.b16 %v107
  %v457 = vunpack.c.l.b16 %v108
  %v458 = vunpack.c.h.b16 %v108
  %v459 = vunpack.c.l.b16 %v109
  %v460 = vunpack.c.h.b16 %v109
  %v461 = vunpack.c.l.b16 %v110
  %v462 = vunpack.c.h.b16 %v110
  %v463 = vunpack.c.l.b16 %v111
  %v464 = vunpack.c.h.b16 %v111
  %v465 = vunpack.c.l.b16 %v112
  %v466 = vunpack.c.h.b16 %v112
  %v467 = vunpack.c.l.b16 %v113
  %v468 = vunpack.c.h.b16 %v113
  %v469 = vunpack.c.l.b16 %v114
  %v470 = vunpack.c.h.b16 %v114
  %v471 = vunpack.c.l.b16 %v115
  %v472 = vunpack.c.h.b16 %v115
  %v473 = vunpack.c.l.b16 %v116
  %v474 = vunpack.c.h.b16 %v116
  %v475 = vunpack.c.l.b16 %v117
  %v476 = vunpack.c.h.b16 %v117
  %v477 = vunpack.c.l.b16 %v118
  %v478 = vunpack.c.h.b16 %v118
  %v479 = vunpack.c.l.b16 %v119
  %v480 = vunpack.c.h.b16 %v119
  %v481 = vunpack.c.l.b16 %v120
  %v482 = vunpack.c.h.b16 %v120
  %v483 = vunpack.c.l.b16 %v121
  %v484 = vunpack.c.h.b16 %v121
  %v485 = vunpack.c.l.b16 %v122
  %v486 = vunpack.c.h.b16 %v122
  %v487 = vunpack.c.l.b16 %v123
  %v488 = vunpack.c.h.b16 %v123
  %v489 = vunpack.c.l.b16 %v124
  %v490 = vunpack.c.h.b16 %v124
  %v491 = vunpack.c.l.b16 %v125
  %v492 = vunpack.c.h.b16 %v125
  %v493 = vunpack.c.l.b16 %v126
  %v494 = vunpack.c.h.b16 %v126
  %v495 = vunpack.c.l.b16 %v127
  %v496 = vunpack.c.h.b16 %v127
  %v497 = vunpack.c.l.b16 %v128
  %v498 = vunpack.c.h.b16 %v128
  %v499 = vunpack.c.l.b16 %v129
  %v500 = vunpack.c.h.b16 %v129
  %v501 = vunpack.c.l.b16 %v130
  %v502 = vunpack.c.h.b16 %v130
  %v503 = vunpack.c.l.b16 %v131
  %v504 = vunpack.c.h.b16 %v131
  %v505 = vunpack.c.l.b16 %v132
  %v506 = vunpack.c.h.b16 %v132
  %v507 = vunpack.c.l.b16 %v133
  %v508 = vunpack.c.h.b16 %v133
  %v509 = vunpack.c.l.b16 %v134
  %v510 = vunpack.c.h.b16 %v134
  %v511 = vunpack.c.l.b16 %v135
  %v512 = vunpack.c.h.b16 %v135
  %v513 = vunpack.c.l.b16 %v136
  %v514 = vunpack.c.h.b16 %v136
  %v515 = vunpack.c.l.b16 %v137
  %v516 = vunpack.c.h.b16 %v137
  %v517 = vunpack.c.l.b16 %v138
  %v518 = vunpack.c.h.b16 %v138
  %v519 = vunpack.c.l.b16 %v139
  %v520 = vunpack.c.h.b16 %v139
  %v521 = vunpack.c.l.b16 %v140
  %v522 = vunpack.c.h.b16 %v140
  %v523 = vunpack.c.l.b16 %v141
  %v524 = vunpack.c.h.b16 %v141
  %v525 = vunpack.c.l.b16 %v142
  %v526 = vunpack.c.h.b16 %v142
  %v527 = vpack.c.b16 %v279, %v271
  %v528 = vpack.c.b16 %v280, %v272
  %v529 = vpack.c.b16 %v281, %v273
  %v530 = vpack.c.b16 %v282, %v274
  %v531 = vpack.c.b16 %v283, %v275
  %v532 = vpack.c.b16 %v284, %v276
  %v533 = vpack.c.b16 %v285, %v277
  %v534 = vpack.c.b16 %v286, %v278
  %v535 = vpack.c.b16 %v295, %v287
  %v536 = vpack.c.b16 %v296, %v288
  %v537 = vpack.c.b16 %v297, %v289
  %v538 = vpack.c.b16 %v298, %v290
  %v539 = vpack.c.b16 %v299, %v291
  %v540 = vpack.c.b16 %v300, %v292
  %v541 = vpack.c.b16 %v301, %v293
  %v542 = vpack.c.b16 %v302, %v294
  %v543 = vpack.c.b16 %v311, %v303
  %v544 = vpack.c.b16 %v312, %v304
  %v545 = vpack.c.b16 %v313, %v305
  %v546 = vpack.c.b16 %v314, %v306
  %v547 = vpack.c.b16 %v315, %v307
  %v548 = vpack.c.b16 %v316, %v308
  %v549 = vpack.c.b16 %v317, %v309
  %v550 = vpack.c.b16 %v318, %v310
  %v551 = vpack.c.b16 %v327, %v319
  %v552 = vpack.c.b16 %v328, %v320
  %v553 = vpack.c.b16 %v329, %v321
  %v554 = vpack.c.b16 %v330, %v322
  %v555 = vpack.c.b16 %v331, %v323
  %v556 = vpack.c.b16 %v332, %v324
  %v557 = vpack.c.b16 %v333, %v325
  %v558 = vpack.c.b16 %v334, %v326
  %v559 = vpack.c.b16 %v343, %v335
  %v560 = vpack.c.b16 %v344, %v336
  %v561 = vpack.c.b16 %v345, %v337
  %v562 = vpack.c.b16 %v346, %v338
  %v563 = vpack.c.b16 %v347, %v339
  %v564 = vpack.c.b16 %v348, %v340
  %v565 = vpack.c.b16 %v349, %v341
  %v566 = vpack.c.b16 %v350, %v342
  %v567 = vpack.c.b16 %v359, %v351
  %v568 = vpack.c.b16 %v360, %v352
  %v569 = vpack.c.b16 %v361, %v353
  %v570 = vpack.c.b16 %v362, %v354
  %v571 = vpack.c.b16 %v363, %v355
  %v572 = vpack.c.b16 %v364, %v356
  %v573 = vpack.c.b16 %v365, %v357
  %v574 = vpack.c.b16 %v366, %v358
  %v575 = vpack.c.b16 %v375, %v367
  %v576 = vpack.c.b16 %v376, %v368
  %v577 = vpack.c.b16 %v377, %v369
  %v578 = vpack.c.b16 %v378, %v370
  %v579 = vpack.c.b16 %v379, %v371
  %v580 = vpack.c.b16 %v380, %v372
  %v581 = vpack.c.b16 %v381, %v373
  %v582 = vpack.c.b16 %v382, %v374
  %v583 = vpack.c.b16 %v391, %v383
  %v584 = vpack.c.b16 %v392, %v384
  %v585 = vpack.c.b16 %v393, %v385
  %v586 = vpack.c.b16 %v394, %v386
  %v587 = vpack.c.b16 %v395, %v387
  %v588 = vpack.c.b16 %v396, %v388
  %v589 = vpack.c.b16 %v397, %v389
  %v590 = vpack.c.b16 %v398, %v390
  %v591 = vpack.c.b16 %v407, %v399
  %v592 = vpack.c.b16 %v408, %v400
  %v593 = vpack.c.b16 %v409, %v401
  %v594 = vpack.c.b16 %v410, %v402
  %v595 = vpack.c.b16 %v411, %v403
  %v596 = vpack.c.b16 %v412, %v404
  %v597 = vpack.c.b16 %v413, %v405
  %v598 = vpack.c.b16 %v414, %v406
  %v599 = vpack.c.b16 %v423, %v415
  %v600 = vpack.c.b16 %v424, %v416
  %v601 = vpack.c.b16 %v425, %v417
  %v602 = vpack.c.b16 %v426, %v418
  %v603 = vpack.c.b16 %v427, %v419
  %v604 = vpack.c.b16 %v428, %v420
  %v605 = vpack.c.b16 %v429, %v421
  %v606 = vpack.c.b16 %v430, %v422
  %v607 = vpack.c.b16 %v439, %v431
  %v608 = vpack.c.b16 %v440, %v432
  %v609 = vpack.c.b16 %v441, %v433
  %v610 = vpack.c.b16 %v442, %v434
  %v611 = vpack.c.b16 %v443, %v435
  %v612 = vpack.c.b16 %v444, %v436
  %v613 = vpack.c.b16 %v445, %v437
  %v614 = vpack.c.b16 %v446, %v438
  %v615 = vpack.c.b16 %v455, %v447
  %v616 = vpack.c.b16 %v456, %v448
  %v617 = vpack.c.b16 %v457, %v449
  %v618 = vpack.c.b16 %v458, %v450
  %v619 = vpack.c.b16 %v459, %v451
  %v620 = vpack.c.b16 %v460, %v452
  %v621 = vpack.c.b16 %v461, %v453
  %v622 = vpack.c.b16 %v462, %v454
  %v623 = vpack.c.b16 %v471, %v463
  %v624 = vpack.c.b16 %v472, %v464
  %v625 = vpack.c.b16 %v473, %v465
  %v626 = vpack.c.b16 %v474, %v466
  %v627 = vpack.c.b16 %v475, %v467
  %v628 = vpack.c.b16 %v476, %v468
  %v629 = vpack.c.b16 %v477, %v469
  %v630 = vpack.c.b16 %v478, %v470
  %v631 = vpack.c.b16 %v487, %v479
  %v632 = vpack.c.b16 %v488, %v480
  %v633 = vpack.c.b16 %v489, %v481
  %v634 = vpack.c.b16 %v490, %v482
  %v635 = vpack.c.b16 %v491, %v483
  %v636 = vpack.c.b16 %v492, %v484
  %v637 = vpack.c.b16 %v493, %v485
  %v638 = vpack.c.b16 %v494, %v486
  %v639 = vpack.c.b16 %v503, %v495
  %v640 = vpack.c.b16 %v504, %v496
  %v641 = vpack.c.b16 %v505, %v497
  %v642 = vpack.c.b16 %v506, %v498
  %v643 = vpack.c.b16 %v507, %v499
  %v644 = vpack.c.b16 %v508, %v500
  %v645 = vpack.c.b16 %v509, %v501
  %v646 = vpack.c.b16 %v510, %v502
  %v647 = vpack.c.b16 %v519, %v511
  %v648 = vpack.c.b16 %v520, %v512
  %v649 = vpack.c.b16 %v521, %v513
  %v650 = vpack.c.b16 %v522, %v514
  %v651 = vpack.c.b16 %v523, %v515
  %v652 = vpack.c.b16 %v524, %v516
  %v653 = vpack.c.b16 %v525, %v517
  %v654 = vpack.c.b16 %v526, %v518
  %783 = vmatprep.subr.bf16.mxu0 %v528
  %784 = vmatpush1.bf16.msra.mxu0 %v527
  %785 = vmatprep.subr.bf16.mxu0 %v536
  %786 = vmatpush1.bf16.msra.mxu0 %v535
  %787 = vmatprep.subr.bf16.mxu0 %v544
  %788 = vmatpush1.bf16.msra.mxu0 %v543
  %789 = vmatprep.subr.bf16.mxu0 %v552
  %790 = vmatpush1.bf16.msra.mxu0 %v551
  %791 = vmatprep.subr.bf16.mxu0 %v560
  %792 = vmatpush1.bf16.msra.mxu0 %v559
  %793 = vmatprep.subr.bf16.mxu0 %v568
  %794 = vmatpush1.bf16.msra.mxu0 %v567
  %795 = vmatprep.subr.bf16.mxu0 %v576
  %796 = vmatpush1.bf16.msra.mxu0 %v575
  %797 = vmatprep.subr.bf16.mxu0 %v584
  %798 = vmatpush1.bf16.msra.mxu0 %v583
  %799 = vmatprep.subr.bf16.mxu0 %v592
  %800 = vmatpush1.bf16.msra.mxu0 %v591
  %801 = vmatprep.subr.bf16.mxu0 %v600
  %802 = vmatpush1.bf16.msra.mxu0 %v599
  %803 = vmatprep.subr.bf16.mxu0 %v608
  %804 = vmatpush1.bf16.msra.mxu0 %v607
  %805 = vmatprep.subr.bf16.mxu0 %v616
  %806 = vmatpush1.bf16.msra.mxu0 %v615
  %807 = vmatprep.subr.bf16.mxu0 %v624
  %808 = vmatpush1.bf16.msra.mxu0 %v623
  %809 = vmatprep.subr.bf16.mxu0 %v632
  %810 = vmatpush1.bf16.msra.mxu0 %v631
  %811 = vmatprep.subr.bf16.mxu0 %v640
  %812 = vmatpush1.bf16.msra.mxu0 %v639
  %813 = vmatprep.subr.bf16.mxu0 %v648
  %814 = vmatpush1.bf16.msra.mxu0 %v647
  %815 = vmatprep.mubr.bf16.mxu0 %v14
  %816 = vmatmul.mubr.bf16.gmra.mrb[0].mxu0 %v13
  %v817 = vpop.f32.mrb[0].mxu0
  %v818 = vadd.f32 0.0, %v817
  %v819 = vpop.f32.mrb[0].mxu0
  %v820 = vadd.f32 0.0, %v819
  %v821 = vpop.f32.mrb[0].mxu0
  %v822 = vpop.f32.mrb[0].mxu0
  %823 = vdwg.mxu0
  %824 = vmatprep.subr.bf16.mxu0 %v530
  %825 = vmatpush1.bf16.msra.mxu0 %v529
  %826 = vmatprep.subr.bf16.mxu0 %v538
  %827 = vmatpush1.bf16.msra.mxu0 %v537
  %828 = vmatprep.subr.bf16.mxu0 %v546
  %829 = vmatpush1.bf16.msra.mxu0 %v545
  %830 = vmatprep.subr.bf16.mxu0 %v554
  %831 = vmatpush1.bf16.msra.mxu0 %v553
  %832 = vmatprep.subr.bf16.mxu0 %v562
  %833 = vmatpush1.bf16.msra.mxu0 %v561
  %834 = vmatprep.subr.bf16.mxu0 %v570
  %835 = vmatpush1.bf16.msra.mxu0 %v569
  %836 = vmatprep.subr.bf16.mxu0 %v578
  %837 = vmatpush1.bf16.msra.mxu0 %v577
  %838 = vmatprep.subr.bf16.mxu0 %v586
  %839 = vmatpush1.bf16.msra.mxu0 %v585
  %840 = vmatprep.subr.bf16.mxu0 %v594
  %841 = vmatpush1.bf16.msra.mxu0 %v593
  %842 = vmatprep.subr.bf16.mxu0 %v602
  %843 = vmatpush1.bf16.msra.mxu0 %v601
  %844 = vmatprep.subr.bf16.mxu0 %v610
  %845 = vmatpush1.bf16.msra.mxu0 %v609
  %846 = vmatprep.subr.bf16.mxu0 %v618
  %847 = vmatpush1.bf16.msra.mxu0 %v617
  %848 = vmatprep.subr.bf16.mxu0 %v626
  %849 = vmatpush1.bf16.msra.mxu0 %v625
  %850 = vmatprep.subr.bf16.mxu0 %v634
  %851 = vmatpush1.bf16.msra.mxu0 %v633
  %852 = vmatprep.subr.bf16.mxu0 %v642
  %853 = vmatpush1.bf16.msra.mxu0 %v641
  %854 = vmatprep.subr.bf16.mxu0 %v650
  %855 = vmatpush1.bf16.msra.mxu0 %v649
  %856 = vmatprep.mubr.bf16.mxu0 %v14
  %857 = vmatmul.mubr.bf16.gmra.mrb[0].mxu0 %v13
  %v858 = vpop.f32.mrb[0].mxu0
  %v859 = vadd.f32 0.0, %v858
  %v860 = vpop.f32.mrb[0].mxu0
  %v861 = vadd.f32 0.0, %v860
  %v862 = vpop.f32.mrb[0].mxu0
  %v863 = vpop.f32.mrb[0].mxu0
  %864 = vdwg.mxu0
  %865 = vmatprep.subr.bf16.mxu0 %v532
  %866 = vmatpush1.bf16.msra.mxu0 %v531
  %867 = vmatprep.subr.bf16.mxu0 %v540
  %868 = vmatpush1.bf16.msra.mxu0 %v539
  %869 = vmatprep.subr.bf16.mxu0 %v548
  %870 = vmatpush1.bf16.msra.mxu0 %v547
  %871 = vmatprep.subr.bf16.mxu0 %v556
  %872 = vmatpush1.bf16.msra.mxu0 %v555
  %873 = vmatprep.subr.bf16.mxu0 %v564
  %874 = vmatpush1.bf16.msra.mxu0 %v563
  %875 = vmatprep.subr.bf16.mxu0 %v572
  %876 = vmatpush1.bf16.msra.mxu0 %v571
  %877 = vmatprep.subr.bf16.mxu0 %v580
  %878 = vmatpush1.bf16.msra.mxu0 %v579
  %879 = vmatprep.subr.bf16.mxu0 %v588
  %880 = vmatpush1.bf16.msra.mxu0 %v587
  %881 = vmatprep.subr.bf16.mxu0 %v596
  %882 = vmatpush1.bf16.msra.mxu0 %v595
  %883 = vmatprep.subr.bf16.mxu0 %v604
  %884 = vmatpush1.bf16.msra.mxu0 %v603
  %885 = vmatprep.subr.bf16.mxu0 %v612
  %886 = vmatpush1.bf16.msra.mxu0 %v611
  %887 = vmatprep.subr.bf16.mxu0 %v620
  %888 = vmatpush1.bf16.msra.mxu0 %v619
  %889 = vmatprep.subr.bf16.mxu0 %v628
  %890 = vmatpush1.bf16.msra.mxu0 %v627
  %891 = vmatprep.subr.bf16.mxu0 %v636
  %892 = vmatpush1.bf16.msra.mxu0 %v635
  %893 = vmatprep.subr.bf16.mxu0 %v644
  %894 = vmatpush1.bf16.msra.mxu0 %v643
  %895 = vmatprep.subr.bf16.mxu0 %v652
  %896 = vmatpush1.bf16.msra.mxu0 %v651
  %897 = vmatprep.mubr.bf16.mxu0 %v14
  %898 = vmatmul.mubr.bf16.gmra.mrb[0].mxu0 %v13
  %v899 = vpop.f32.mrb[0].mxu0
  %v900 = vadd.f32 0.0, %v899
  %v901 = vpop.f32.mrb[0].mxu0
  %v902 = vadd.f32 0.0, %v901
  %v903 = vpop.f32.mrb[0].mxu0
  %v904 = vpop.f32.mrb[0].mxu0
  %905 = vdwg.mxu0
  %906 = vmatprep.subr.bf16.mxu0 %v534
  %907 = vmatpush1.bf16.msra.mxu0 %v533
  %908 = vmatprep.subr.bf16.mxu0 %v542
  %909 = vmatpush1.bf16.msra.mxu0 %v541
  %910 = vmatprep.subr.bf16.mxu0 %v550
  %911 = vmatpush1.bf16.msra.mxu0 %v549
  %912 = vmatprep.subr.bf16.mxu0 %v558
  %913 = vmatpush1.bf16.msra.mxu0 %v557
  %914 = vmatprep.subr.bf16.mxu0 %v566
  %915 = vmatpush1.bf16.msra.mxu0 %v565
  %916 = vmatprep.subr.bf16.mxu0 %v574
  %917 = vmatpush1.bf16.msra.mxu0 %v573
  %918 = vmatprep.subr.bf16.mxu0 %v582
  %919 = vmatpush1.bf16.msra.mxu0 %v581
  %920 = vmatprep.subr.bf16.mxu0 %v590
  %921 = vmatpush1.bf16.msra.mxu0 %v589
  %922 = vmatprep.subr.bf16.mxu0 %v598
  %923 = vmatpush1.bf16.msra.mxu0 %v597
  %924 = vmatprep.subr.bf16.mxu0 %v606
  %925 = vmatpush1.bf16.msra.mxu0 %v605
  %926 = vmatprep.subr.bf16.mxu0 %v614
  %927 = vmatpush1.bf16.msra.mxu0 %v613
  %928 = vmatprep.subr.bf16.mxu0 %v622
  %929 = vmatpush1.bf16.msra.mxu0 %v621
  %930 = vmatprep.subr.bf16.mxu0 %v630
  %931 = vmatpush1.bf16.msra.mxu0 %v629
  %932 = vmatprep.subr.bf16.mxu0 %v638
  %933 = vmatpush1.bf16.msra.mxu0 %v637
  %934 = vmatprep.subr.bf16.mxu0 %v646
  %935 = vmatpush1.bf16.msra.mxu0 %v645
  %936 = vmatprep.subr.bf16.mxu0 %v654
  %937 = vmatpush1.bf16.msra.mxu0 %v653
  %938 = vmatprep.mubr.bf16.mxu0 %v14
  %939 = vmatmul.mubr.bf16.gmra.mrb[0].mxu0 %v13
  %v940 = vpop.f32.mrb[0].mxu0
  %v941 = vadd.f32 0.0, %v940
  %v942 = vpop.f32.mrb[0].mxu0
  %v943 = vadd.f32 0.0, %v942
  %v944 = vpop.f32.mrb[0].mxu0
  %v945 = vpop.f32.mrb[0].mxu0
  %946 = vdwg.mxu0
  %v947 = vpack.c.bf16 %v818, %v818
  %v948 = vpack.c.bf16 %v820, %v820
  %v949 = vpack.c.bf16 %v859, %v859
  %v950 = vpack.c.bf16 %v861, %v861
  %v951 = vpack.c.bf16 %v900, %v900
  %v952 = vpack.c.bf16 %v902, %v902
  %v953 = vpack.c.bf16 %v941, %v941
  %v954 = vpack.c.bf16 %v943, %v943
  %v963 = vunpack.c.l.b16 %v947
  %v964 = vunpack.c.l.b16 %v948
  %v965 = vunpack.c.l.b16 %v949
  %v966 = vunpack.c.l.b16 %v950
  %v967 = vunpack.c.l.b16 %v951
  %v968 = vunpack.c.l.b16 %v952
  %v969 = vunpack.c.l.b16 %v953
  %v970 = vunpack.c.l.b16 %v954
  %v971 = vpack.c.b16 %v964, %v963
  %v972 = vpack.c.b16 %v966, %v965
  %v973 = vpack.c.b16 %v968, %v967
  %v974 = vpack.c.b16 %v970, %v969
  %979 = vst [vmem:[%s2] sm:$0x77] %v971
  %980 = vst [vmem:[%s2 + $0x8] sm:$0x77] %v972
  %981 = vst [vmem:[%s2 + $0x10] sm:$0x77] %v973
  %982 = vst [vmem:[%s2 + $0x18] sm:$0x77] %v974
  // Predicated region
  $region10: #{auto_sam_seg_forward.2} parent=0 // pred_check
    _
  $region11: #{auto_sam_seg_forward.2} parent=0 // pred_check_branch
    %984 = sbr.rel (0) target = $region13
  $region12: #{auto_sam_seg_forward.2} parent=0 // pred_region
    _
  $region13: #{auto_sam_seg_forward.2} parent=0 // pred_fallthru
    _
  // Predicated region
  $region14: #{auto_sam_seg_forward.2} parent=0 // pred_check
    _
  $region15: #{auto_sam_seg_forward.2} parent=0 // pred_check_branch
    %986 = sbr.rel (0) target = $region17
  $region16: #{auto_sam_seg_forward.2} parent=0 // pred_region
    _
  $region17: #{auto_sam_seg_forward.2} parent=0 // pred_fallthru
    _

// kernel: auto_sam_seg_forward.3
$region0: #{auto_sam_seg_forward.3}
  #allocation0 [shape = 'u32[]', space=smem, size = 0x4, offset = 0x4, fixed_abs, tag = 'smem constant byte address 0x4 - core index']
  #allocation1 [shape = 'u32[144,128]{1,0:T(1,128)}', space=vmem, size = 0x12000, scoped, tag = 'internal scratch']
  %s0 = inlined_call_operand.vmem [shape: bf16[48,128], index: 0, kind: input, shape index: {}]
  %s1 = inlined_call_operand.vmem [shape: f32[256,48], index: 1, kind: input, shape index: {}]
  %s2 = inlined_call_operand.vmem [shape: f32[256,1], index: 2, kind: input, shape index: {}]
  %s3 = inlined_call_operand.vmem [shape: f32[128,2], index: 3, kind: input, shape index: {}]
  %s4 = inlined_call_operand.vmem [shape: f32[64,256], index: 4, kind: input, shape index: {}]
  %s5 = inlined_call_operand.vmem [shape: f32[64,1], index: 5, kind: input, shape index: {}]
  %s6 = inlined_call_operand.vmem [shape: f32[2,64], index: 6, kind: input, shape index: {}]
  %s7 = inlined_call_operand.vmem [shape: f32[2,1], index: 7, kind: input, shape index: {}]
  %s8 = inlined_call_operand.vmem [shape: f32[256,2], index: 8, kind: input, shape index: {}]
  %s9 = inlined_call_operand.vmem [shape: f32[1,2], index: 9, kind: input, shape index: {}]
  %s10 = inlined_call_operand.vmem [shape: bf16[64,256], index: 10, kind: input, shape index: {}]
  %s11 = inlined_call_operand.vmem [shape: f32[4,256], index: 11, kind: output, shape index: {0}]
  %s12 = inlined_call_operand.hbm [shape: f32[2,2], index: 12, kind: output, shape index: {1}]
  %13 = xla_tuple %s11, %s12
  %s14 = sld [smem:[#allocation0]]
  $region62: #{auto_sam_seg_forward.3} parent=0
    _
  %s16 = ssub.s32 1, %s14
  %s17 = scalar_select 0, %s16, %s14
  $region1: #{auto_sam_seg_forward.3} parent=0
    #allocation2 [shape = 'u8[1024]{0}', space=vmem, size = 0x400, scoped, tag = 'output window, operand 1, single buffered']
    #allocation3 [shape = 's32[1]{0}', space=sflag, size = 0x4, scoped, tag = 'scoped memory for auto_sam_seg_forward.3']
    %18 = vsyncpa [#allocation3], 0
    // Predicated region
    $region2: #{auto_sam_seg_forward.3} parent=1 // pred_check
      _
    $region3: #{auto_sam_seg_forward.3} parent=1 // pred_check_branch
      %20 = sbr.rel (0) target = $region5
    $region4: #{auto_sam_seg_forward.3} parent=1 // pred_region
      _
    $region5: #{auto_sam_seg_forward.3} parent=1 // pred_fallthru
      _
    // Predicated region
    $region6: #{auto_sam_seg_forward.3} parent=1 // pred_check
      _
    $region7: #{auto_sam_seg_forward.3} parent=1 // pred_check_branch
      %22 = sbr.rel (0) target = $region9
    $region8: #{auto_sam_seg_forward.3} parent=1 // pred_region
      _
    $region9: #{auto_sam_seg_forward.3} parent=1 // pred_fallthru
      _
    // Predicated region
    $region10: #{auto_sam_seg_forward.3} parent=1 // pred_check
      _
    $region11: #{auto_sam_seg_forward.3} parent=1 // pred_check_branch
      %24 = sbr.rel (0) target = $region13
    $region12: #{auto_sam_seg_forward.3} parent=1 // pred_region
      _
    $region13: #{auto_sam_seg_forward.3} parent=1 // pred_fallthru
      _
    // Predicated region
    $region14: #{auto_sam_seg_forward.3} parent=1 // pred_check
      _
    $region15: #{auto_sam_seg_forward.3} parent=1 // pred_check_branch
      %26 = sbr.rel (0) target = $region17
    $region16: #{auto_sam_seg_forward.3} parent=1 // pred_region
      _
    $region17: #{auto_sam_seg_forward.3} parent=1 // pred_fallthru
      _
    // Predicated region
    $region18: #{auto_sam_seg_forward.3} parent=1 // pred_check
      _
    $region19: #{auto_sam_seg_forward.3} parent=1 // pred_check_branch
      %28 = sbr.rel (0) target = $region21
    $region20: #{auto_sam_seg_forward.3} parent=1 // pred_region
      _
    $region21: #{auto_sam_seg_forward.3} parent=1 // pred_fallthru
      _
    // Predicated region
    $region22: #{auto_sam_seg_forward.3} parent=1 // pred_check
      _
    $region23: #{auto_sam_seg_forward.3} parent=1 // pred_check_branch
      %30 = sbr.rel (0) target = $region25
    $region24: #{auto_sam_seg_forward.3} parent=1 // pred_region
      _
    $region25: #{auto_sam_seg_forward.3} parent=1 // pred_fallthru
      _
    // Predicated region
    $region26: #{auto_sam_seg_forward.3} parent=1 // pred_check
      _
    $region27: #{auto_sam_seg_forward.3} parent=1 // pred_check_branch
      %32 = sbr.rel (0) target = $region29
    $region28: #{auto_sam_seg_forward.3} parent=1 // pred_region
      _
    $region29: #{auto_sam_seg_forward.3} parent=1 // pred_fallthru
      _
    // Predicated region
    $region30: #{auto_sam_seg_forward.3} parent=1 // pred_check
      _
    $region31: #{auto_sam_seg_forward.3} parent=1 // pred_check_branch
      %34 = sbr.rel (0) target = $region33
    $region32: #{auto_sam_seg_forward.3} parent=1 // pred_region
      _
    $region33: #{auto_sam_seg_forward.3} parent=1 // pred_fallthru
      _
    // Predicated region
    $region34: #{auto_sam_seg_forward.3} parent=1 // pred_check
      _
    $region35: #{auto_sam_seg_forward.3} parent=1 // pred_check_branch
      %36 = sbr.rel (0) target = $region37
    $region36: #{auto_sam_seg_forward.3} parent=1 // pred_region
      _
    $region37: #{auto_sam_seg_forward.3} parent=1 // pred_fallthru
      _
    // Predicated region
    $region38: #{auto_sam_seg_forward.3} parent=1 // pred_check
      _
    $region39: #{auto_sam_seg_forward.3} parent=1 // pred_check_branch
      %38 = sbr.rel (0) target = $region41
    $region40: #{auto_sam_seg_forward.3} parent=1 // pred_region
      _
    $region41: #{auto_sam_seg_forward.3} parent=1 // pred_fallthru
      _
    // Predicated region
    $region42: #{auto_sam_seg_forward.3} parent=1 // pred_check
      _
    $region43: #{auto_sam_seg_forward.3} parent=1 // pred_check_branch
      %40 = sbr.rel (0) target = $region45
    $region44: #{auto_sam_seg_forward.3} parent=1 // pred_region
      _
    $region45: #{auto_sam_seg_forward.3} parent=1 // pred_fallthru
      _
    %v42 = vld [vmem:[%s1] sm:$0xff]
    %v43 = vld [vmem:[%s1 + $0x8] sm:$0xff]
    %v44 = vld [vmem:[%s1 + $0x10] sm:$0xff]
    %v45 = vld [vmem:[%s1 + $0x18] sm:$0xff]
    %v46 = vld [vmem:[%s1 + $0x20] sm:$0xff]
    %v47 = vld [vmem:[%s1 + $0x28] sm:$0xff]
    %v48 = vld [vmem:[%s1 + $0x30] sm:$0xff]
    %v49 = vld [vmem:[%s1 + $0x38] sm:$0xff]
    %v50 = vld [vmem:[%s1 + $0x40] sm:$0xff]
    %v51 = vld [vmem:[%s1 + $0x48] sm:$0xff]
    %v52 = vld [vmem:[%s1 + $0x50] sm:$0xff]
    %v53 = vld [vmem:[%s1 + $0x58] sm:$0xff]
    %v54 = vld [vmem:[%s1 + $0x60] sm:$0xff]
    %v55 = vld [vmem:[%s1 + $0x68] sm:$0xff]
    %v56 = vld [vmem:[%s1 + $0x70] sm:$0xff]
    %v57 = vld [vmem:[%s1 + $0x78] sm:$0xff]
    %v58 = vld [vmem:[%s1 + $0x80] sm:$0xff]
    %v59 = vld [vmem:[%s1 + $0x88] sm:$0xff]
    %v60 = vld [vmem:[%s1 + $0x90] sm:$0xff]
    %v61 = vld [vmem:[%s1 + $0x98] sm:$0xff]
    %v62 = vld [vmem:[%s1 + $0xa0] sm:$0xff]
    %v63 = vld [vmem:[%s1 + $0xa8] sm:$0xff]
    %v64 = vld [vmem:[%s1 + $0xb0] sm:$0xff]
    %v65 = vld [vmem:[%s1 + $0xb8] sm:$0xff]
    %v66 = vld [vmem:[%s1 + $0xc0] sm:$0xff]
    %v67 = vld [vmem:[%s1 + $0xc8] sm:$0xff]
    %v68 = vld [vmem:[%s1 + $0xd0] sm:$0xff]
    %v69 = vld [vmem:[%s1 + $0xd8] sm:$0xff]
    %v70 = vld [vmem:[%s1 + $0xe0] sm:$0xff]
    %v71 = vld [vmem:[%s1 + $0xe8] sm:$0xff]
    %v72 = vld [vmem:[%s1 + $0xf0] sm:$0xff]
    %v73 = vld [vmem:[%s1 + $0xf8] sm:$0xff]
    %v74 = vpack.c.bf16 %v43, %v42
    %v75 = vpack.c.bf16 %v45, %v44
    %v76 = vpack.c.bf16 %v47, %v46
    %v77 = vpack.c.bf16 %v49, %v48
    %v78 = vpack.c.bf16 %v51, %v50
    %v79 = vpack.c.bf16 %v53, %v52
    %v80 = vpack.c.bf16 %v55, %v54
    %v81 = vpack.c.bf16 %v57, %v56
    %v82 = vpack.c.bf16 %v59, %v58
    %v83 = vpack.c.bf16 %v61, %v60
    %v84 = vpack.c.bf16 %v63, %v62
    %v85 = vpack.c.bf16 %v65, %v64
    %v86 = vpack.c.bf16 %v67, %v66
    %v87 = vpack.c.bf16 %v69, %v68
    %v88 = vpack.c.bf16 %v71, %v70
    %v89 = vpack.c.bf16 %v73, %v72
    %v90 = vld [vmem:[%s0] sm:$0xf]
    %v91 = vld [vmem:[%s0 + $0x4] sm:$0xf]
    %v92 = vld [vmem:[%s0 + $0x8] sm:$0xf]
    %v93 = vld [vmem:[%s0 + $0xc] sm:$0xf]
    %v94 = vld [vmem:[%s0 + $0x10] sm:$0xf]
    %v95 = vld [vmem:[%s0 + $0x14] sm:$0xf]
    %v96 = vld [vmem:[%s2] sm:$0xff]
    %v97 = vld [vmem:[%s2 + $0x8] sm:$0xff]
    %v98 = vld [vmem:[%s2 + $0x10] sm:$0xff]
    %v99 = vld [vmem:[%s2 + $0x18] sm:$0xff]
    %v100 = vld [vmem:[%s2 + $0x20] sm:$0xff]
    %v101 = vld [vmem:[%s2 + $0x28] sm:$0xff]
    %v102 = vld [vmem:[%s2 + $0x30] sm:$0xff]
    %v103 = vld [vmem:[%s2 + $0x38] sm:$0xff]
    %v104 = vld [vmem:[%s2 + $0x40] sm:$0xff]
    %v105 = vld [vmem:[%s2 + $0x48] sm:$0xff]
    %v106 = vld [vmem:[%s2 + $0x50] sm:$0xff]
    %v107 = vld [vmem:[%s2 + $0x58] sm:$0xff]
    %v108 = vld [vmem:[%s2 + $0x60] sm:$0xff]
    %v109 = vld [vmem:[%s2 + $0x68] sm:$0xff]
    %v110 = vld [vmem:[%s2 + $0x70] sm:$0xff]
    %v111 = vld [vmem:[%s2 + $0x78] sm:$0xff]
    %v112 = vld [vmem:[%s2 + $0x80] sm:$0xff]
    %v113 = vld [vmem:[%s2 + $0x88] sm:$0xff]
    %v114 = vld [vmem:[%s2 + $0x90] sm:$0xff]
    %v115 = vld [vmem:[%s2 + $0x98] sm:$0xff]
    %v116 = vld [vmem:[%s2 + $0xa0] sm:$0xff]
    %v117 = vld [vmem:[%s2 + $0xa8] sm:$0xff]
    %v118 = vld [vmem:[%s2 + $0xb0] sm:$0xff]
    %v119 = vld [vmem:[%s2 + $0xb8] sm:$0xff]
    %v120 = vld [vmem:[%s2 + $0xc0] sm:$0xff]
    %v121 = vld [vmem:[%s2 + $0xc8] sm:$0xff]
    %v122 = vld [vmem:[%s2 + $0xd0] sm:$0xff]
    %v123 = vld [vmem:[%s2 + $0xd8] sm:$0xff]
    %v124 = vld [vmem:[%s2 + $0xe0] sm:$0xff]
    %v125 = vld [vmem:[%s2 + $0xe8] sm:$0xff]
    %v126 = vld [vmem:[%s2 + $0xf0] sm:$0xff]
    %v127 = vld [vmem:[%s2 + $0xf8] sm:$0xff]
    %129 = vset.pattern.permute.xlu0 0
    %130 = vperm.xlu0 %129, %v96
    %v131 = vpop.permute.xlu0 %130
    %134 = vset.pattern.permute.xlu0 0
    %135 = vperm.xlu0 %134, %v97
    %v136 = vpop.permute.xlu0 %135
    %139 = vset.pattern.permute.xlu0 0
    %140 = vperm.xlu0 %139, %v98
    %v141 = vpop.permute.xlu0 %140
    %144 = vset.pattern.permute.xlu0 0
    %145 = vperm.xlu0 %144, %v99
    %v146 = vpop.permute.xlu0 %145
    %149 = vset.pattern.permute.xlu0 0
    %150 = vperm.xlu0 %149, %v100
    %v151 = vpop.permute.xlu0 %150
    %154 = vset.pattern.permute.xlu0 0
    %155 = vperm.xlu0 %154, %v101
    %v156 = vpop.permute.xlu0 %155
    %159 = vset.pattern.permute.xlu0 0
    %160 = vperm.xlu0 %159, %v102
    %v161 = vpop.permute.xlu0 %160
    %164 = vset.pattern.permute.xlu0 0
    %165 = vperm.xlu0 %164, %v103
    %v166 = vpop.permute.xlu0 %165
    %169 = vset.pattern.permute.xlu0 0
    %170 = vperm.xlu0 %169, %v104
    %v171 = vpop.permute.xlu0 %170
    %174 = vset.pattern.permute.xlu0 0
    %175 = vperm.xlu0 %174, %v105
    %v176 = vpop.permute.xlu0 %175
    %179 = vset.pattern.permute.xlu0 0
    %180 = vperm.xlu0 %179, %v106
    %v181 = vpop.permute.xlu0 %180
    %184 = vset.pattern.permute.xlu0 0
    %185 = vperm.xlu0 %184, %v107
    %v186 = vpop.permute.xlu0 %185
    %189 = vset.pattern.permute.xlu0 0
    %190 = vperm.xlu0 %189, %v108
    %v191 = vpop.permute.xlu0 %190
    %194 = vset.pattern.permute.xlu0 0
    %195 = vperm.xlu0 %194, %v109
    %v196 = vpop.permute.xlu0 %195
    %199 = vset.pattern.permute.xlu0 0
    %200 = vperm.xlu0 %199, %v110
    %v201 = vpop.permute.xlu0 %200
    %204 = vset.pattern.permute.xlu0 0
    %205 = vperm.xlu0 %204, %v111
    %v206 = vpop.permute.xlu0 %205
    %209 = vset.pattern.permute.xlu0 0
    %210 = vperm.xlu0 %209, %v112
    %v211 = vpop.permute.xlu0 %210
    %214 = vset.pattern.permute.xlu0 0
    %215 = vperm.xlu0 %214, %v113
    %v216 = vpop.permute.xlu0 %215
    %219 = vset.pattern.permute.xlu0 0
    %220 = vperm.xlu0 %219, %v114
    %v221 = vpop.permute.xlu0 %220
    %224 = vset.pattern.permute.xlu0 0
    %225 = vperm.xlu0 %224, %v115
    %v226 = vpop.permute.xlu0 %225
    %229 = vset.pattern.permute.xlu0 0
    %230 = vperm.xlu0 %229, %v116
    %v231 = vpop.permute.xlu0 %230
    %234 = vset.pattern.permute.xlu0 0
    %235 = vperm.xlu0 %234, %v117
    %v236 = vpop.permute.xlu0 %235
    %239 = vset.pattern.permute.xlu0 0
    %240 = vperm.xlu0 %239, %v118
    %v241 = vpop.permute.xlu0 %240
    %244 = vset.pattern.permute.xlu0 0
    %245 = vperm.xlu0 %244, %v119
    %v246 = vpop.permute.xlu0 %245
    %249 = vset.pattern.permute.xlu0 0
    %250 = vperm.xlu0 %249, %v120
    %v251 = vpop.permute.xlu0 %250
    %254 = vset.pattern.permute.xlu0 0
    %255 = vperm.xlu0 %254, %v121
    %v256 = vpop.permute.xlu0 %255
    %259 = vset.pattern.permute.xlu0 0
    %260 = vperm.xlu0 %259, %v122
    %v261 = vpop.permute.xlu0 %260
    %264 = vset.pattern.permute.xlu0 0
    %265 = vperm.xlu0 %264, %v123
    %v266 = vpop.permute.xlu0 %265
    %269 = vset.pattern.permute.xlu0 0
    %270 = vperm.xlu0 %269, %v124
    %v271 = vpop.permute.xlu0 %270
    %274 = vset.pattern.permute.xlu0 0
    %275 = vperm.xlu0 %274, %v125
    %v276 = vpop.permute.xlu0 %275
    %279 = vset.pattern.permute.xlu0 0
    %280 = vperm.xlu0 %279, %v126
    %v281 = vpop.permute.xlu0 %280
    %284 = vset.pattern.permute.xlu0 0
    %285 = vperm.xlu0 %284, %v127
    %v286 = vpop.permute.xlu0 %285
    %v294 = vunpack.c.l.b16 %v90
    %v295 = vunpack.c.l.b16 %v91
    %v296 = vunpack.c.l.b16 %v92
    %v297 = vunpack.c.l.b16 %v93
    %v298 = vunpack.c.l.b16 %v94
    %v299 = vunpack.c.l.b16 %v95
    %v300 = vpack.c.b16 %v295, %v294
    %v301 = vpack.c.b16 %v297, %v296
    %v302 = vpack.c.b16 %v299, %v298
    %vm306 = vcmask 392192
    %v308 = vsel %vm306, %v74, 0
    %v311 = vsel %vm306, %v75, 0
    %v314 = vsel %vm306, %v76, 0
    %v317 = vsel %vm306, %v77, 0
    %v320 = vsel %vm306, %v78, 0
    %v323 = vsel %vm306, %v79, 0
    %v326 = vsel %vm306, %v80, 0
    %v329 = vsel %vm306, %v81, 0
    %v332 = vsel %vm306, %v82, 0
    %v335 = vsel %vm306, %v83, 0
    %v338 = vsel %vm306, %v84, 0
    %v341 = vsel %vm306, %v85, 0
    %v344 = vsel %vm306, %v86, 0
    %v347 = vsel %vm306, %v87, 0
    %v350 = vsel %vm306, %v88, 0
    %v353 = vsel %vm306, %v89, 0
    %355 = vmatprep.subr.bf16.mxu0 0
    %356 = vmatpush1.bf16.msra.mxu0 %v300
    %357 = vmatprep.subr.bf16.mxu0 0
    %358 = vmatpush1.bf16.msra.mxu0 %v301
    %359 = vmatprep.subr.bf16.mxu0 0
    %360 = vmatpush1.bf16.msra.mxu0 %v302
    %361 = vmatprep.subr.bf16.mxu0 0
    %362 = vmatpush1.bf16.msra.mxu0 0
    %363 = vmatprep.subr.bf16.mxu0 0
    %364 = vmatpush1.bf16.msra.mxu0 0
    %365 = vmatprep.subr.bf16.mxu0 0
    %366 = vmatpush1.bf16.msra.mxu0 0
    %367 = vmatprep.subr.bf16.mxu0 0
    %368 = vmatpush1.bf16.msra.mxu0 0
    %369 = vmatprep.subr.bf16.mxu0 0
    %370 = vmatpush1.bf16.msra.mxu0 0
    %371 = vmatprep.subr.bf16.mxu0 0
    %372 = vmatpush1.bf16.msra.mxu0 0
    %373 = vmatprep.subr.bf16.mxu0 0
    %374 = vmatpush1.bf16.msra.mxu0 0
    %375 = vmatprep.subr.bf16.mxu0 0
    %376 = vmatpush1.bf16.msra.mxu0 0
    %377 = vmatprep.subr.bf16.mxu0 0
    %378 = vmatpush1.bf16.msra.mxu0 0
    %379 = vmatprep.subr.bf16.mxu0 0
    %380 = vmatpush1.bf16.msra.mxu0 0
    %381 = vmatprep.subr.bf16.mxu0 0
    %382 = vmatpush1.bf16.msra.mxu0 0
    %383 = vmatprep.subr.bf16.mxu0 0
    %384 = vmatpush1.bf16.msra.mxu0 0
    %385 = vmatprep.subr.bf16.mxu0 0
    %386 = vmatpush1.bf16.msra.mxu0 0
    %387 = vmatprep.mubr.bf16.mxu0 0
    %388 = vmatmul.mubr.bf16.gmra.mrb[0].mxu0 %v308
    %v389 = vpop.f32.mrb[0].mxu0
    %v390 = vadd.f32 %v131, %v389
    %v391 = vpop.f32.mrb[0].mxu0
    %v392 = vpop.f32.mrb[0].mxu0
    %v393 = vadd.f32 %v136, %v392
    %v394 = vpop.f32.mrb[0].mxu0
    %395 = vmatprep.mubr.bf16.mxu0 0
    %396 = vmatmul.mubr.bf16.gmra.mrb[0].mxu0 %v311
    %v397 = vpop.f32.mrb[0].mxu0
    %v398 = vadd.f32 %v141, %v397
    %v399 = vpop.f32.mrb[0].mxu0
    %v400 = vpop.f32.mrb[0].mxu0
    %v401 = vadd.f32 %v146, %v400
    %v402 = vpop.f32.mrb[0].mxu0
    %403 = vmatprep.mubr.bf16.mxu0 0
    %404 = vmatmul.mubr.bf16.gmra.mrb[0].mxu0 %v314
    %v405 = vpop.f32.mrb[0].mxu0
    %v406 = vadd.f32 %v151, %v405
    %v407 = vpop.f32.mrb[0].mxu0
    %v408 = vpop.f32.mrb[0].mxu0
    %v409 = vadd.f32 %v156, %v408
    %v410 = vpop.f32.mrb[0].mxu0
    %411 = vmatprep.mubr.bf16.mxu0 0
    %412 = vmatmul.mubr.bf16.gmra.mrb[0].mxu0 %v317
    %v413 = vpop.f32.mrb[0].mxu0
    %v414 = vadd.f32 %v161, %v413
    %v415 = vpop.f32.mrb[0].mxu0
    %v416 = vpop.f32.mrb[0].mxu0
    %v417 = vadd.f32 %v166, %v416
    %v418 = vpop.f32.mrb[0].mxu0
    %419 = vmatprep.mubr.bf16.mxu0 0
    %420 = vmatmul.mubr.bf16.gmra.mrb[0].mxu0 %v320
    %v421 = vpop.f32.mrb[0].mxu0
    %v422 = vadd.f32 %v171, %v421
    %v423 = vpop.f32.mrb[0].mxu0
    %v424 = vpop.f32.mrb[0].mxu0
    %v425 = vadd.f32 %v176, %v424
    %v426 = vpop.f32.mrb[0].mxu0
    %427 = vmatprep.mubr.bf16.mxu0 0
    %428 = vmatmul.mubr.bf16.gmra.mrb[0].mxu0 %v323
    %v429 = vpop.f32.mrb[0].mxu0
    %v430 = vadd.f32 %v181, %v429
    %v431 = vpop.f32.mrb[0].mxu0
    %v432 = vpop.f32.mrb[0].mxu0
    %v433 = vadd.f32 %v186, %v432
    %v434 = vpop.f32.mrb[0].mxu0
    %435 = vmatprep.mubr.bf16.mxu0 0
    %436 = vmatmul.mubr.bf16.gmra.mrb[0].mxu0 %v326
    %v437 = vpop.f32.mrb[0].mxu0
    %v438 = vadd.f32 %v191, %v437
    %v439 = vpop.f32.mrb[0].mxu0
    %v440 = vpop.f32.mrb[0].mxu0
    %v441 = vadd.f32 %v196, %v440
    %v442 = vpop.f32.mrb[0].mxu0
    %443 = vmatprep.mubr.bf16.mxu0 0
    %444 = vmatmul.mubr.bf16.gmra.mrb[0].mxu0 %v329
    %v445 = vpop.f32.mrb[0].mxu0
    %v446 = vadd.f32 %v201, %v445
    %v447 = vpop.f32.mrb[0].mxu0
    %v448 = vpop.f32.mrb[0].mxu0
    %v449 = vadd.f32 %v206, %v448
    %v450 = vpop.f32.mrb[0].mxu0
    %451 = vmatprep.mubr.bf16.mxu0 0
    %452 = vmatmul.mubr.bf16.gmra.mrb[0].mxu0 %v332
    %v453 = vpop.f32.mrb[0].mxu0
    %v454 = vadd.f32 %v211, %v453
    %v455 = vpop.f32.mrb[0].mxu0
    %v456 = vpop.f32.mrb[0].mxu0
    %v457 = vadd.f32 %v216, %v456
    %v458 = vpop.f32.mrb[0].mxu0
    %459 = vmatprep.mubr.bf16.mxu0 0
    %460 = vmatmul.mubr.bf16.gmra.mrb[0].mxu0 %v335
    %v461 = vpop.f32.mrb[0].mxu0
    %v462 = vadd.f32 %v221, %v461
    %v463 = vpop.f32.mrb[0].mxu0
    %v464 = vpop.f32.mrb[0].mxu0
    %v465 = vadd.f32 %v226, %v464
    %v466 = vpop.f32.mrb[0].mxu0
    %467 = vmatprep.mubr.bf16.mxu0 0
    %468 = vmatmul.mubr.bf16.gmra.mrb[0].mxu0 %v338
    %v469 = vpop.f32.mrb[0].mxu0
    %v470 = vadd.f32 %v231, %v469
    %v471 = vpop.f32.mrb[0].mxu0
    %v472 = vpop.f32.mrb[0].mxu0
    %v473 = vadd.f32 %v236, %v472
    %v474 = vpop.f32.mrb[0].mxu0
    %475 = vmatprep.mubr.bf16.mxu0 0
    %476 = vmatmul.mubr.bf16.gmra.mrb[0].mxu0 %v341
    %v477 = vpop.f32.mrb[0].mxu0
    %v478 = vadd.f32 %v241, %v477
    %v479 = vpop.f32.mrb[0].mxu0
    %v480 = vpop.f32.mrb[0].mxu0
    %v481 = vadd.f32 %v246, %v480
    %v482 = vpop.f32.mrb[0].mxu0
    %483 = vmatprep.mubr.bf16.mxu0 0
    %484 = vmatmul.mubr.bf16.gmra.mrb[0].mxu0 %v344
    %v485 = vpop.f32.mrb[0].mxu0
    %v486 = vadd.f32 %v251, %v485
    %v487 = vpop.f32.mrb[0].mxu0
    %v488 = vpop.f32.mrb[0].mxu0
    %v489 = vadd.f32 %v256, %v488
    %v490 = vpop.f32.mrb[0].mxu0
    %491 = vmatprep.mubr.bf16.mxu0 0
    %492 = vmatmul.mubr.bf16.gmra.mrb[0].mxu0 %v347
    %v493 = vpop.f32.mrb[0].mxu0
    %v494 = vadd.f32 %v261, %v493
    %v495 = vpop.f32.mrb[0].mxu0
    %v496 = vpop.f32.mrb[0].mxu0
    %v497 = vadd.f32 %v266, %v496
    %v498 = vpop.f32.mrb[0].mxu0
    %499 = vmatprep.mubr.bf16.mxu0 0
    %500 = vmatmul.mubr.bf16.gmra.mrb[0].mxu0 %v350
    %v501 = vpop.f32.mrb[0].mxu0
    %v502 = vadd.f32 %v271, %v501
    %v503 = vpop.f32.mrb[0].mxu0
    %v504 = vpop.f32.mrb[0].mxu0
    %v505 = vadd.f32 %v276, %v504
    %v506 = vpop.f32.mrb[0].mxu0
    %507 = vmatprep.mubr.bf16.mxu0 0
    %508 = vmatmul.mubr.bf16.gmra.mrb[0].mxu0 %v353
    %v509 = vpop.f32.mrb[0].mxu0
    %v510 = vadd.f32 %v281, %v509
    %v511 = vpop.f32.mrb[0].mxu0
    %v512 = vpop.f32.mrb[0].mxu0
    %v513 = vadd.f32 %v286, %v512
    %v514 = vpop.f32.mrb[0].mxu0
    %515 = vdwg.mxu0
    %v516 = vlaneseq
    %v517 = vand.u32 %v516, 127
    %v518 = vcvt.s32.f32 %v517
    %v519 = vmul.f32 %v518, 0.125
    %v520 = vfloor.f32 %v519
    %v521 = vmul.f32 %v520, 8.0
    %v522 = vsub.f32 %v518, %v521
    %v523 = vadd.f32 %v520, 0.5
    %v524 = vmul.f32 %v523, 0.25
    %v525 = vsub.f32 %v524, 1.0
    %v526 = vadd.f32 %v522, 0.5
    %v527 = vmul.f32 %v526, 0.25
    %v528 = vsub.f32 %v527, 1.0
    %v529 = vld [vmem:[%s3] sm:$0xff]
    %v530 = vld [vmem:[%s3 + $0x8] sm:$0xff]
    %v531 = vld [vmem:[%s3 + $0x10] sm:$0xff]
    %v532 = vld [vmem:[%s3 + $0x18] sm:$0xff]
    %v533 = vld [vmem:[%s3 + $0x20] sm:$0xff]
    %v534 = vld [vmem:[%s3 + $0x28] sm:$0xff]
    %v535 = vld [vmem:[%s3 + $0x30] sm:$0xff]
    %v536 = vld [vmem:[%s3 + $0x38] sm:$0xff]
    %v537 = vld [vmem:[%s3 + $0x40] sm:$0xff]
    %v538 = vld [vmem:[%s3 + $0x48] sm:$0xff]
    %v539 = vld [vmem:[%s3 + $0x50] sm:$0xff]
    %v540 = vld [vmem:[%s3 + $0x58] sm:$0xff]
    %v541 = vld [vmem:[%s3 + $0x60] sm:$0xff]
    %v542 = vld [vmem:[%s3 + $0x68] sm:$0xff]
    %v543 = vld [vmem:[%s3 + $0x70] sm:$0xff]
    %v544 = vld [vmem:[%s3 + $0x78] sm:$0xff]
    %546 = vset.pattern.permute.xlu0 0
    %547 = vperm.xlu0 %546, %v529
    %v548 = vpop.permute.xlu0 %547
    %551 = vset.pattern.permute.xlu0 0
    %552 = vperm.xlu0 %551, %v530
    %v553 = vpop.permute.xlu0 %552
    %556 = vset.pattern.permute.xlu0 0
    %557 = vperm.xlu0 %556, %v531
    %v558 = vpop.permute.xlu0 %557
    %561 = vset.pattern.permute.xlu0 0
    %562 = vperm.xlu0 %561, %v532
    %v563 = vpop.permute.xlu0 %562
    %566 = vset.pattern.permute.xlu0 0
    %567 = vperm.xlu0 %566, %v533
    %v568 = vpop.permute.xlu0 %567
    %571 = vset.pattern.permute.xlu0 0
    %572 = vperm.xlu0 %571, %v534
    %v573 = vpop.permute.xlu0 %572
    %576 = vset.pattern.permute.xlu0 0
    %577 = vperm.xlu0 %576, %v535
    %v578 = vpop.permute.xlu0 %577
    %581 = vset.pattern.permute.xlu0 0
    %582 = vperm.xlu0 %581, %v536
    %v583 = vpop.permute.xlu0 %582
    %586 = vset.pattern.permute.xlu0 0
    %587 = vperm.xlu0 %586, %v537
    %v588 = vpop.permute.xlu0 %587
    %591 = vset.pattern.permute.xlu0 0
    %592 = vperm.xlu0 %591, %v538
    %v593 = vpop.permute.xlu0 %592
    %596 = vset.pattern.permute.xlu0 0
    %597 = vperm.xlu0 %596, %v539
    %v598 = vpop.permute.xlu0 %597
    %601 = vset.pattern.permute.xlu0 0
    %602 = vperm.xlu0 %601, %v540
    %v603 = vpop.permute.xlu0 %602
    %606 = vset.pattern.permute.xlu0 0
    %607 = vperm.xlu0 %606, %v541
    %v608 = vpop.permute.xlu0 %607
    %611 = vset.pattern.permute.xlu0 0
    %612 = vperm.xlu0 %611, %v542
    %v613 = vpop.permute.xlu0 %612
    %616 = vset.pattern.permute.xlu0 0
    %617 = vperm.xlu0 %616, %v543
    %v618 = vpop.permute.xlu0 %617
    %621 = vset.pattern.permute.xlu0 0
    %622 = vperm.xlu0 %621, %v544
    %v623 = vpop.permute.xlu0 %622
    %v625 = vmul.f32 %v528, %v548
    %v626 = vmul.f32 %v528, %v553
    %v627 = vmul.f32 %v528, %v558
    %v628 = vmul.f32 %v528, %v563
    %v629 = vmul.f32 %v528, %v568
    %v630 = vmul.f32 %v528, %v573
    %v631 = vmul.f32 %v528, %v578
    %v632 = vmul.f32 %v528, %v583
    %v633 = vmul.f32 %v528, %v588
    %v634 = vmul.f32 %v528, %v593
    %v635 = vmul.f32 %v528, %v598
    %v636 = vmul.f32 %v528, %v603
    %v637 = vmul.f32 %v528, %v608
    %v638 = vmul.f32 %v528, %v613
    %v639 = vmul.f32 %v528, %v618
    %v640 = vmul.f32 %v528, %v623
    %641 = vset.pattern.permute.xlu0 1
    %642 = vperm.xlu0 %641, %v529
    %v643 = vpop.permute.xlu0 %642
    %645 = vset.pattern.permute.xlu0 1
    %646 = vperm.xlu0 %645, %v530
    %v647 = vpop.permute.xlu0 %646
    %649 = vset.pattern.permute.xlu0 1
    %650 = vperm.xlu0 %649, %v531
    %v651 = vpop.permute.xlu0 %650
    %653 = vset.pattern.permute.xlu0 1
    %654 = vperm.xlu0 %653, %v532
    %v655 = vpop.permute.xlu0 %654
    %657 = vset.pattern.permute.xlu0 1
    %658 = vperm.xlu0 %657, %v533
    %v659 = vpop.permute.xlu0 %658
    %661 = vset.pattern.permute.xlu0 1
    %662 = vperm.xlu0 %661, %v534
    %v663 = vpop.permute.xlu0 %662
    %665 = vset.pattern.permute.xlu0 1
    %666 = vperm.xlu0 %665, %v535
    %v667 = vpop.permute.xlu0 %666
    %669 = vset.pattern.permute.xlu0 1
    %670 = vperm.xlu0 %669, %v536
    %v671 = vpop.permute.xlu0 %670
    %673 = vset.pattern.permute.xlu0 1
    %674 = vperm.xlu0 %673, %v537
    %v675 = vpop.permute.xlu0 %674
    %677 = vset.pattern.permute.xlu0 1
    %678 = vperm.xlu0 %677, %v538
    %v679 = vpop.permute.xlu0 %678
    %681 = vset.pattern.permute.xlu0 1
    %682 = vperm.xlu0 %681, %v539
    %v683 = vpop.permute.xlu0 %682
    %685 = vset.pattern.permute.xlu0 1
    %686 = vperm.xlu0 %685, %v540
    %v687 = vpop.permute.xlu0 %686
    %689 = vset.pattern.permute.xlu0 1
    %690 = vperm.xlu0 %689, %v541
    %v691 = vpop.permute.xlu0 %690
    %693 = vset.pattern.permute.xlu0 1
    %694 = vperm.xlu0 %693, %v542
    %v695 = vpop.permute.xlu0 %694
    %697 = vset.pattern.permute.xlu0 1
    %698 = vperm.xlu0 %697, %v543
    %v699 = vpop.permute.xlu0 %698
    %701 = vset.pattern.permute.xlu0 1
    %702 = vperm.xlu0 %701, %v544
    %v703 = vpop.permute.xlu0 %702
    %v705 = vmul.f32 %v525, %v643
    %v706 = vmul.f32 %v525, %v647
    %v707 = vmul.f32 %v525, %v651
    %v708 = vmul.f32 %v525, %v655
    %v709 = vmul.f32 %v525, %v659
    %v710 = vmul.f32 %v525, %v663
    %v711 = vmul.f32 %v525, %v667
    %v712 = vmul.f32 %v525, %v671
    %v713 = vmul.f32 %v525, %v675
    %v714 = vmul.f32 %v525, %v679
    %v715 = vmul.f32 %v525, %v683
    %v716 = vmul.f32 %v525, %v687
    %v717 = vmul.f32 %v525, %v691
    %v718 = vmul.f32 %v525, %v695
    %v719 = vmul.f32 %v525, %v699
    %v720 = vmul.f32 %v525, %v703
    %v721 = vadd.f32 %v625, %v705
    %v722 = vadd.f32 %v626, %v706
    %v723 = vadd.f32 %v627, %v707
    %v724 = vadd.f32 %v628, %v708
    %v725 = vadd.f32 %v629, %v709
    %v726 = vadd.f32 %v630, %v710
    %v727 = vadd.f32 %v631, %v711
    %v728 = vadd.f32 %v632, %v712
    %v729 = vadd.f32 %v633, %v713
    %v730 = vadd.f32 %v634, %v714
    %v731 = vadd.f32 %v635, %v715
    %v732 = vadd.f32 %v636, %v716
    %v733 = vadd.f32 %v637, %v717
    %v734 = vadd.f32 %v638, %v718
    %v735 = vadd.f32 %v639, %v719
    %v736 = vadd.f32 %v640, %v720
    %v737 = vmul.f32 %v721, 6.2831855
    %v738 = vmul.f32 %v722, 6.2831855
    %v739 = vmul.f32 %v723, 6.2831855
    %v740 = vmul.f32 %v724, 6.2831855
    %v741 = vmul.f32 %v725, 6.2831855
    %v742 = vmul.f32 %v726, 6.2831855
    %v743 = vmul.f32 %v727, 6.2831855
    %v744 = vmul.f32 %v728, 6.2831855
    %v745 = vmul.f32 %v729, 6.2831855
    %v746 = vmul.f32 %v730, 6.2831855
    %v747 = vmul.f32 %v731, 6.2831855
    %v748 = vmul.f32 %v732, 6.2831855
    %v749 = vmul.f32 %v733, 6.2831855
    %v750 = vmul.f32 %v734, 6.2831855
    %v751 = vmul.f32 %v735, 6.2831855
    %v752 = vmul.f32 %v736, 6.2831855
    %v753 = vand.u32 2147483647, %v737
    %vm754 = vcmp.le.f32.partialorder %v753, 0.7853982
    %vm755 = vcmp.lt.s32.totalorder %v737, 0
    %v756 = vand.u32 %v737, 2139095040
    %v757 = vshrl.u32 %v756, 23
    %v758 = vsub.s32 %v757, 127
    %v759 = vand.u32 2147483647, %v737
    %v760 = vand.u32 %v759, 8388607
    %v761 = vor.u32 %v760, 8388608
    %v762 = vsub.s32 0, %v761
    %v763 = vadd.s32 %v758, 1
    %vm764 = vcmp.gt.s32.totalorder %v763, 0
    %v765 = vsel %vm764, %v763, 0
    %v766 = vshrl.u32 %v765, 5
    %v767 = vand.u32 %v765, 31
    %v768 = vsub.s32 32, %v767
    %v769 = vshrl.u32 683565275, %v768
    %v770 = vshll.u32 683565275, %v767
    %v771 = vshrl.u32 2475754826, %v768
    %v772 = vor.u32 %v770, %v771
    %v773 = vshll.u32 2475754826, %v767
    %v774 = vshrl.u32 2131351028, %v768
    %v775 = vor.u32 %v773, %v774
    %v776 = vshll.u32 2131351028, %v767
    %v777 = vshrl.u32 2102212464, %v768
    %v778 = vor.u32 %v776, %v777
    %v779 = vshll.u32 2102212464, %v767
    %v780 = vshrl.u32 920167782, %v768
    %v781 = vor.u32 %v779, %v780
    %v782 = vshll.u32 920167782, %v767
    %v783 = vshrl.u32 1326507024, %v768
    %v784 = vor.u32 %v782, %v783
    %vm785 = vcmp.lt.s32.totalorder %v766, 1
    %vm786 = vcmp.lt.s32.totalorder %v766, 2
    %vm787 = vcmp.lt.s32.totalorder %v766, 3
    %vm788 = vcmp.lt.s32.totalorder %v766, 4
    %v789 = vsel %vm785, %v769, %v772
    %v790 = vsel %vm788, %v778, 2102212464
    %v791 = vsel %vm787, %v775, %v790
    %v792 = vsel %vm786, %v789, %v791
    %v793 = vsel %vm785, %v772, %v775
    %v794 = vsel %vm788, %v781, 920167782
    %v795 = vsel %vm787, %v778, %v794
    %v796 = vsel %vm786, %v793, %v795
    %v797 = vsel %vm785, %v775, %v778
    %v798 = vsel %vm788, %v784, 1326507024
    %v799 = vsel %vm787, %v781, %v798
    %v800 = vsel %vm786, %v797, %v799
    %v801 = vshll.u32 %v761, 8
    %v802 = vmul.u32.u64.compose %v801, %v800
    %v803 = vextract.low.u32 %v802
    %v804 = vextract.high.u32 %v802
    %v805 = vmul.u32.u64.compose %v801, %v796
    %v806 = vextract.low.u32 %v805
    %v807 = vextract.high.u32 %v805
    %v808 = vmul.u32 %v801, %v792
    %v809 = vadd.s32 %v804, %v806
    %vm810 = vc.u32 %v804, %v806
    %v811 = vadd.s32 %v807, 1
    %v812 = vsel %vm810, %v811, %v807
    %v813 = vadd.s32 %v808, %v812
    %v814 = vadd.s32 %v813, 536870912
    %v815 = vshrl.u32 %v814, 30
    %v816 = vshll.u32 %v815, 30
    %v817 = vsub.s32 %v813, %v816
    %vm818 = vcmp.lt.s32.totalorder %v817, 0
    %v819 = vsub.s32 0, %v817
    %v820 = vsel %vm818, %v819, %v817
    %v821 = vclz %v820
    %v822 = vsub.s32 %v821, 2
    %vm823 = vcmp.gt.s32.totalorder 0, %v822
    %v824 = vsel %vm823, 0, %v822
    %v825 = vsub.s32 32, %v824
    %v826 = vshll.u32 %v817, %v824
    %v827 = vshrl.u32 %v809, %v825
    %v828 = vor.u32 %v826, %v827
    %v829 = vsub.s32 4294967266, %v824
    %v830 = vadd.s32 %v829, 127
    %v831 = vshll.u32 %v830, 23
    %v832 = vor.u32 4788187, %v831
    %v833 = vand.u32 2147483647, %v832
    %v835 = vcvt.s32.f32 %v828
    %v836 = vmul.f32 %v835, %v833
    %v837 = vxor.u32 %v836, 2147483648
    %v838 = vsel %vm755, %v837, %v836
    %v839 = vsub.s32 4, %v815
    %v840 = vsel %vm755, %v839, %v815
    %v841 = vsel %vm754, %v737, %v838
    %v842 = vsel %vm754, 0, %v840
    %v843 = vcosq.f32.pop %v841
    %v844 = vsinq.f32.pop %v841
    %vm845 = vweird.f32 %v737
    %v846 = vadd.s32 %v842, 3
    %v847 = vand.u32 %v846, 3
    %vm848 = vcmp.lt.s32.totalorder %v847, 2
    %vm849 = vcmp.eq.s32.totalorder %v847, 0
    %v850 = vxor.u32 %v844, 2147483648
    %v851 = vsel %vm849, %v843, %v850
    %vm852 = vcmp.eq.s32.totalorder %v847, 2
    %v853 = vxor.u32 %v843, 2147483648
    %v854 = vsel %vm852, %v853, %v844
    %v855 = vsel %vm848, %v851, %v854
    %v856 = vsel %vm845, nan, %v855
    %v857 = vand.u32 2147483647, %v738
    %vm858 = vcmp.le.f32.partialorder %v857, 0.7853982
    %vm859 = vcmp.lt.s32.totalorder %v738, 0
    %v860 = vand.u32 %v738, 2139095040
    %v861 = vshrl.u32 %v860, 23
    %v862 = vsub.s32 %v861, 127
    %v863 = vand.u32 2147483647, %v738
    %v864 = vand.u32 %v863, 8388607
    %v865 = vor.u32 %v864, 8388608
    %v866 = vsub.s32 0, %v865
    %v867 = vadd.s32 %v862, 1
    %vm868 = vcmp.gt.s32.totalorder %v867, 0
    %v869 = vsel %vm868, %v867, 0
    %v870 = vshrl.u32 %v869, 5
    %v871 = vand.u32 %v869, 31
    %v872 = vsub.s32 32, %v871
    %v873 = vshrl.u32 683565275, %v872
    %v874 = vshll.u32 683565275, %v871
    %v875 = vshrl.u32 2475754826, %v872
    %v876 = vor.u32 %v874, %v875
    %v877 = vshll.u32 2475754826, %v871
    %v878 = vshrl.u32 2131351028, %v872
    %v879 = vor.u32 %v877, %v878
    %v880 = vshll.u32 2131351028, %v871
    %v881 = vshrl.u32 2102212464, %v872
    %v882 = vor.u32 %v880, %v881
    %v883 = vshll.u32 2102212464, %v871
    %v884 = vshrl.u32 920167782, %v872
    %v885 = vor.u32 %v883, %v884
    %v886 = vshll.u32 920167782, %v871
    %v887 = vshrl.u32 1326507024, %v872
    %v888 = vor.u32 %v886, %v887
    %vm889 = vcmp.lt.s32.totalorder %v870, 1
    %vm890 = vcmp.lt.s32.totalorder %v870, 2
    %vm891 = vcmp.lt.s32.totalorder %v870, 3
    %vm892 = vcmp.lt.s32.totalorder %v870, 4
    %v893 = vsel %vm889, %v873, %v876
    %v894 = vsel %vm892, %v882, 2102212464
    %v895 = vsel %vm891, %v879, %v894
    %v896 = vsel %vm890, %v893, %v895
    %v897 = vsel %vm889, %v876, %v879
    %v898 = vsel %vm892, %v885, 920167782
    %v899 = vsel %vm891, %v882, %v898
    %v900 = vsel %vm890, %v897, %v899
    %v901 = vsel %vm889, %v879, %v882
    %v902 = vsel %vm892, %v888, 1326507024
    %v903 = vsel %vm891, %v885, %v902
    %v904 = vsel %vm890, %v901, %v903
    %v905 = vshll.u32 %v865, 8
    %v906 = vmul.u32.u64.compose %v905, %v904
    %v907 = vextract.low.u32 %v906
    %v908 = vextract.high.u32 %v906
    %v909 = vmul.u32.u64.compose %v905, %v900
    %v910 = vextract.low.u32 %v909
    %v911 = vextract.high.u32 %v909
    %v912 = vmul.u32 %v905, %v896
    %v913 = vadd.s32 %v908, %v910
    %vm914 = vc.u32 %v908, %v910
    %v915 = vadd.s32 %v911, 1
    %v916 = vsel %vm914, %v915, %v911
    %v917 = vadd.s32 %v912, %v916
    %v918 = vadd.s32 %v917, 536870912
    %v919 = vshrl.u32 %v918, 30
    %v920 = vshll.u32 %v919, 30
    %v921 = vsub.s32 %v917, %v920
    %vm922 = vcmp.lt.s32.totalorder %v921, 0
    %v923 = vsub.s32 0, %v921
    %v924 = vsel %vm922, %v923, %v921
    %v925 = vclz %v924
    %v926 = vsub.s32 %v925, 2
    %vm927 = vcmp.gt.s32.totalorder 0, %v926
    %v928 = vsel %vm927, 0, %v926
    %v929 = vsub.s32 32, %v928
    %v930 = vshll.u32 %v921, %v928
    %v931 = vshrl.u32 %v913, %v929
    %v932 = vor.u32 %v930, %v931
    %v933 = vsub.s32 4294967266, %v928
    %v934 = vadd.s32 %v933, 127
    %v935 = vshll.u32 %v934, 23
    %v936 = vor.u32 4788187, %v935
    %v937 = vand.u32 2147483647, %v936
    %v939 = vcvt.s32.f32 %v932
    %v940 = vmul.f32 %v939, %v937
    %v941 = vxor.u32 %v940, 2147483648
    %v942 = vsel %vm859, %v941, %v940
    %v943 = vsub.s32 4, %v919
    %v944 = vsel %vm859, %v943, %v919
    %v945 = vsel %vm858, %v738, %v942
    %v946 = vsel %vm858, 0, %v944
    %v947 = vcosq.f32.pop %v945
    %v948 = vsinq.f32.pop %v945
    %vm949 = vweird.f32 %v738
    %v950 = vadd.s32 %v946, 3
    %v951 = vand.u32 %v950, 3
    %vm952 = vcmp.lt.s32.totalorder %v951, 2
    %vm953 = vcmp.eq.s32.totalorder %v951, 0
    %v954 = vxor.u32 %v948, 2147483648
    %v955 = vsel %vm953, %v947, %v954
    %vm956 = vcmp.eq.s32.totalorder %v951, 2
    %v957 = vxor.u32 %v947, 2147483648
    %v958 = vsel %vm956, %v957, %v948
    %v959 = vsel %vm952, %v955, %v958
    %v960 = vsel %vm949, nan, %v959
    %v961 = vand.u32 2147483647, %v739
    %vm962 = vcmp.le.f32.partialorder %v961, 0.7853982
    %vm963 = vcmp.lt.s32.totalorder %v739, 0
    %v964 = vand.u32 %v739, 2139095040
    %v965 = vshrl.u32 %v964, 23
    %v966 = vsub.s32 %v965, 127
    %v967 = vand.u32 2147483647, %v739
    %v968 = vand.u32 %v967, 8388607
    %v969 = vor.u32 %v968, 8388608
    %v970 = vsub.s32 0, %v969
    %v971 = vadd.s32 %v966, 1
    %vm972 = vcmp.gt.s32.totalorder %v971, 0
    %v973 = vsel %vm972, %v971, 0
    %v974 = vshrl.u32 %v973, 5
    %v975 = vand.u32 %v973, 31
    %v976 = vsub.s32 32, %v975
    %v977 = vshrl.u32 683565275, %v976
    %v978 = vshll.u32 683565275, %v975
    %v979 = vshrl.u32 2475754826, %v976
    %v980 = vor.u32 %v978, %v979
    %v981 = vshll.u32 2475754826, %v975
    %v982 = vshrl.u32 2131351028, %v976
    %v983 = vor.u32 %v981, %v982
    %v984 = vshll.u32 2131351028, %v975
    %v985 = vshrl.u32 2102212464, %v976
    %v986 = vor.u32 %v984, %v985
    %v987 = vshll.u32 2102212464, %v975
    %v988 = vshrl.u32 920167782, %v976
    %v989 = vor.u32 %v987, %v988
    %v990 = vshll.u32 920167782, %v975
    %v991 = vshrl.u32 1326507024, %v976
    %v992 = vor.u32 %v990, %v991
    %vm993 = vcmp.lt.s32.totalorder %v974, 1
    %vm994 = vcmp.lt.s32.totalorder %v974, 2
    %vm995 = vcmp.lt.s32.totalorder %v974, 3
    %vm996 = vcmp.lt.s32.totalorder %v974, 4
    %v997 = vsel %vm993, %v977, %v980
    %v998 = vsel %vm996, %v986, 2102212464
    %v999 = vsel %vm995, %v983, %v998
    %v1000 = vsel %vm994, %v997, %v999
    %v1001 = vsel %vm993, %v980, %v983
    %v1002 = vsel %vm996, %v989, 920167782
    %v1003 = vsel %vm995, %v986, %v1002
    %v1004 = vsel %vm994, %v1001, %v1003
    %v1005 = vsel %vm993, %v983, %v986
    %v1006 = vsel %vm996, %v992, 1326507024
    %v1007 = vsel %vm995, %v989, %v1006
    %v1008 = vsel %vm994, %v1005, %v1007
    %v1009 = vshll.u32 %v969, 8
    %v1010 = vmul.u32.u64.compose %v1009, %v1008
    %v1011 = vextract.low.u32 %v1010
    %v1012 = vextract.high.u32 %v1010
    %v1013 = vmul.u32.u64.compose %v1009, %v1004
    %v1014 = vextract.low.u32 %v1013
    %v1015 = vextract.high.u32 %v1013
    %v1016 = vmul.u32 %v1009, %v1000
    %v1017 = vadd.s32 %v1012, %v1014
    %vm1018 = vc.u32 %v1012, %v1014
    %v1019 = vadd.s32 %v1015, 1
    %v1020 = vsel %vm1018, %v1019, %v1015
    %v1021 = vadd.s32 %v1016, %v1020
    %v1022 = vadd.s32 %v1021, 536870912
    %v1023 = vshrl.u32 %v1022, 30
    %v1024 = vshll.u32 %v1023, 30
    %v1025 = vsub.s32 %v1021, %v1024
    %vm1026 = vcmp.lt.s32.totalorder %v1025, 0
    %v1027 = vsub.s32 0, %v1025
    %v1028 = vsel %vm1026, %v1027, %v1025
    %v1029 = vclz %v1028
    %v1030 = vsub.s32 %v1029, 2
    %vm1031 = vcmp.gt.s32.totalorder 0, %v1030
    %v1032 = vsel %vm1031, 0, %v1030
    %v1033 = vsub.s32 32, %v1032
    %v1034 = vshll.u32 %v1025, %v1032
    %v1035 = vshrl.u32 %v1017, %v1033
    %v1036 = vor.u32 %v1034, %v1035
    %v1037 = vsub.s32 4294967266, %v1032
    %v1038 = vadd.s32 %v1037, 127
    %v1039 = vshll.u32 %v1038, 23
    %v1040 = vor.u32 4788187, %v1039
    %v1041 = vand.u32 2147483647, %v1040
    %v1043 = vcvt.s32.f32 %v1036
    %v1044 = vmul.f32 %v1043, %v1041
    %v1045 = vxor.u32 %v1044, 2147483648
    %v1046 = vsel %vm963, %v1045, %v1044
    %v1047 = vsub.s32 4, %v1023
    %v1048 = vsel %vm963, %v1047, %v1023
    %v1049 = vsel %vm962, %v739, %v1046
    %v1050 = vsel %vm962, 0, %v1048
    %v1051 = vcosq.f32.pop %v1049
    %v1052 = vsinq.f32.pop %v1049
    %vm1053 = vweird.f32 %v739
    %v1054 = vadd.s32 %v1050, 3
    %v1055 = vand.u32 %v1054, 3
    %vm1056 = vcmp.lt.s32.totalorder %v1055, 2
    %vm1057 = vcmp.eq.s32.totalorder %v1055, 0
    %v1058 = vxor.u32 %v1052, 2147483648
    %v1059 = vsel %vm1057, %v1051, %v1058
    %vm1060 = vcmp.eq.s32.totalorder %v1055, 2
    %v1061 = vxor.u32 %v1051, 2147483648
    %v1062 = vsel %vm1060, %v1061, %v1052
    %v1063 = vsel %vm1056, %v1059, %v1062
    %v1064 = vsel %vm1053, nan, %v1063
    %v1065 = vand.u32 2147483647, %v740
    %vm1066 = vcmp.le.f32.partialorder %v1065, 0.7853982
    %vm1067 = vcmp.lt.s32.totalorder %v740, 0
    %v1068 = vand.u32 %v740, 2139095040
    %v1069 = vshrl.u32 %v1068, 23
    %v1070 = vsub.s32 %v1069, 127
    %v1071 = vand.u32 2147483647, %v740
    %v1072 = vand.u32 %v1071, 8388607
    %v1073 = vor.u32 %v1072, 8388608
    %v1074 = vsub.s32 0, %v1073
    %v1075 = vadd.s32 %v1070, 1
    %vm1076 = vcmp.gt.s32.totalorder %v1075, 0
    %v1077 = vsel %vm1076, %v1075, 0
    %v1078 = vshrl.u32 %v1077, 5
    %v1079 = vand.u32 %v1077, 31
    %v1080 = vsub.s32 32, %v1079
    %v1081 = vshrl.u32 683565275, %v1080
    %v1082 = vshll.u32 683565275, %v1079
    %v1083 = vshrl.u32 2475754826, %v1080
    %v1084 = vor.u32 %v1082, %v1083
    %v1085 = vshll.u32 2475754826, %v1079
    %v1086 = vshrl.u32 2131351028, %v1080
    %v1087 = vor.u32 %v1085, %v1086
    %v1088 = vshll.u32 2131351028, %v1079
    %v1089 = vshrl.u32 2102212464, %v1080
    %v1090 = vor.u32 %v1088, %v1089
    %v1091 = vshll.u32 2102212464, %v1079
    %v1092 = vshrl.u32 920167782, %v1080
    %v1093 = vor.u32 %v1091, %v1092
    %v1094 = vshll.u32 920167782, %v1079
    %v1095 = vshrl.u32 1326507024, %v1080
    %v1096 = vor.u32 %v1094, %v1095
    %vm1097 = vcmp.lt.s32.totalorder %v1078, 1
    %vm1098 = vcmp.lt.s32.totalorder %v1078, 2
    %vm1099 = vcmp.lt.s32.totalorder %v1078, 3
    %vm1100 = vcmp.lt.s32.totalorder %v1078, 4
    %v1101 = vsel %vm1097, %v1081, %v1084
    %v1102 = vsel %vm1100, %v1090, 2102212464
    %v1103 = vsel %vm1099, %v1087, %v1102
    %v1104 = vsel %vm1098, %v1101, %v1103
    %v1105 = vsel %vm1097, %v1084, %v1087
    %v1106 = vsel %vm1100, %v1093, 920167782
    %v1107 = vsel %vm1099, %v1090, %v1106
    %v1108 = vsel %vm1098, %v1105, %v1107
    %v1109 = vsel %vm1097, %v1087, %v1090
    %v1110 = vsel %vm1100, %v1096, 1326507024
    %v1111 = vsel %vm1099, %v1093, %v1110
    %v1112 = vsel %vm1098, %v1109, %v1111
    %v1113 = vshll.u32 %v1073, 8
    %v1114 = vmul.u32.u64.compose %v1113, %v1112
    %v1115 = vextract.low.u32 %v1114
    %v1116 = vextract.high.u32 %v1114
    %v1117 = vmul.u32.u64.compose %v1113, %v1108
    %v1118 = vextract.low.u32 %v1117
    %v1119 = vextract.high.u32 %v1117
    %v1120 = vmul.u32 %v1113, %v1104
    %v1121 = vadd.s32 %v1116, %v1118
    %vm1122 = vc.u32 %v1116, %v1118
    %v1123 = vadd.s32 %v1119, 1
    %v1124 = vsel %vm1122, %v1123, %v1119
    %v1125 = vadd.s32 %v1120, %v1124
    %v1126 = vadd.s32 %v1125, 536870912
    %v1127 = vshrl.u32 %v1126, 30
    %v1128 = vshll.u32 %v1127, 30
    %v1129 = vsub.s32 %v1125, %v1128
    %vm1130 = vcmp.lt.s32.totalorder %v1129, 0
    %v1131 = vsub.s32 0, %v1129
    %v1132 = vsel %vm1130, %v1131, %v1129
    %v1133 = vclz %v1132
    %v1134 = vsub.s32 %v1133, 2
    %vm1135 = vcmp.gt.s32.totalorder 0, %v1134
    %v1136 = vsel %vm1135, 0, %v1134
    %v1137 = vsub.s32 32, %v1136
    %v1138 = vshll.u32 %v1129, %v1136
    %v1139 = vshrl.u32 %v1121, %v1137
    %v1140 = vor.u32 %v1138, %v1139
    %v1141 = vsub.s32 4294967266, %v1136
    %v1142 = vadd.s32 %v1141, 127
    %v1143 = vshll.u32 %v1142, 23
    %v1144 = vor.u32 4788187, %v1143
    %v1145 = vand.u32 2147483647, %v1144
    %v1147 = vcvt.s32.f32 %v1140
    %v1148 = vmul.f32 %v1147, %v1145
    %v1149 = vxor.u32 %v1148, 2147483648
    %v1150 = vsel %vm1067, %v1149, %v1148
    %v1151 = vsub.s32 4, %v1127
    %v1152 = vsel %vm1067, %v1151, %v1127
    %v1153 = vsel %vm1066, %v740, %v1150
    %v1154 = vsel %vm1066, 0, %v1152
    %v1155 = vcosq.f32.pop %v1153
    %v1156 = vsinq.f32.pop %v1153
    %vm1157 = vweird.f32 %v740
    %v1158 = vadd.s32 %v1154, 3
    %v1159 = vand.u32 %v1158, 3
    %vm1160 = vcmp.lt.s32.totalorder %v1159, 2
    %vm1161 = vcmp.eq.s32.totalorder %v1159, 0
    %v1162 = vxor.u32 %v1156, 2147483648
    %v1163 = vsel %vm1161, %v1155, %v1162
    %vm1164 = vcmp.eq.s32.totalorder %v1159, 2
    %v1165 = vxor.u32 %v1155, 2147483648
    %v1166 = vsel %vm1164, %v1165, %v1156
    %v1167 = vsel %vm1160, %v1163, %v1166
    %v1168 = vsel %vm1157, nan, %v1167
    %v1169 = vand.u32 2147483647, %v741
    %vm1170 = vcmp.le.f32.partialorder %v1169, 0.7853982
    %vm1171 = vcmp.lt.s32.totalorder %v741, 0
    %v1172 = vand.u32 %v741, 2139095040
    %v1173 = vshrl.u32 %v1172, 23
    %v1174 = vsub.s32 %v1173, 127
    %v1175 = vand.u32 2147483647, %v741
    %v1176 = vand.u32 %v1175, 8388607
    %v1177 = vor.u32 %v1176, 8388608
    %v1178 = vsub.s32 0, %v1177
    %v1179 = vadd.s32 %v1174, 1
    %vm1180 = vcmp.gt.s32.totalorder %v1179, 0
    %v1181 = vsel %vm1180, %v1179, 0
    %v1182 = vshrl.u32 %v1181, 5
    %v1183 = vand.u32 %v1181, 31
    %v1184 = vsub.s32 32, %v1183
    %v1185 = vshrl.u32 683565275, %v1184
    %v1186 = vshll.u32 683565275, %v1183
    %v1187 = vshrl.u32 2475754826, %v1184
    %v1188 = vor.u32 %v1186, %v1187
    %v1189 = vshll.u32 2475754826, %v1183
    %v1190 = vshrl.u32 2131351028, %v1184
    %v1191 = vor.u32 %v1189, %v1190
    %v1192 = vshll.u32 2131351028, %v1183
    %v1193 = vshrl.u32 2102212464, %v1184
    %v1194 = vor.u32 %v1192, %v1193
    %v1195 = vshll.u32 2102212464, %v1183
    %v1196 = vshrl.u32 920167782, %v1184
    %v1197 = vor.u32 %v1195, %v1196
    %v1198 = vshll.u32 920167782, %v1183
    %v1199 = vshrl.u32 1326507024, %v1184
    %v1200 = vor.u32 %v1198, %v1199
    %vm1201 = vcmp.lt.s32.totalorder %v1182, 1
    %vm1202 = vcmp.lt.s32.totalorder %v1182, 2
    %vm1203 = vcmp.lt.s32.totalorder %v1182, 3
    %vm1204 = vcmp.lt.s32.totalorder %v1182, 4
    %v1205 = vsel %vm1201, %v1185, %v1188
    %v1206 = vsel %vm1204, %v1194, 2102212464
    %v1207 = vsel %vm1203, %v1191, %v1206
    %v1208 = vsel %vm1202, %v1205, %v1207
    %v1209 = vsel %vm1201, %v1188, %v1191
    %v1210 = vsel %vm1204, %v1197, 920167782
    %v1211 = vsel %vm1203, %v1194, %v1210
    %v1212 = vsel %vm1202, %v1209, %v1211
    %v1213 = vsel %vm1201, %v1191, %v1194
    %v1214 = vsel %vm1204, %v1200, 1326507024
    %v1215 = vsel %vm1203, %v1197, %v1214
    %v1216 = vsel %vm1202, %v1213, %v1215
    %v1217 = vshll.u32 %v1177, 8
    %v1218 = vmul.u32.u64.compose %v1217, %v1216
    %v1219 = vextract.low.u32 %v1218
    %v1220 = vextract.high.u32 %v1218
    %v1221 = vmul.u32.u64.compose %v1217, %v1212
    %v1222 = vextract.low.u32 %v1221
    %v1223 = vextract.high.u32 %v1221
    %v1224 = vmul.u32 %v1217, %v1208
    %v1225 = vadd.s32 %v1220, %v1222
    %vm1226 = vc.u32 %v1220, %v1222
    %v1227 = vadd.s32 %v1223, 1
    %v1228 = vsel %vm1226, %v1227, %v1223
    %v1229 = vadd.s32 %v1224, %v1228
    %v1230 = vadd.s32 %v1229, 536870912
    %v1231 = vshrl.u32 %v1230, 30
    %v1232 = vshll.u32 %v1231, 30
    %v1233 = vsub.s32 %v1229, %v1232
    %vm1234 = vcmp.lt.s32.totalorder %v1233, 0
    %v1235 = vsub.s32 0, %v1233
    %v1236 = vsel %vm1234, %v1235, %v1233
    %v1237 = vclz %v1236
    %v1238 = vsub.s32 %v1237, 2
    %vm1239 = vcmp.gt.s32.totalorder 0, %v1238
    %v1240 = vsel %vm1239, 0, %v1238
    %v1241 = vsub.s32 32, %v1240
    %v1242 = vshll.u32 %v1233, %v1240
    %v1243 = vshrl.u32 %v1225, %v1241
    %v1244 = vor.u32 %v1242, %v1243
    %v1245 = vsub.s32 4294967266, %v1240
    %v1246 = vadd.s32 %v1245, 127
    %v1247 = vshll.u32 %v1246, 23
    %v1248 = vor.u32 4788187, %v1247
    %v1249 = vand.u32 2147483647, %v1248
    %v1251 = vcvt.s32.f32 %v1244
    %v1252 = vmul.f32 %v1251, %v1249
    %v1253 = vxor.u32 %v1252, 2147483648
    %v1254 = vsel %vm1171, %v1253, %v1252
    %v1255 = vsub.s32 4, %v1231
    %v1256 = vsel %vm1171, %v1255, %v1231
    %v1257 = vsel %vm1170, %v741, %v1254
    %v1258 = vsel %vm1170, 0, %v1256
    %v1259 = vcosq.f32.pop %v1257
    %v1260 = vsinq.f32.pop %v1257
    %vm1261 = vweird.f32 %v741
    %v1262 = vadd.s32 %v1258, 3
    %v1263 = vand.u32 %v1262, 3
    %vm1264 = vcmp.lt.s32.totalorder %v1263, 2
    %vm1265 = vcmp.eq.s32.totalorder %v1263, 0
    %v1266 = vxor.u32 %v1260, 2147483648
    %v1267 = vsel %vm1265, %v1259, %v1266
    %vm1268 = vcmp.eq.s32.totalorder %v1263, 2
    %v1269 = vxor.u32 %v1259, 2147483648
    %v1270 = vsel %vm1268, %v1269, %v1260
    %v1271 = vsel %vm1264, %v1267, %v1270
    %v1272 = vsel %vm1261, nan, %v1271
    %v1273 = vand.u32 2147483647, %v742
    %vm1274 = vcmp.le.f32.partialorder %v1273, 0.7853982
    %vm1275 = vcmp.lt.s32.totalorder %v742, 0
    %v1276 = vand.u32 %v742, 2139095040
    %v1277 = vshrl.u32 %v1276, 23
    %v1278 = vsub.s32 %v1277, 127
    %v1279 = vand.u32 2147483647, %v742
    %v1280 = vand.u32 %v1279, 8388607
    %v1281 = vor.u32 %v1280, 8388608
    %v1282 = vsub.s32 0, %v1281
    %v1283 = vadd.s32 %v1278, 1
    %vm1284 = vcmp.gt.s32.totalorder %v1283, 0
    %v1285 = vsel %vm1284, %v1283, 0
    %v1286 = vshrl.u32 %v1285, 5
    %v1287 = vand.u32 %v1285, 31
    %v1288 = vsub.s32 32, %v1287
    %v1289 = vshrl.u32 683565275, %v1288
    %v1290 = vshll.u32 683565275, %v1287
    %v1291 = vshrl.u32 2475754826, %v1288
    %v1292 = vor.u32 %v1290, %v1291
    %v1293 = vshll.u32 2475754826, %v1287
    %v1294 = vshrl.u32 2131351028, %v1288
    %v1295 = vor.u32 %v1293, %v1294
    %v1296 = vshll.u32 2131351028, %v1287
    %v1297 = vshrl.u32 2102212464, %v1288
    %v1298 = vor.u32 %v1296, %v1297
    %v1299 = vshll.u32 2102212464, %v1287
    %v1300 = vshrl.u32 920167782, %v1288
    %v1301 = vor.u32 %v1299, %v1300
    %v1302 = vshll.u32 920167782, %v1287
    %v1303 = vshrl.u32 1326507024, %v1288
    %v1304 = vor.u32 %v1302, %v1303
    %vm1305 = vcmp.lt.s32.totalorder %v1286, 1
    %vm1306 = vcmp.lt.s32.totalorder %v1286, 2
    %vm1307 = vcmp.lt.s32.totalorder %v1286, 3
    %vm1308 = vcmp.lt.s32.totalorder %v1286, 4
    %v1309 = vsel %vm1305, %v1289, %v1292
    %v1310 = vsel %vm1308, %v1298, 2102212464
    %v1311 = vsel %vm1307, %v1295, %v1310
    %v1312 = vsel %vm1306, %v1309, %v1311
    %v1313 = vsel %vm1305, %v1292, %v1295
    %v1314 = vsel %vm1308, %v1301, 920167782
    %v1315 = vsel %vm1307, %v1298, %v1314
    %v1316 = vsel %vm1306, %v1313, %v1315
    %v1317 = vsel %vm1305, %v1295, %v1298
    %v1318 = vsel %vm1308, %v1304, 1326507024
    %v1319 = vsel %vm1307, %v1301, %v1318
    %v1320 = vsel %vm1306, %v1317, %v1319
    %v1321 = vshll.u32 %v1281, 8
    %v1322 = vmul.u32.u64.compose %v1321, %v1320
    %v1323 = vextract.low.u32 %v1322
    %v1324 = vextract.high.u32 %v1322
    %v1325 = vmul.u32.u64.compose %v1321, %v1316
    %v1326 = vextract.low.u32 %v1325
    %v1327 = vextract.high.u32 %v1325
    %v1328 = vmul.u32 %v1321, %v1312
    %v1329 = vadd.s32 %v1324, %v1326
    %vm1330 = vc.u32 %v1324, %v1326
    %v1331 = vadd.s32 %v1327, 1
    %v1332 = vsel %vm1330, %v1331, %v1327
    %v1333 = vadd.s32 %v1328, %v1332
    %v1334 = vadd.s32 %v1333, 536870912
    %v1335 = vshrl.u32 %v1334, 30
    %v1336 = vshll.u32 %v1335, 30
    %v1337 = vsub.s32 %v1333, %v1336
    %vm1338 = vcmp.lt.s32.totalorder %v1337, 0
    %v1339 = vsub.s32 0, %v1337
    %v1340 = vsel %vm1338, %v1339, %v1337
    %v1341 = vclz %v1340
    %v1342 = vsub.s32 %v1341, 2
    %vm1343 = vcmp.gt.s32.totalorder 0, %v1342
    %v1344 = vsel %vm1343, 0, %v1342
    %v1345 = vsub.s32 32, %v1344
    %v1346 = vshll.u32 %v1337, %v1344
    %v1347 = vshrl.u32 %v1329, %v1345
    %v1348 = vor.u32 %v1346, %v1347
    %v1349 = vsub.s32 4294967266, %v1344
    %v1350 = vadd.s32 %v1349, 127
    %v1351 = vshll.u32 %v1350, 23
    %v1352 = vor.u32 4788187, %v1351
    %v1353 = vand.u32 2147483647, %v1352
    %v1355 = vcvt.s32.f32 %v1348
    %v1356 = vmul.f32 %v1355, %v1353
    %v1357 = vxor.u32 %v1356, 2147483648
    %v1358 = vsel %vm1275, %v1357, %v1356
    %v1359 = vsub.s32 4, %v1335
    %v1360 = vsel %vm1275, %v1359, %v1335
    %v1361 = vsel %vm1274, %v742, %v1358
    %v1362 = vsel %vm1274, 0, %v1360
    %v1363 = vcosq.f32.pop %v1361
    %v1364 = vsinq.f32.pop %v1361
    %vm1365 = vweird.f32 %v742
    %v1366 = vadd.s32 %v1362, 3
    %v1367 = vand.u32 %v1366, 3
    %vm1368 = vcmp.lt.s32.totalorder %v1367, 2
    %vm1369 = vcmp.eq.s32.totalorder %v1367, 0
    %v1370 = vxor.u32 %v1364, 2147483648
    %v1371 = vsel %vm1369, %v1363, %v1370
    %vm1372 = vcmp.eq.s32.totalorder %v1367, 2
    %v1373 = vxor.u32 %v1363, 2147483648
    %v1374 = vsel %vm1372, %v1373, %v1364
    %v1375 = vsel %vm1368, %v1371, %v1374
    %v1376 = vsel %vm1365, nan, %v1375
    %v1377 = vand.u32 2147483647, %v743
    %vm1378 = vcmp.le.f32.partialorder %v1377, 0.7853982
    %vm1379 = vcmp.lt.s32.totalorder %v743, 0
    %v1380 = vand.u32 %v743, 2139095040
    %v1381 = vshrl.u32 %v1380, 23
    %v1382 = vsub.s32 %v1381, 127
    %v1383 = vand.u32 2147483647, %v743
    %v1384 = vand.u32 %v1383, 8388607
    %v1385 = vor.u32 %v1384, 8388608
    %v1386 = vsub.s32 0, %v1385
    %v1387 = vadd.s32 %v1382, 1
    %vm1388 = vcmp.gt.s32.totalorder %v1387, 0
    %v1389 = vsel %vm1388, %v1387, 0
    %v1390 = vshrl.u32 %v1389, 5
    %v1391 = vand.u32 %v1389, 31
    %v1392 = vsub.s32 32, %v1391
    %v1393 = vshrl.u32 683565275, %v1392
    %v1394 = vshll.u32 683565275, %v1391
    %v1395 = vshrl.u32 2475754826, %v1392
    %v1396 = vor.u32 %v1394, %v1395
    %v1397 = vshll.u32 2475754826, %v1391
    %v1398 = vshrl.u32 2131351028, %v1392
    %v1399 = vor.u32 %v1397, %v1398
    %v1400 = vshll.u32 2131351028, %v1391
    %v1401 = vshrl.u32 2102212464, %v1392
    %v1402 = vor.u32 %v1400, %v1401
    %v1403 = vshll.u32 2102212464, %v1391
    %v1404 = vshrl.u32 920167782, %v1392
    %v1405 = vor.u32 %v1403, %v1404
    %v1406 = vshll.u32 920167782, %v1391
    %v1407 = vshrl.u32 1326507024, %v1392
    %v1408 = vor.u32 %v1406, %v1407
    %vm1409 = vcmp.lt.s32.totalorder %v1390, 1
    %vm1410 = vcmp.lt.s32.totalorder %v1390, 2
    %vm1411 = vcmp.lt.s32.totalorder %v1390, 3
    %vm1412 = vcmp.lt.s32.totalorder %v1390, 4
    %v1413 = vsel %vm1409, %v1393, %v1396
    %v1414 = vsel %vm1412, %v1402, 2102212464
    %v1415 = vsel %vm1411, %v1399, %v1414
    %v1416 = vsel %vm1410, %v1413, %v1415
    %v1417 = vsel %vm1409, %v1396, %v1399
    %v1418 = vsel %vm1412, %v1405, 920167782
    %v1419 = vsel %vm1411, %v1402, %v1418
    %v1420 = vsel %vm1410, %v1417, %v1419
    %v1421 = vsel %vm1409, %v1399, %v1402
    %v1422 = vsel %vm1412, %v1408, 1326507024
    %v1423 = vsel %vm1411, %v1405, %v1422
    %v1424 = vsel %vm1410, %v1421, %v1423
    %v1425 = vshll.u32 %v1385, 8
    %v1426 = vmul.u32.u64.compose %v1425, %v1424
    %v1427 = vextract.low.u32 %v1426
    %v1428 = vextract.high.u32 %v1426
    %v1429 = vmul.u32.u64.compose %v1425, %v1420
    %v1430 = vextract.low.u32 %v1429
    %v1431 = vextract.high.u32 %v1429
    %v1432 = vmul.u32 %v1425, %v1416
    %v1433 = vadd.s32 %v1428, %v1430
    %vm1434 = vc.u32 %v1428, %v1430
    %v1435 = vadd.s32 %v1431, 1
    %v1436 = vsel %vm1434, %v1435, %v1431
    %v1437 = vadd.s32 %v1432, %v1436
    %v1438 = vadd.s32 %v1437, 536870912
    %v1439 = vshrl.u32 %v1438, 30
    %v1440 = vshll.u32 %v1439, 30
    %v1441 = vsub.s32 %v1437, %v1440
    %vm1442 = vcmp.lt.s32.totalorder %v1441, 0
    %v1443 = vsub.s32 0, %v1441
    %v1444 = vsel %vm1442, %v1443, %v1441
    %v1445 = vclz %v1444
    %v1446 = vsub.s32 %v1445, 2
    %vm1447 = vcmp.gt.s32.totalorder 0, %v1446
    %v1448 = vsel %vm1447, 0, %v1446
    %v1449 = vsub.s32 32, %v1448
    %v1450 = vshll.u32 %v1441, %v1448
    %v1451 = vshrl.u32 %v1433, %v1449
    %v1452 = vor.u32 %v1450, %v1451
    %v1453 = vsub.s32 4294967266, %v1448
    %v1454 = vadd.s32 %v1453, 127
    %v1455 = vshll.u32 %v1454, 23
    %v1456 = vor.u32 4788187, %v1455
    %v1457 = vand.u32 2147483647, %v1456
    %v1459 = vcvt.s32.f32 %v1452
    %v1460 = vmul.f32 %v1459, %v1457
    %v1461 = vxor.u32 %v1460, 2147483648
    %v1462 = vsel %vm1379, %v1461, %v1460
    %v1463 = vsub.s32 4, %v1439
    %v1464 = vsel %vm1379, %v1463, %v1439
    %v1465 = vsel %vm1378, %v743, %v1462
    %v1466 = vsel %vm1378, 0, %v1464
    %v1467 = vcosq.f32.pop %v1465
    %v1468 = vsinq.f32.pop %v1465
    %vm1469 = vweird.f32 %v743
    %v1470 = vadd.s32 %v1466, 3
    %v1471 = vand.u32 %v1470, 3
    %vm1472 = vcmp.lt.s32.totalorder %v1471, 2
    %vm1473 = vcmp.eq.s32.totalorder %v1471, 0
    %v1474 = vxor.u32 %v1468, 2147483648
    %v1475 = vsel %vm1473, %v1467, %v1474
    %vm1476 = vcmp.eq.s32.totalorder %v1471, 2
    %v1477 = vxor.u32 %v1467, 2147483648
    %v1478 = vsel %vm1476, %v1477, %v1468
    %v1479 = vsel %vm1472, %v1475, %v1478
    %v1480 = vsel %vm1469, nan, %v1479
    %v1481 = vand.u32 2147483647, %v744
    %vm1482 = vcmp.le.f32.partialorder %v1481, 0.7853982
    %vm1483 = vcmp.lt.s32.totalorder %v744, 0
    %v1484 = vand.u32 %v744, 2139095040
    %v1485 = vshrl.u32 %v1484, 23
    %v1486 = vsub.s32 %v1485, 127
    %v1487 = vand.u32 2147483647, %v744
    %v1488 = vand.u32 %v1487, 8388607
    %v1489 = vor.u32 %v1488, 8388608
    %v1490 = vsub.s32 0, %v1489
    %v1491 = vadd.s32 %v1486, 1
    %vm1492 = vcmp.gt.s32.totalorder %v1491, 0
    %v1493 = vsel %vm1492, %v1491, 0
    %v1494 = vshrl.u32 %v1493, 5
    %v1495 = vand.u32 %v1493, 31
    %v1496 = vsub.s32 32, %v1495
    %v1497 = vshrl.u32 683565275, %v1496
    %v1498 = vshll.u32 683565275, %v1495
    %v1499 = vshrl.u32 2475754826, %v1496
    %v1500 = vor.u32 %v1498, %v1499
    %v1501 = vshll.u32 2475754826, %v1495
    %v1502 = vshrl.u32 2131351028, %v1496
    %v1503 = vor.u32 %v1501, %v1502
    %v1504 = vshll.u32 2131351028, %v1495
    %v1505 = vshrl.u32 2102212464, %v1496
    %v1506 = vor.u32 %v1504, %v1505
    %v1507 = vshll.u32 2102212464, %v1495
    %v1508 = vshrl.u32 920167782, %v1496
    %v1509 = vor.u32 %v1507, %v1508
    %v1510 = vshll.u32 920167782, %v1495
    %v1511 = vshrl.u32 1326507024, %v1496
    %v1512 = vor.u32 %v1510, %v1511
    %vm1513 = vcmp.lt.s32.totalorder %v1494, 1
    %vm1514 = vcmp.lt.s32.totalorder %v1494, 2
    %vm1515 = vcmp.lt.s32.totalorder %v1494, 3
    %vm1516 = vcmp.lt.s32.totalorder %v1494, 4
    %v1517 = vsel %vm1513, %v1497, %v1500
    %v1518 = vsel %vm1516, %v1506, 2102212464
    %v1519 = vsel %vm1515, %v1503, %v1518
    %v1520 = vsel %vm1514, %v1517, %v1519
    %v1521 = vsel %vm1513, %v1500, %v1503
    %v1522 = vsel %vm1516, %v1509, 920167782
    %v1523 = vsel %vm1515, %v1506, %v1522
    %v1524 = vsel %vm1514, %v1521, %v1523
    %v1525 = vsel %vm1513, %v1503, %v1506
    %v1526 = vsel %vm1516, %v1512, 1326507024
    %v1527 = vsel %vm1515, %v1509, %v1526
    %v1528 = vsel %vm1514, %v1525, %v1527
    %v1529 = vshll.u32 %v1489, 8
    %v1530 = vmul.u32.u64.compose %v1529, %v1528
    %v1531 = vextract.low.u32 %v1530
    %v1532 = vextract.high.u32 %v1530
    %v1533 = vmul.u32.u64.compose %v1529, %v1524
    %v1534 = vextract.low.u32 %v1533
    %v1535 = vextract.high.u32 %v1533
    %v1536 = vmul.u32 %v1529, %v1520
    %v1537 = vadd.s32 %v1532, %v1534
    %vm1538 = vc.u32 %v1532, %v1534
    %v1539 = vadd.s32 %v1535, 1
    %v1540 = vsel %vm1538, %v1539, %v1535
    %v1541 = vadd.s32 %v1536, %v1540
    %v1542 = vadd.s32 %v1541, 536870912
    %v1543 = vshrl.u32 %v1542, 30
    %v1544 = vshll.u32 %v1543, 30
    %v1545 = vsub.s32 %v1541, %v1544
    %vm1546 = vcmp.lt.s32.totalorder %v1545, 0
    %v1547 = vsub.s32 0, %v1545
    %v1548 = vsel %vm1546, %v1547, %v1545
    %v1549 = vclz %v1548
    %v1550 = vsub.s32 %v1549, 2
    %vm1551 = vcmp.gt.s32.totalorder 0, %v1550
    %v1552 = vsel %vm1551, 0, %v1550
    %v1553 = vsub.s32 32, %v1552
    %v1554 = vshll.u32 %v1545, %v1552
    %v1555 = vshrl.u32 %v1537, %v1553
    %v1556 = vor.u32 %v1554, %v1555
    %v1557 = vsub.s32 4294967266, %v1552
    %v1558 = vadd.s32 %v1557, 127
    %v1559 = vshll.u32 %v1558, 23
    %v1560 = vor.u32 4788187, %v1559
    %v1561 = vand.u32 2147483647, %v1560
    %v1563 = vcvt.s32.f32 %v1556
    %v1564 = vmul.f32 %v1563, %v1561
    %v1565 = vxor.u32 %v1564, 2147483648
    %v1566 = vsel %vm1483, %v1565, %v1564
    %v1567 = vsub.s32 4, %v1543
    %v1568 = vsel %vm1483, %v1567, %v1543
    %v1569 = vsel %vm1482, %v744, %v1566
    %v1570 = vsel %vm1482, 0, %v1568
    %v1571 = vcosq.f32.pop %v1569
    %v1572 = vsinq.f32.pop %v1569
    %vm1573 = vweird.f32 %v744
    %v1574 = vadd.s32 %v1570, 3
    %v1575 = vand.u32 %v1574, 3
    %vm1576 = vcmp.lt.s32.totalorder %v1575, 2
    %vm1577 = vcmp.eq.s32.totalorder %v1575, 0
    %v1578 = vxor.u32 %v1572, 2147483648
    %v1579 = vsel %vm1577, %v1571, %v1578
    %vm1580 = vcmp.eq.s32.totalorder %v1575, 2
    %v1581 = vxor.u32 %v1571, 2147483648
    %v1582 = vsel %vm1580, %v1581, %v1572
    %v1583 = vsel %vm1576, %v1579, %v1582
    %v1584 = vsel %vm1573, nan, %v1583
    %v1585 = vand.u32 2147483647, %v745
    %vm1586 = vcmp.le.f32.partialorder %v1585, 0.7853982
    %vm1587 = vcmp.lt.s32.totalorder %v745, 0
    %v1588 = vand.u32 %v745, 2139095040
    %v1589 = vshrl.u32 %v1588, 23
    %v1590 = vsub.s32 %v1589, 127
    %v1591 = vand.u32 2147483647, %v745
    %v1592 = vand.u32 %v1591, 8388607
    %v1593 = vor.u32 %v1592, 8388608
    %v1594 = vsub.s32 0, %v1593
    %v1595 = vadd.s32 %v1590, 1
    %vm1596 = vcmp.gt.s32.totalorder %v1595, 0
    %v1597 = vsel %vm1596, %v1595, 0
    %v1598 = vshrl.u32 %v1597, 5
    %v1599 = vand.u32 %v1597, 31
    %v1600 = vsub.s32 32, %v1599
    %v1601 = vshrl.u32 683565275, %v1600
    %v1602 = vshll.u32 683565275, %v1599
    %v1603 = vshrl.u32 2475754826, %v1600
    %v1604 = vor.u32 %v1602, %v1603
    %v1605 = vshll.u32 2475754826, %v1599
    %v1606 = vshrl.u32 2131351028, %v1600
    %v1607 = vor.u32 %v1605, %v1606
    %v1608 = vshll.u32 2131351028, %v1599
    %v1609 = vshrl.u32 2102212464, %v1600
    %v1610 = vor.u32 %v1608, %v1609
    %v1611 = vshll.u32 2102212464, %v1599
    %v1612 = vshrl.u32 920167782, %v1600
    %v1613 = vor.u32 %v1611, %v1612
    %v1614 = vshll.u32 920167782, %v1599
    %v1615 = vshrl.u32 1326507024, %v1600
    %v1616 = vor.u32 %v1614, %v1615
    %vm1617 = vcmp.lt.s32.totalorder %v1598, 1
    %vm1618 = vcmp.lt.s32.totalorder %v1598, 2
    %vm1619 = vcmp.lt.s32.totalorder %v1598, 3
    %vm1620 = vcmp.lt.s32.totalorder %v1598, 4
    %v1621 = vsel %vm1617, %v1601, %v1604
    %v1622 = vsel %vm1620, %v1610, 2102212464
    %v1623 = vsel %vm1619, %v1607, %v1622
    %v1624 = vsel %vm1618, %v1621, %v1623
    %v1625 = vsel %vm1617, %v1604, %v1607
    %v1626 = vsel %vm1620, %v1613, 920167782
    %v1627 = vsel %vm1619, %v1610, %v1626
    %v1628 = vsel %vm1618, %v1625, %v1627
    %v1629 = vsel %vm1617, %v1607, %v1610
    %v1630 = vsel %vm1620, %v1616, 1326507024
    %v1631 = vsel %vm1619, %v1613, %v1630
    %v1632 = vsel %vm1618, %v1629, %v1631
    %v1633 = vshll.u32 %v1593, 8
    %v1634 = vmul.u32.u64.compose %v1633, %v1632
    %v1635 = vextract.low.u32 %v1634
    %v1636 = vextract.high.u32 %v1634
    %v1637 = vmul.u32.u64.compose %v1633, %v1628
    %v1638 = vextract.low.u32 %v1637
    %v1639 = vextract.high.u32 %v1637
    %v1640 = vmul.u32 %v1633, %v1624
    %v1641 = vadd.s32 %v1636, %v1638
    %vm1642 = vc.u32 %v1636, %v1638
    %v1643 = vadd.s32 %v1639, 1
    %v1644 = vsel %vm1642, %v1643, %v1639
    %v1645 = vadd.s32 %v1640, %v1644
    %v1646 = vadd.s32 %v1645, 536870912
    %v1647 = vshrl.u32 %v1646, 30
    %v1648 = vshll.u32 %v1647, 30
    %v1649 = vsub.s32 %v1645, %v1648
    %vm1650 = vcmp.lt.s32.totalorder %v1649, 0
    %v1651 = vsub.s32 0, %v1649
    %v1652 = vsel %vm1650, %v1651, %v1649
    %v1653 = vclz %v1652
    %v1654 = vsub.s32 %v1653, 2
    %vm1655 = vcmp.gt.s32.totalorder 0, %v1654
    %v1656 = vsel %vm1655, 0, %v1654
    %v1657 = vsub.s32 32, %v1656
    %v1658 = vshll.u32 %v1649, %v1656
    %v1659 = vshrl.u32 %v1641, %v1657
    %v1660 = vor.u32 %v1658, %v1659
    %v1661 = vsub.s32 4294967266, %v1656
    %v1662 = vadd.s32 %v1661, 127
    %v1663 = vshll.u32 %v1662, 23
    %v1664 = vor.u32 4788187, %v1663
    %v1665 = vand.u32 2147483647, %v1664
    %v1667 = vcvt.s32.f32 %v1660
    %v1668 = vmul.f32 %v1667, %v1665
    %v1669 = vxor.u32 %v1668, 2147483648
    %v1670 = vsel %vm1587, %v1669, %v1668
    %v1671 = vsub.s32 4, %v1647
    %v1672 = vsel %vm1587, %v1671, %v1647
    %v1673 = vsel %vm1586, %v745, %v1670
    %v1674 = vsel %vm1586, 0, %v1672
    %v1675 = vcosq.f32.pop %v1673
    %v1676 = vsinq.f32.pop %v1673
    %vm1677 = vweird.f32 %v745
    %v1678 = vadd.s32 %v1674, 3
    %v1679 = vand.u32 %v1678, 3
    %vm1680 = vcmp.lt.s32.totalorder %v1679, 2
    %vm1681 = vcmp.eq.s32.totalorder %v1679, 0
    %v1682 = vxor.u32 %v1676, 2147483648
    %v1683 = vsel %vm1681, %v1675, %v1682
    %vm1684 = vcmp.eq.s32.totalorder %v1679, 2
    %v1685 = vxor.u32 %v1675, 2147483648
    %v1686 = vsel %vm1684, %v1685, %v1676
    %v1687 = vsel %vm1680, %v1683, %v1686
    %v1688 = vsel %vm1677, nan, %v1687
    %v1689 = vand.u32 2147483647, %v746
    %vm1690 = vcmp.le.f32.partialorder %v1689, 0.7853982
    %vm1691 = vcmp.lt.s32.totalorder %v746, 0
    %v1692 = vand.u32 %v746, 2139095040
    %v1693 = vshrl.u32 %v1692, 23
    %v1694 = vsub.s32 %v1693, 127
    %v1695 = vand.u32 2147483647, %v746
    %v1696 = vand.u32 %v1695, 8388607
    %v1697 = vor.u32 %v1696, 8388608
    %v1698 = vsub.s32 0, %v1697
    %v1699 = vadd.s32 %v1694, 1
    %vm1700 = vcmp.gt.s32.totalorder %v1699, 0
    %v1701 = vsel %vm1700, %v1699, 0
    %v1702 = vshrl.u32 %v1701, 5
    %v1703 = vand.u32 %v1701, 31
    %v1704 = vsub.s32 32, %v1703
    %v1705 = vshrl.u32 683565275, %v1704
    %v1706 = vshll.u32 683565275, %v1703
    %v1707 = vshrl.u32 2475754826, %v1704
    %v1708 = vor.u32 %v1706, %v1707
    %v1709 = vshll.u32 2475754826, %v1703
    %v1710 = vshrl.u32 2131351028, %v1704
    %v1711 = vor.u32 %v1709, %v1710
    %v1712 = vshll.u32 2131351028, %v1703
    %v1713 = vshrl.u32 2102212464, %v1704
    %v1714 = vor.u32 %v1712, %v1713
    %v1715 = vshll.u32 2102212464, %v1703
    %v1716 = vshrl.u32 920167782, %v1704
    %v1717 = vor.u32 %v1715, %v1716
    %v1718 = vshll.u32 920167782, %v1703
    %v1719 = vshrl.u32 1326507024, %v1704
    %v1720 = vor.u32 %v1718, %v1719
    %vm1721 = vcmp.lt.s32.totalorder %v1702, 1
    %vm1722 = vcmp.lt.s32.totalorder %v1702, 2
    %vm1723 = vcmp.lt.s32.totalorder %v1702, 3
    %vm1724 = vcmp.lt.s32.totalorder %v1702, 4
    %v1725 = vsel %vm1721, %v1705, %v1708
    %v1726 = vsel %vm1724, %v1714, 2102212464
    %v1727 = vsel %vm1723, %v1711, %v1726
    %v1728 = vsel %vm1722, %v1725, %v1727
    %v1729 = vsel %vm1721, %v1708, %v1711
    %v1730 = vsel %vm1724, %v1717, 920167782
    %v1731 = vsel %vm1723, %v1714, %v1730
    %v1732 = vsel %vm1722, %v1729, %v1731
    %v1733 = vsel %vm1721, %v1711, %v1714
    %v1734 = vsel %vm1724, %v1720, 1326507024
    %v1735 = vsel %vm1723, %v1717, %v1734
    %v1736 = vsel %vm1722, %v1733, %v1735
    %v1737 = vshll.u32 %v1697, 8
    %v1738 = vmul.u32.u64.compose %v1737, %v1736
    %v1739 = vextract.low.u32 %v1738
    %v1740 = vextract.high.u32 %v1738
    %v1741 = vmul.u32.u64.compose %v1737, %v1732
    %v1742 = vextract.low.u32 %v1741
    %v1743 = vextract.high.u32 %v1741
    %v1744 = vmul.u32 %v1737, %v1728
    %v1745 = vadd.s32 %v1740, %v1742
    %vm1746 = vc.u32 %v1740, %v1742
    %v1747 = vadd.s32 %v1743, 1
    %v1748 = vsel %vm1746, %v1747, %v1743
    %v1749 = vadd.s32 %v1744, %v1748
    %v1750 = vadd.s32 %v1749, 536870912
    %v1751 = vshrl.u32 %v1750, 30
    %v1752 = vshll.u32 %v1751, 30
    %v1753 = vsub.s32 %v1749, %v1752
    %vm1754 = vcmp.lt.s32.totalorder %v1753, 0
    %v1755 = vsub.s32 0, %v1753
    %v1756 = vsel %vm1754, %v1755, %v1753
    %v1757 = vclz %v1756
    %v1758 = vsub.s32 %v1757, 2
    %vm1759 = vcmp.gt.s32.totalorder 0, %v1758
    %v1760 = vsel %vm1759, 0, %v1758
    %v1761 = vsub.s32 32, %v1760
    %v1762 = vshll.u32 %v1753, %v1760
    %v1763 = vshrl.u32 %v1745, %v1761
    %v1764 = vor.u32 %v1762, %v1763
    %v1765 = vsub.s32 4294967266, %v1760
    %v1766 = vadd.s32 %v1765, 127
    %v1767 = vshll.u32 %v1766, 23
    %v1768 = vor.u32 4788187, %v1767
    %v1769 = vand.u32 2147483647, %v1768
    %v1771 = vcvt.s32.f32 %v1764
    %v1772 = vmul.f32 %v1771, %v1769
    %v1773 = vxor.u32 %v1772, 2147483648
    %v1774 = vsel %vm1691, %v1773, %v1772
    %v1775 = vsub.s32 4, %v1751
    %v1776 = vsel %vm1691, %v1775, %v1751
    %v1777 = vsel %vm1690, %v746, %v1774
    %v1778 = vsel %vm1690, 0, %v1776
    %v1779 = vcosq.f32.pop %v1777
    %v1780 = vsinq.f32.pop %v1777
    %vm1781 = vweird.f32 %v746
    %v1782 = vadd.s32 %v1778, 3
    %v1783 = vand.u32 %v1782, 3
    %vm1784 = vcmp.lt.s32.totalorder %v1783, 2
    %vm1785 = vcmp.eq.s32.totalorder %v1783, 0
    %v1786 = vxor.u32 %v1780, 2147483648
    %v1787 = vsel %vm1785, %v1779, %v1786
    %vm1788 = vcmp.eq.s32.totalorder %v1783, 2
    %v1789 = vxor.u32 %v1779, 2147483648
    %v1790 = vsel %vm1788, %v1789, %v1780
    %v1791 = vsel %vm1784, %v1787, %v1790
    %v1792 = vsel %vm1781, nan, %v1791
    %v1793 = vand.u32 2147483647, %v747
    %vm1794 = vcmp.le.f32.partialorder %v1793, 0.7853982
    %vm1795 = vcmp.lt.s32.totalorder %v747, 0
    %v1796 = vand.u32 %v747, 2139095040
    %v1797 = vshrl.u32 %v1796, 23
    %v1798 = vsub.s32 %v1797, 127
    %v1799 = vand.u32 2147483647, %v747
    %v1800 = vand.u32 %v1799, 8388607
    %v1801 = vor.u32 %v1800, 8388608
    %v1802 = vsub.s32 0, %v1801
    %v1803 = vadd.s32 %v1798, 1
    %vm1804 = vcmp.gt.s32.totalorder %v1803, 0
    %v1805 = vsel %vm1804, %v1803, 0
    %v1806 = vshrl.u32 %v1805, 5
    %v1807 = vand.u32 %v1805, 31
    %v1808 = vsub.s32 32, %v1807
    %v1809 = vshrl.u32 683565275, %v1808
    %v1810 = vshll.u32 683565275, %v1807
    %v1811 = vshrl.u32 2475754826, %v1808
    %v1812 = vor.u32 %v1810, %v1811
    %v1813 = vshll.u32 2475754826, %v1807
    %v1814 = vshrl.u32 2131351028, %v1808
    %v1815 = vor.u32 %v1813, %v1814
    %v1816 = vshll.u32 2131351028, %v1807
    %v1817 = vshrl.u32 2102212464, %v1808
    %v1818 = vor.u32 %v1816, %v1817
    %v1819 = vshll.u32 2102212464, %v1807
    %v1820 = vshrl.u32 920167782, %v1808
    %v1821 = vor.u32 %v1819, %v1820
    %v1822 = vshll.u32 920167782, %v1807
    %v1823 = vshrl.u32 1326507024, %v1808
    %v1824 = vor.u32 %v1822, %v1823
    %vm1825 = vcmp.lt.s32.totalorder %v1806, 1
    %vm1826 = vcmp.lt.s32.totalorder %v1806, 2
    %vm1827 = vcmp.lt.s32.totalorder %v1806, 3
    %vm1828 = vcmp.lt.s32.totalorder %v1806, 4
    %v1829 = vsel %vm1825, %v1809, %v1812
    %v1830 = vsel %vm1828, %v1818, 2102212464
    %v1831 = vsel %vm1827, %v1815, %v1830
    %v1832 = vsel %vm1826, %v1829, %v1831
    %v1833 = vsel %vm1825, %v1812, %v1815
    %v1834 = vsel %vm1828, %v1821, 920167782
    %v1835 = vsel %vm1827, %v1818, %v1834
    %v1836 = vsel %vm1826, %v1833, %v1835
    %v1837 = vsel %vm1825, %v1815, %v1818
    %v1838 = vsel %vm1828, %v1824, 1326507024
    %v1839 = vsel %vm1827, %v1821, %v1838
    %v1840 = vsel %vm1826, %v1837, %v1839
    %v1841 = vshll.u32 %v1801, 8
    %v1842 = vmul.u32.u64.compose %v1841, %v1840
    %v1843 = vextract.low.u32 %v1842
    %v1844 = vextract.high.u32 %v1842
    %v1845 = vmul.u32.u64.compose %v1841, %v1836
    %v1846 = vextract.low.u32 %v1845
    %v1847 = vextract.high.u32 %v1845
    %v1848 = vmul.u32 %v1841, %v1832
    %v1849 = vadd.s32 %v1844, %v1846
    %vm1850 = vc.u32 %v1844, %v1846
    %v1851 = vadd.s32 %v1847, 1
    %v1852 = vsel %vm1850, %v1851, %v1847
    %v1853 = vadd.s32 %v1848, %v1852
    %v1854 = vadd.s32 %v1853, 536870912
    %v1855 = vshrl.u32 %v1854, 30
    %v1856 = vshll.u32 %v1855, 30
    %v1857 = vsub.s32 %v1853, %v1856
    %vm1858 = vcmp.lt.s32.totalorder %v1857, 0
    %v1859 = vsub.s32 0, %v1857
    %v1860 = vsel %vm1858, %v1859, %v1857
    %v1861 = vclz %v1860
    %v1862 = vsub.s32 %v1861, 2
    %vm1863 = vcmp.gt.s32.totalorder 0, %v1862
    %v1864 = vsel %vm1863, 0, %v1862
    %v1865 = vsub.s32 32, %v1864
    %v1866 = vshll.u32 %v1857, %v1864
    %v1867 = vshrl.u32 %v1849, %v1865
    %v1868 = vor.u32 %v1866, %v1867
    %v1869 = vsub.s32 4294967266, %v1864
    %v1870 = vadd.s32 %v1869, 127
    %v1871 = vshll.u32 %v1870, 23
    %v1872 = vor.u32 4788187, %v1871
    %v1873 = vand.u32 2147483647, %v1872
    %v1875 = vcvt.s32.f32 %v1868
    %v1876 = vmul.f32 %v1875, %v1873
    %v1877 = vxor.u32 %v1876, 2147483648
    %v1878 = vsel %vm1795, %v1877, %v1876
    %v1879 = vsub.s32 4, %v1855
    %v1880 = vsel %vm1795, %v1879, %v1855
    %v1881 = vsel %vm1794, %v747, %v1878
    %v1882 = vsel %vm1794, 0, %v1880
    %v1883 = vcosq.f32.pop %v1881
    %v1884 = vsinq.f32.pop %v1881
    %vm1885 = vweird.f32 %v747
    %v1886 = vadd.s32 %v1882, 3
    %v1887 = vand.u32 %v1886, 3
    %vm1888 = vcmp.lt.s32.totalorder %v1887, 2
    %vm1889 = vcmp.eq.s32.totalorder %v1887, 0
    %v1890 = vxor.u32 %v1884, 2147483648
    %v1891 = vsel %vm1889, %v1883, %v1890
    %vm1892 = vcmp.eq.s32.totalorder %v1887, 2
    %v1893 = vxor.u32 %v1883, 2147483648
    %v1894 = vsel %vm1892, %v1893, %v1884
    %v1895 = vsel %vm1888, %v1891, %v1894
    %v1896 = vsel %vm1885, nan, %v1895
    %v1897 = vand.u32 2147483647, %v748
    %vm1898 = vcmp.le.f32.partialorder %v1897, 0.7853982
    %vm1899 = vcmp.lt.s32.totalorder %v748, 0
    %v1900 = vand.u32 %v748, 2139095040
    %v1901 = vshrl.u32 %v1900, 23
    %v1902 = vsub.s32 %v1901, 127
    %v1903 = vand.u32 2147483647, %v748
    %v1904 = vand.u32 %v1903, 8388607
    %v1905 = vor.u32 %v1904, 8388608
    %v1906 = vsub.s32 0, %v1905
    %v1907 = vadd.s32 %v1902, 1
    %vm1908 = vcmp.gt.s32.totalorder %v1907, 0
    %v1909 = vsel %vm1908, %v1907, 0
    %v1910 = vshrl.u32 %v1909, 5
    %v1911 = vand.u32 %v1909, 31
    %v1912 = vsub.s32 32, %v1911
    %v1913 = vshrl.u32 683565275, %v1912
    %v1914 = vshll.u32 683565275, %v1911
    %v1915 = vshrl.u32 2475754826, %v1912
    %v1916 = vor.u32 %v1914, %v1915
    %v1917 = vshll.u32 2475754826, %v1911
    %v1918 = vshrl.u32 2131351028, %v1912
    %v1919 = vor.u32 %v1917, %v1918
    %v1920 = vshll.u32 2131351028, %v1911
    %v1921 = vshrl.u32 2102212464, %v1912
    %v1922 = vor.u32 %v1920, %v1921
    %v1923 = vshll.u32 2102212464, %v1911
    %v1924 = vshrl.u32 920167782, %v1912
    %v1925 = vor.u32 %v1923, %v1924
    %v1926 = vshll.u32 920167782, %v1911
    %v1927 = vshrl.u32 1326507024, %v1912
    %v1928 = vor.u32 %v1926, %v1927
    %vm1929 = vcmp.lt.s32.totalorder %v1910, 1
    %vm1930 = vcmp.lt.s32.totalorder %v1910, 2
    %vm1931 = vcmp.lt.s32.totalorder %v1910, 3
    %vm1932 = vcmp.lt.s32.totalorder %v1910, 4
    %v1933 = vsel %vm1929, %v1913, %v1916
    %v1934 = vsel %vm1932, %v1922, 2102212464
    %v1935 = vsel %vm1931, %v1919, %v1934
    %v1936 = vsel %vm1930, %v1933, %v1935
    %v1937 = vsel %vm1929, %v1916, %v1919
    %v1938 = vsel %vm1932, %v1925, 920167782
    %v1939 = vsel %vm1931, %v1922, %v1938
    %v1940 = vsel %vm1930, %v1937, %v1939
    %v1941 = vsel %vm1929, %v1919, %v1922
    %v1942 = vsel %vm1932, %v1928, 1326507024
    %v1943 = vsel %vm1931, %v1925, %v1942
    %v1944 = vsel %vm1930, %v1941, %v1943
    %v1945 = vshll.u32 %v1905, 8
    %v1946 = vmul.u32.u64.compose %v1945, %v1944
    %v1947 = vextract.low.u32 %v1946
    %v1948 = vextract.high.u32 %v1946
    %v1949 = vmul.u32.u64.compose %v1945, %v1940
    %v1950 = vextract.low.u32 %v1949
    %v1951 = vextract.high.u32 %v1949
    %v1952 = vmul.u32 %v1945, %v1936
    %v1953 = vadd.s32 %v1948, %v1950
    %vm1954 = vc.u32 %v1948, %v1950
    %v1955 = vadd.s32 %v1951, 1
    %v1956 = vsel %vm1954, %v1955, %v1951
    %v1957 = vadd.s32 %v1952, %v1956
    %v1958 = vadd.s32 %v1957, 536870912
    %v1959 = vshrl.u32 %v1958, 30
    %v1960 = vshll.u32 %v1959, 30
    %v1961 = vsub.s32 %v1957, %v1960
    %vm1962 = vcmp.lt.s32.totalorder %v1961, 0
    %v1963 = vsub.s32 0, %v1961
    %v1964 = vsel %vm1962, %v1963, %v1961
    %v1965 = vclz %v1964
    %v1966 = vsub.s32 %v1965, 2
    %vm1967 = vcmp.gt.s32.totalorder 0, %v1966
    %v1968 = vsel %vm1967, 0, %v1966
    %v1969 = vsub.s32 32, %v1968
    %v1970 = vshll.u32 %v1961, %v1968
    %v1971 = vshrl.u32 %v1953, %v1969
    %v1972 = vor.u32 %v1970, %v1971
    %v1973 = vsub.s32 4294967266, %v1968
    %v1974 = vadd.s32 %v1973, 127
    %v1975 = vshll.u32 %v1974, 23
    %v1976 = vor.u32 4788187, %v1975
    %v1977 = vand.u32 2147483647, %v1976
    %v1979 = vcvt.s32.f32 %v1972
    %v1980 = vmul.f32 %v1979, %v1977
    %v1981 = vxor.u32 %v1980, 2147483648
    %v1982 = vsel %vm1899, %v1981, %v1980
    %v1983 = vsub.s32 4, %v1959
    %v1984 = vsel %vm1899, %v1983, %v1959
    %v1985 = vsel %vm1898, %v748, %v1982
    %v1986 = vsel %vm1898, 0, %v1984
    %v1987 = vcosq.f32.pop %v1985
    %v1988 = vsinq.f32.pop %v1985
    %vm1989 = vweird.f32 %v748
    %v1990 = vadd.s32 %v1986, 3
    %v1991 = vand.u32 %v1990, 3
    %vm1992 = vcmp.lt.s32.totalorder %v1991, 2
    %vm1993 = vcmp.eq.s32.totalorder %v1991, 0
    %v1994 = vxor.u32 %v1988, 2147483648
    %v1995 = vsel %vm1993, %v1987, %v1994
    %vm1996 = vcmp.eq.s32.totalorder %v1991, 2
    %v1997 = vxor.u32 %v1987, 2147483648
    %v1998 = vsel %vm1996, %v1997, %v1988
    %v1999 = vsel %vm1992, %v1995, %v1998
    %v2000 = vsel %vm1989, nan, %v1999
    %v2001 = vand.u32 2147483647, %v749
    %vm2002 = vcmp.le.f32.partialorder %v2001, 0.7853982
    %vm2003 = vcmp.lt.s32.totalorder %v749, 0
    %v2004 = vand.u32 %v749, 2139095040
    %v2005 = vshrl.u32 %v2004, 23
    %v2006 = vsub.s32 %v2005, 127
    %v2007 = vand.u32 2147483647, %v749
    %v2008 = vand.u32 %v2007, 8388607
    %v2009 = vor.u32 %v2008, 8388608
    %v2010 = vsub.s32 0, %v2009
    %v2011 = vadd.s32 %v2006, 1
    %vm2012 = vcmp.gt.s32.totalorder %v2011, 0
    %v2013 = vsel %vm2012, %v2011, 0
    %v2014 = vshrl.u32 %v2013, 5
    %v2015 = vand.u32 %v2013, 31
    %v2016 = vsub.s32 32, %v2015
    %v2017 = vshrl.u32 683565275, %v2016
    %v2018 = vshll.u32 683565275, %v2015
    %v2019 = vshrl.u32 2475754826, %v2016
    %v2020 = vor.u32 %v2018, %v2019
    %v2021 = vshll.u32 2475754826, %v2015
    %v2022 = vshrl.u32 2131351028, %v2016
    %v2023 = vor.u32 %v2021, %v2022
    %v2024 = vshll.u32 2131351028, %v2015
    %v2025 = vshrl.u32 2102212464, %v2016
    %v2026 = vor.u32 %v2024, %v2025
    %v2027 = vshll.u32 2102212464, %v2015
    %v2028 = vshrl.u32 920167782, %v2016
    %v2029 = vor.u32 %v2027, %v2028
    %v2030 = vshll.u32 920167782, %v2015
    %v2031 = vshrl.u32 1326507024, %v2016
    %v2032 = vor.u32 %v2030, %v2031
    %vm2033 = vcmp.lt.s32.totalorder %v2014, 1
    %vm2034 = vcmp.lt.s32.totalorder %v2014, 2
    %vm2035 = vcmp.lt.s32.totalorder %v2014, 3
    %vm2036 = vcmp.lt.s32.totalorder %v2014, 4
    %v2037 = vsel %vm2033, %v2017, %v2020
    %v2038 = vsel %vm2036, %v2026, 2102212464
    %v2039 = vsel %vm2035, %v2023, %v2038
    %v2040 = vsel %vm2034, %v2037, %v2039
    %v2041 = vsel %vm2033, %v2020, %v2023
    %v2042 = vsel %vm2036, %v2029, 920167782
    %v2043 = vsel %vm2035, %v2026, %v2042
    %v2044 = vsel %vm2034, %v2041, %v2043
    %v2045 = vsel %vm2033, %v2023, %v2026
    %v2046 = vsel %vm2036, %v2032, 1326507024
    %v2047 = vsel %vm2035, %v2029, %v2046
    %v2048 = vsel %vm2034, %v2045, %v2047
    %v2049 = vshll.u32 %v2009, 8
    %v2050 = vmul.u32.u64.compose %v2049, %v2048
    %v2051 = vextract.low.u32 %v2050
    %v2052 = vextract.high.u32 %v2050
    %v2053 = vmul.u32.u64.compose %v2049, %v2044
    %v2054 = vextract.low.u32 %v2053
    %v2055 = vextract.high.u32 %v2053
    %v2056 = vmul.u32 %v2049, %v2040
    %v2057 = vadd.s32 %v2052, %v2054
    %vm2058 = vc.u32 %v2052, %v2054
    %v2059 = vadd.s32 %v2055, 1
    %v2060 = vsel %vm2058, %v2059, %v2055
    %v2061 = vadd.s32 %v2056, %v2060
    %v2062 = vadd.s32 %v2061, 536870912
    %v2063 = vshrl.u32 %v2062, 30
    %v2064 = vshll.u32 %v2063, 30
    %v2065 = vsub.s32 %v2061, %v2064
    %vm2066 = vcmp.lt.s32.totalorder %v2065, 0
    %v2067 = vsub.s32 0, %v2065
    %v2068 = vsel %vm2066, %v2067, %v2065
    %v2069 = vclz %v2068
    %v2070 = vsub.s32 %v2069, 2
    %vm2071 = vcmp.gt.s32.totalorder 0, %v2070
    %v2072 = vsel %vm2071, 0, %v2070
    %v2073 = vsub.s32 32, %v2072
    %v2074 = vshll.u32 %v2065, %v2072
    %v2075 = vshrl.u32 %v2057, %v2073
    %v2076 = vor.u32 %v2074, %v2075
    %v2077 = vsub.s32 4294967266, %v2072
    %v2078 = vadd.s32 %v2077, 127
    %v2079 = vshll.u32 %v2078, 23
    %v2080 = vor.u32 4788187, %v2079
    %v2081 = vand.u32 2147483647, %v2080
    %v2083 = vcvt.s32.f32 %v2076
    %v2084 = vmul.f32 %v2083, %v2081
    %v2085 = vxor.u32 %v2084, 2147483648
    %v2086 = vsel %vm2003, %v2085, %v2084
    %v2087 = vsub.s32 4, %v2063
    %v2088 = vsel %vm2003, %v2087, %v2063
    %v2089 = vsel %vm2002, %v749, %v2086
    %v2090 = vsel %vm2002, 0, %v2088
    %v2091 = vcosq.f32.pop %v2089
    %v2092 = vsinq.f32.pop %v2089
    %vm2093 = vweird.f32 %v749
    %v2094 = vadd.s32 %v2090, 3
    %v2095 = vand.u32 %v2094, 3
    %vm2096 = vcmp.lt.s32.totalorder %v2095, 2
    %vm2097 = vcmp.eq.s32.totalorder %v2095, 0
    %v2098 = vxor.u32 %v2092, 2147483648
    %v2099 = vsel %vm2097, %v2091, %v2098
    %vm2100 = vcmp.eq.s32.totalorder %v2095, 2
    %v2101 = vxor.u32 %v2091, 2147483648
    %v2102 = vsel %vm2100, %v2101, %v2092
    %v2103 = vsel %vm2096, %v2099, %v2102
    %v2104 = vsel %vm2093, nan, %v2103
    %v2105 = vand.u32 2147483647, %v750
    %vm2106 = vcmp.le.f32.partialorder %v2105, 0.7853982
    %vm2107 = vcmp.lt.s32.totalorder %v750, 0
    %v2108 = vand.u32 %v750, 2139095040
    %v2109 = vshrl.u32 %v2108, 23
    %v2110 = vsub.s32 %v2109, 127
    %v2111 = vand.u32 2147483647, %v750
    %v2112 = vand.u32 %v2111, 8388607
    %v2113 = vor.u32 %v2112, 8388608
    %v2114 = vsub.s32 0, %v2113
    %v2115 = vadd.s32 %v2110, 1
    %vm2116 = vcmp.gt.s32.totalorder %v2115, 0
    %v2117 = vsel %vm2116, %v2115, 0
    %v2118 = vshrl.u32 %v2117, 5
    %v2119 = vand.u32 %v2117, 31
    %v2120 = vsub.s32 32, %v2119
    %v2121 = vshrl.u32 683565275, %v2120
    %v2122 = vshll.u32 683565275, %v2119
    %v2123 = vshrl.u32 2475754826, %v2120
    %v2124 = vor.u32 %v2122, %v2123
    %v2125 = vshll.u32 2475754826, %v2119
    %v2126 = vshrl.u32 2131351028, %v2120
    %v2127 = vor.u32 %v2125, %v2126
    %v2128 = vshll.u32 2131351028, %v2119
    %v2129 = vshrl.u32 2102212464, %v2120
    %v2130 = vor.u32 %v2128, %v2129
    %v2131 = vshll.u32 2102212464, %v2119
    %v2132 = vshrl.u32 920167782, %v2120
    %v2133 = vor.u32 %v2131, %v2132
    %v2134 = vshll.u32 920167782, %v2119
    %v2135 = vshrl.u32 1326507024, %v2120
    %v2136 = vor.u32 %v2134, %v2135
    %vm2137 = vcmp.lt.s32.totalorder %v2118, 1
    %vm2138 = vcmp.lt.s32.totalorder %v2118, 2
    %vm2139 = vcmp.lt.s32.totalorder %v2118, 3
    %vm2140 = vcmp.lt.s32.totalorder %v2118, 4
    %v2141 = vsel %vm2137, %v2121, %v2124
    %v2142 = vsel %vm2140, %v2130, 2102212464
    %v2143 = vsel %vm2139, %v2127, %v2142
    %v2144 = vsel %vm2138, %v2141, %v2143
    %v2145 = vsel %vm2137, %v2124, %v2127
    %v2146 = vsel %vm2140, %v2133, 920167782
    %v2147 = vsel %vm2139, %v2130, %v2146
    %v2148 = vsel %vm2138, %v2145, %v2147
    %v2149 = vsel %vm2137, %v2127, %v2130
    %v2150 = vsel %vm2140, %v2136, 1326507024
    %v2151 = vsel %vm2139, %v2133, %v2150
    %v2152 = vsel %vm2138, %v2149, %v2151
    %v2153 = vshll.u32 %v2113, 8
    %v2154 = vmul.u32.u64.compose %v2153, %v2152
    %v2155 = vextract.low.u32 %v2154
    %v2156 = vextract.high.u32 %v2154
    %v2157 = vmul.u32.u64.compose %v2153, %v2148
    %v2158 = vextract.low.u32 %v2157
    %v2159 = vextract.high.u32 %v2157
    %v2160 = vmul.u32 %v2153, %v2144
    %v2161 = vadd.s32 %v2156, %v2158
    %vm2162 = vc.u32 %v2156, %v2158
    %v2163 = vadd.s32 %v2159, 1
    %v2164 = vsel %vm2162, %v2163, %v2159
    %v2165 = vadd.s32 %v2160, %v2164
    %v2166 = vadd.s32 %v2165, 536870912
    %v2167 = vshrl.u32 %v2166, 30
    %v2168 = vshll.u32 %v2167, 30
    %v2169 = vsub.s32 %v2165, %v2168
    %vm2170 = vcmp.lt.s32.totalorder %v2169, 0
    %v2171 = vsub.s32 0, %v2169
    %v2172 = vsel %vm2170, %v2171, %v2169
    %v2173 = vclz %v2172
    %v2174 = vsub.s32 %v2173, 2
    %vm2175 = vcmp.gt.s32.totalorder 0, %v2174
    %v2176 = vsel %vm2175, 0, %v2174
    %v2177 = vsub.s32 32, %v2176
    %v2178 = vshll.u32 %v2169, %v2176
    %v2179 = vshrl.u32 %v2161, %v2177
    %v2180 = vor.u32 %v2178, %v2179
    %v2181 = vsub.s32 4294967266, %v2176
    %v2182 = vadd.s32 %v2181, 127
    %v2183 = vshll.u32 %v2182, 23
    %v2184 = vor.u32 4788187, %v2183
    %v2185 = vand.u32 2147483647, %v2184
    %v2187 = vcvt.s32.f32 %v2180
    %v2188 = vmul.f32 %v2187, %v2185
    %v2189 = vxor.u32 %v2188, 2147483648
    %v2190 = vsel %vm2107, %v2189, %v2188
    %v2191 = vsub.s32 4, %v2167
    %v2192 = vsel %vm2107, %v2191, %v2167
    %v2193 = vsel %vm2106, %v750, %v2190
    %v2194 = vsel %vm2106, 0, %v2192
    %v2195 = vcosq.f32.pop %v2193
    %v2196 = vsinq.f32.pop %v2193
    %vm2197 = vweird.f32 %v750
    %v2198 = vadd.s32 %v2194, 3
    %v2199 = vand.u32 %v2198, 3
    %vm2200 = vcmp.lt.s32.totalorder %v2199, 2
    %vm2201 = vcmp.eq.s32.totalorder %v2199, 0
    %v2202 = vxor.u32 %v2196, 2147483648
    %v2203 = vsel %vm2201, %v2195, %v2202
    %vm2204 = vcmp.eq.s32.totalorder %v2199, 2
    %v2205 = vxor.u32 %v2195, 2147483648
    %v2206 = vsel %vm2204, %v2205, %v2196
    %v2207 = vsel %vm2200, %v2203, %v2206
    %v2208 = vsel %vm2197, nan, %v2207
    %v2209 = vand.u32 2147483647, %v751
    %vm2210 = vcmp.le.f32.partialorder %v2209, 0.7853982
    %vm2211 = vcmp.lt.s32.totalorder %v751, 0
    %v2212 = vand.u32 %v751, 2139095040
    %v2213 = vshrl.u32 %v2212, 23
    %v2214 = vsub.s32 %v2213, 127
    %v2215 = vand.u32 2147483647, %v751
    %v2216 = vand.u32 %v2215, 8388607
    %v2217 = vor.u32 %v2216, 8388608
    %v2218 = vsub.s32 0, %v2217
    %v2219 = vadd.s32 %v2214, 1
    %vm2220 = vcmp.gt.s32.totalorder %v2219, 0
    %v2221 = vsel %vm2220, %v2219, 0
    %v2222 = vshrl.u32 %v2221, 5
    %v2223 = vand.u32 %v2221, 31
    %v2224 = vsub.s32 32, %v2223
    %v2225 = vshrl.u32 683565275, %v2224
    %v2226 = vshll.u32 683565275, %v2223
    %v2227 = vshrl.u32 2475754826, %v2224
    %v2228 = vor.u32 %v2226, %v2227
    %v2229 = vshll.u32 2475754826, %v2223
    %v2230 = vshrl.u32 2131351028, %v2224
    %v2231 = vor.u32 %v2229, %v2230
    %v2232 = vshll.u32 2131351028, %v2223
    %v2233 = vshrl.u32 2102212464, %v2224
    %v2234 = vor.u32 %v2232, %v2233
    %v2235 = vshll.u32 2102212464, %v2223
    %v2236 = vshrl.u32 920167782, %v2224
    %v2237 = vor.u32 %v2235, %v2236
    %v2238 = vshll.u32 920167782, %v2223
    %v2239 = vshrl.u32 1326507024, %v2224
    %v2240 = vor.u32 %v2238, %v2239
    %vm2241 = vcmp.lt.s32.totalorder %v2222, 1
    %vm2242 = vcmp.lt.s32.totalorder %v2222, 2
    %vm2243 = vcmp.lt.s32.totalorder %v2222, 3
    %vm2244 = vcmp.lt.s32.totalorder %v2222, 4
    %v2245 = vsel %vm2241, %v2225, %v2228
    %v2246 = vsel %vm2244, %v2234, 2102212464
    %v2247 = vsel %vm2243, %v2231, %v2246
    %v2248 = vsel %vm2242, %v2245, %v2247
    %v2249 = vsel %vm2241, %v2228, %v2231
    %v2250 = vsel %vm2244, %v2237, 920167782
    %v2251 = vsel %vm2243, %v2234, %v2250
    %v2252 = vsel %vm2242, %v2249, %v2251
    %v2253 = vsel %vm2241, %v2231, %v2234
    %v2254 = vsel %vm2244, %v2240, 1326507024
    %v2255 = vsel %vm2243, %v2237, %v2254
    %v2256 = vsel %vm2242, %v2253, %v2255
    %v2257 = vshll.u32 %v2217, 8
    %v2258 = vmul.u32.u64.compose %v2257, %v2256
    %v2259 = vextract.low.u32 %v2258
    %v2260 = vextract.high.u32 %v2258
    %v2261 = vmul.u32.u64.compose %v2257, %v2252
    %v2262 = vextract.low.u32 %v2261
    %v2263 = vextract.high.u32 %v2261
    %v2264 = vmul.u32 %v2257, %v2248
    %v2265 = vadd.s32 %v2260, %v2262
    %vm2266 = vc.u32 %v2260, %v2262
    %v2267 = vadd.s32 %v2263, 1
    %v2268 = vsel %vm2266, %v2267, %v2263
    %v2269 = vadd.s32 %v2264, %v2268
    %v2270 = vadd.s32 %v2269, 536870912
    %v2271 = vshrl.u32 %v2270, 30
    %v2272 = vshll.u32 %v2271, 30
    %v2273 = vsub.s32 %v2269, %v2272
    %vm2274 = vcmp.lt.s32.totalorder %v2273, 0
    %v2275 = vsub.s32 0, %v2273
    %v2276 = vsel %vm2274, %v2275, %v2273
    %v2277 = vclz %v2276
    %v2278 = vsub.s32 %v2277, 2
    %vm2279 = vcmp.gt.s32.totalorder 0, %v2278
    %v2280 = vsel %vm2279, 0, %v2278
    %v2281 = vsub.s32 32, %v2280
    %v2282 = vshll.u32 %v2273, %v2280
    %v2283 = vshrl.u32 %v2265, %v2281
    %v2284 = vor.u32 %v2282, %v2283
    %v2285 = vsub.s32 4294967266, %v2280
    %v2286 = vadd.s32 %v2285, 127
    %v2287 = vshll.u32 %v2286, 23
    %v2288 = vor.u32 4788187, %v2287
    %v2289 = vand.u32 2147483647, %v2288
    %v2291 = vcvt.s32.f32 %v2284
    %v2292 = vmul.f32 %v2291, %v2289
    %v2293 = vxor.u32 %v2292, 2147483648
    %v2294 = vsel %vm2211, %v2293, %v2292
    %v2295 = vsub.s32 4, %v2271
    %v2296 = vsel %vm2211, %v2295, %v2271
    %v2297 = vsel %vm2210, %v751, %v2294
    %v2298 = vsel %vm2210, 0, %v2296
    %v2299 = vcosq.f32.pop %v2297
    %v2300 = vsinq.f32.pop %v2297
    %vm2301 = vweird.f32 %v751
    %v2302 = vadd.s32 %v2298, 3
    %v2303 = vand.u32 %v2302, 3
    %vm2304 = vcmp.lt.s32.totalorder %v2303, 2
    %vm2305 = vcmp.eq.s32.totalorder %v2303, 0
    %v2306 = vxor.u32 %v2300, 2147483648
    %v2307 = vsel %vm2305, %v2299, %v2306
    %vm2308 = vcmp.eq.s32.totalorder %v2303, 2
    %v2309 = vxor.u32 %v2299, 2147483648
    %v2310 = vsel %vm2308, %v2309, %v2300
    %v2311 = vsel %vm2304, %v2307, %v2310
    %v2312 = vsel %vm2301, nan, %v2311
    %v2313 = vand.u32 2147483647, %v752
    %vm2314 = vcmp.le.f32.partialorder %v2313, 0.7853982
    %vm2315 = vcmp.lt.s32.totalorder %v752, 0
    %v2316 = vand.u32 %v752, 2139095040
    %v2317 = vshrl.u32 %v2316, 23
    %v2318 = vsub.s32 %v2317, 127
    %v2319 = vand.u32 2147483647, %v752
    %v2320 = vand.u32 %v2319, 8388607
    %v2321 = vor.u32 %v2320, 8388608
    %v2322 = vsub.s32 0, %v2321
    %v2323 = vadd.s32 %v2318, 1
    %vm2324 = vcmp.gt.s32.totalorder %v2323, 0
    %v2325 = vsel %vm2324, %v2323, 0
    %v2326 = vshrl.u32 %v2325, 5
    %v2327 = vand.u32 %v2325, 31
    %v2328 = vsub.s32 32, %v2327
    %v2329 = vshrl.u32 683565275, %v2328
    %v2330 = vshll.u32 683565275, %v2327
    %v2331 = vshrl.u32 2475754826, %v2328
    %v2332 = vor.u32 %v2330, %v2331
    %v2333 = vshll.u32 2475754826, %v2327
    %v2334 = vshrl.u32 2131351028, %v2328
    %v2335 = vor.u32 %v2333, %v2334
    %v2336 = vshll.u32 2131351028, %v2327
    %v2337 = vshrl.u32 2102212464, %v2328
    %v2338 = vor.u32 %v2336, %v2337
    %v2339 = vshll.u32 2102212464, %v2327
    %v2340 = vshrl.u32 920167782, %v2328
    %v2341 = vor.u32 %v2339, %v2340
    %v2342 = vshll.u32 920167782, %v2327
    %v2343 = vshrl.u32 1326507024, %v2328
    %v2344 = vor.u32 %v2342, %v2343
    %vm2345 = vcmp.lt.s32.totalorder %v2326, 1
    %vm2346 = vcmp.lt.s32.totalorder %v2326, 2
    %vm2347 = vcmp.lt.s32.totalorder %v2326, 3
    %vm2348 = vcmp.lt.s32.totalorder %v2326, 4
    %v2349 = vsel %vm2345, %v2329, %v2332
    %v2350 = vsel %vm2348, %v2338, 2102212464
    %v2351 = vsel %vm2347, %v2335, %v2350
    %v2352 = vsel %vm2346, %v2349, %v2351
    %v2353 = vsel %vm2345, %v2332, %v2335
    %v2354 = vsel %vm2348, %v2341, 920167782
    %v2355 = vsel %vm2347, %v2338, %v2354
    %v2356 = vsel %vm2346, %v2353, %v2355
    %v2357 = vsel %vm2345, %v2335, %v2338
    %v2358 = vsel %vm2348, %v2344, 1326507024
    %v2359 = vsel %vm2347, %v2341, %v2358
    %v2360 = vsel %vm2346, %v2357, %v2359
    %v2361 = vshll.u32 %v2321, 8
    %v2362 = vmul.u32.u64.compose %v2361, %v2360
    %v2363 = vextract.low.u32 %v2362
    %v2364 = vextract.high.u32 %v2362
    %v2365 = vmul.u32.u64.compose %v2361, %v2356
    %v2366 = vextract.low.u32 %v2365
    %v2367 = vextract.high.u32 %v2365
    %v2368 = vmul.u32 %v2361, %v2352
    %v2369 = vadd.s32 %v2364, %v2366
    %vm2370 = vc.u32 %v2364, %v2366
    %v2371 = vadd.s32 %v2367, 1
    %v2372 = vsel %vm2370, %v2371, %v2367
    %v2373 = vadd.s32 %v2368, %v2372
    %v2374 = vadd.s32 %v2373, 536870912
    %v2375 = vshrl.u32 %v2374, 30
    %v2376 = vshll.u32 %v2375, 30
    %v2377 = vsub.s32 %v2373, %v2376
    %vm2378 = vcmp.lt.s32.totalorder %v2377, 0
    %v2379 = vsub.s32 0, %v2377
    %v2380 = vsel %vm2378, %v2379, %v2377
    %v2381 = vclz %v2380
    %v2382 = vsub.s32 %v2381, 2
    %vm2383 = vcmp.gt.s32.totalorder 0, %v2382
    %v2384 = vsel %vm2383, 0, %v2382
    %v2385 = vsub.s32 32, %v2384
    %v2386 = vshll.u32 %v2377, %v2384
    %v2387 = vshrl.u32 %v2369, %v2385
    %v2388 = vor.u32 %v2386, %v2387
    %v2389 = vsub.s32 4294967266, %v2384
    %v2390 = vadd.s32 %v2389, 127
    %v2391 = vshll.u32 %v2390, 23
    %v2392 = vor.u32 4788187, %v2391
    %v2393 = vand.u32 2147483647, %v2392
    %v2395 = vcvt.s32.f32 %v2388
    %v2396 = vmul.f32 %v2395, %v2393
    %v2397 = vxor.u32 %v2396, 2147483648
    %v2398 = vsel %vm2315, %v2397, %v2396
    %v2399 = vsub.s32 4, %v2375
    %v2400 = vsel %vm2315, %v2399, %v2375
    %v2401 = vsel %vm2314, %v752, %v2398
    %v2402 = vsel %vm2314, 0, %v2400
    %v2403 = vcosq.f32.pop %v2401
    %v2404 = vsinq.f32.pop %v2401
    %vm2405 = vweird.f32 %v752
    %v2406 = vadd.s32 %v2402, 3
    %v2407 = vand.u32 %v2406, 3
    %vm2408 = vcmp.lt.s32.totalorder %v2407, 2
    %vm2409 = vcmp.eq.s32.totalorder %v2407, 0
    %v2410 = vxor.u32 %v2404, 2147483648
    %v2411 = vsel %vm2409, %v2403, %v2410
    %vm2412 = vcmp.eq.s32.totalorder %v2407, 2
    %v2413 = vxor.u32 %v2403, 2147483648
    %v2414 = vsel %vm2412, %v2413, %v2404
    %v2415 = vsel %vm2408, %v2411, %v2414
    %v2416 = vsel %vm2405, nan, %v2415
    %v2417 = vand.u32 2147483647, %v737
    %vm2418 = vcmp.le.f32.partialorder %v2417, 0.7853982
    %vm2419 = vcmp.lt.s32.totalorder %v737, 0
    %v2420 = vand.u32 %v737, 2139095040
    %v2421 = vshrl.u32 %v2420, 23
    %v2422 = vsub.s32 %v2421, 127
    %v2423 = vand.u32 2147483647, %v737
    %v2424 = vand.u32 %v2423, 8388607
    %v2425 = vor.u32 %v2424, 8388608
    %v2426 = vsub.s32 0, %v2425
    %v2427 = vadd.s32 %v2422, 1
    %vm2428 = vcmp.gt.s32.totalorder %v2427, 0
    %v2429 = vsel %vm2428, %v2427, 0
    %v2430 = vshrl.u32 %v2429, 5
    %v2431 = vand.u32 %v2429, 31
    %v2432 = vsub.s32 32, %v2431
    %v2433 = vshrl.u32 683565275, %v2432
    %v2434 = vshll.u32 683565275, %v2431
    %v2435 = vshrl.u32 2475754826, %v2432
    %v2436 = vor.u32 %v2434, %v2435
    %v2437 = vshll.u32 2475754826, %v2431
    %v2438 = vshrl.u32 2131351028, %v2432
    %v2439 = vor.u32 %v2437, %v2438
    %v2440 = vshll.u32 2131351028, %v2431
    %v2441 = vshrl.u32 2102212464, %v2432
    %v2442 = vor.u32 %v2440, %v2441
    %v2443 = vshll.u32 2102212464, %v2431
    %v2444 = vshrl.u32 920167782, %v2432
    %v2445 = vor.u32 %v2443, %v2444
    %v2446 = vshll.u32 920167782, %v2431
    %v2447 = vshrl.u32 1326507024, %v2432
    %v2448 = vor.u32 %v2446, %v2447
    %vm2449 = vcmp.lt.s32.totalorder %v2430, 1
    %vm2450 = vcmp.lt.s32.totalorder %v2430, 2
    %vm2451 = vcmp.lt.s32.totalorder %v2430, 3
    %vm2452 = vcmp.lt.s32.totalorder %v2430, 4
    %v2453 = vsel %vm2449, %v2433, %v2436
    %v2454 = vsel %vm2452, %v2442, 2102212464
    %v2455 = vsel %vm2451, %v2439, %v2454
    %v2456 = vsel %vm2450, %v2453, %v2455
    %v2457 = vsel %vm2449, %v2436, %v2439
    %v2458 = vsel %vm2452, %v2445, 920167782
    %v2459 = vsel %vm2451, %v2442, %v2458
    %v2460 = vsel %vm2450, %v2457, %v2459
    %v2461 = vsel %vm2449, %v2439, %v2442
    %v2462 = vsel %vm2452, %v2448, 1326507024
    %v2463 = vsel %vm2451, %v2445, %v2462
    %v2464 = vsel %vm2450, %v2461, %v2463
    %v2465 = vshll.u32 %v2425, 8
    %v2466 = vmul.u32.u64.compose %v2465, %v2464
    %v2467 = vextract.low.u32 %v2466
    %v2468 = vextract.high.u32 %v2466
    %v2469 = vmul.u32.u64.compose %v2465, %v2460
    %v2470 = vextract.low.u32 %v2469
    %v2471 = vextract.high.u32 %v2469
    %v2472 = vmul.u32 %v2465, %v2456
    %v2473 = vadd.s32 %v2468, %v2470
    %vm2474 = vc.u32 %v2468, %v2470
    %v2475 = vadd.s32 %v2471, 1
    %v2476 = vsel %vm2474, %v2475, %v2471
    %v2477 = vadd.s32 %v2472, %v2476
    %v2478 = vadd.s32 %v2477, 536870912
    %v2479 = vshrl.u32 %v2478, 30
    %v2480 = vshll.u32 %v2479, 30
    %v2481 = vsub.s32 %v2477, %v2480
    %vm2482 = vcmp.lt.s32.totalorder %v2481, 0
    %v2483 = vsub.s32 0, %v2481
    %v2484 = vsel %vm2482, %v2483, %v2481
    %v2485 = vclz %v2484
    %v2486 = vsub.s32 %v2485, 2
    %vm2487 = vcmp.gt.s32.totalorder 0, %v2486
    %v2488 = vsel %vm2487, 0, %v2486
    %v2489 = vsub.s32 32, %v2488
    %v2490 = vshll.u32 %v2481, %v2488
    %v2491 = vshrl.u32 %v2473, %v2489
    %v2492 = vor.u32 %v2490, %v2491
    %v2493 = vsub.s32 4294967266, %v2488
    %v2494 = vadd.s32 %v2493, 127
    %v2495 = vshll.u32 %v2494, 23
    %v2496 = vor.u32 4788187, %v2495
    %v2497 = vand.u32 2147483647, %v2496
    %v2499 = vcvt.s32.f32 %v2492
    %v2500 = vmul.f32 %v2499, %v2497
    %v2501 = vxor.u32 %v2500, 2147483648
    %v2502 = vsel %vm2419, %v2501, %v2500
    %v2503 = vsub.s32 4, %v2479
    %v2504 = vsel %vm2419, %v2503, %v2479
    %v2505 = vsel %vm2418, %v737, %v2502
    %v2506 = vsel %vm2418, 0, %v2504
    %v2507 = vcosq.f32.pop %v2505
    %v2508 = vsinq.f32.pop %v2505
    %vm2509 = vweird.f32 %v737
    %v2510 = vand.u32 %v2506, 3
    %vm2511 = vcmp.lt.s32.totalorder %v2510, 2
    %vm2512 = vcmp.eq.s32.totalorder %v2510, 0
    %v2513 = vxor.u32 %v2508, 2147483648
    %v2514 = vsel %vm2512, %v2507, %v2513
    %vm2515 = vcmp.eq.s32.totalorder %v2510, 2
    %v2516 = vxor.u32 %v2507, 2147483648
    %v2517 = vsel %vm2515, %v2516, %v2508
    %v2518 = vsel %vm2511, %v2514, %v2517
    %v2519 = vsel %vm2509, nan, %v2518
    %v2520 = vand.u32 2147483647, %v738
    %vm2521 = vcmp.le.f32.partialorder %v2520, 0.7853982
    %vm2522 = vcmp.lt.s32.totalorder %v738, 0
    %v2523 = vand.u32 %v738, 2139095040
    %v2524 = vshrl.u32 %v2523, 23
    %v2525 = vsub.s32 %v2524, 127
    %v2526 = vand.u32 2147483647, %v738
    %v2527 = vand.u32 %v2526, 8388607
    %v2528 = vor.u32 %v2527, 8388608
    %v2529 = vsub.s32 0, %v2528
    %v2530 = vadd.s32 %v2525, 1
    %vm2531 = vcmp.gt.s32.totalorder %v2530, 0
    %v2532 = vsel %vm2531, %v2530, 0
    %v2533 = vshrl.u32 %v2532, 5
    %v2534 = vand.u32 %v2532, 31
    %v2535 = vsub.s32 32, %v2534
    %v2536 = vshrl.u32 683565275, %v2535
    %v2537 = vshll.u32 683565275, %v2534
    %v2538 = vshrl.u32 2475754826, %v2535
    %v2539 = vor.u32 %v2537, %v2538
    %v2540 = vshll.u32 2475754826, %v2534
    %v2541 = vshrl.u32 2131351028, %v2535
    %v2542 = vor.u32 %v2540, %v2541
    %v2543 = vshll.u32 2131351028, %v2534
    %v2544 = vshrl.u32 2102212464, %v2535
    %v2545 = vor.u32 %v2543, %v2544
    %v2546 = vshll.u32 2102212464, %v2534
    %v2547 = vshrl.u32 920167782, %v2535
    %v2548 = vor.u32 %v2546, %v2547
    %v2549 = vshll.u32 920167782, %v2534
    %v2550 = vshrl.u32 1326507024, %v2535
    %v2551 = vor.u32 %v2549, %v2550
    %vm2552 = vcmp.lt.s32.totalorder %v2533, 1
    %vm2553 = vcmp.lt.s32.totalorder %v2533, 2
    %vm2554 = vcmp.lt.s32.totalorder %v2533, 3
    %vm2555 = vcmp.lt.s32.totalorder %v2533, 4
    %v2556 = vsel %vm2552, %v2536, %v2539
    %v2557 = vsel %vm2555, %v2545, 2102212464
    %v2558 = vsel %vm2554, %v2542, %v2557
    %v2559 = vsel %vm2553, %v2556, %v2558
    %v2560 = vsel %vm2552, %v2539, %v2542
    %v2561 = vsel %vm2555, %v2548, 920167782
    %v2562 = vsel %vm2554, %v2545, %v2561
    %v2563 = vsel %vm2553, %v2560, %v2562
    %v2564 = vsel %vm2552, %v2542, %v2545
    %v2565 = vsel %vm2555, %v2551, 1326507024
    %v2566 = vsel %vm2554, %v2548, %v2565
    %v2567 = vsel %vm2553, %v2564, %v2566
    %v2568 = vshll.u32 %v2528, 8
    %v2569 = vmul.u32.u64.compose %v2568, %v2567
    %v2570 = vextract.low.u32 %v2569
    %v2571 = vextract.high.u32 %v2569
    %v2572 = vmul.u32.u64.compose %v2568, %v2563
    %v2573 = vextract.low.u32 %v2572
    %v2574 = vextract.high.u32 %v2572
    %v2575 = vmul.u32 %v2568, %v2559
    %v2576 = vadd.s32 %v2571, %v2573
    %vm2577 = vc.u32 %v2571, %v2573
    %v2578 = vadd.s32 %v2574, 1
    %v2579 = vsel %vm2577, %v2578, %v2574
    %v2580 = vadd.s32 %v2575, %v2579
    %v2581 = vadd.s32 %v2580, 536870912
    %v2582 = vshrl.u32 %v2581, 30
    %v2583 = vshll.u32 %v2582, 30
    %v2584 = vsub.s32 %v2580, %v2583
    %vm2585 = vcmp.lt.s32.totalorder %v2584, 0
    %v2586 = vsub.s32 0, %v2584
    %v2587 = vsel %vm2585, %v2586, %v2584
    %v2588 = vclz %v2587
    %v2589 = vsub.s32 %v2588, 2
    %vm2590 = vcmp.gt.s32.totalorder 0, %v2589
    %v2591 = vsel %vm2590, 0, %v2589
    %v2592 = vsub.s32 32, %v2591
    %v2593 = vshll.u32 %v2584, %v2591
    %v2594 = vshrl.u32 %v2576, %v2592
    %v2595 = vor.u32 %v2593, %v2594
    %v2596 = vsub.s32 4294967266, %v2591
    %v2597 = vadd.s32 %v2596, 127
    %v2598 = vshll.u32 %v2597, 23
    %v2599 = vor.u32 4788187, %v2598
    %v2600 = vand.u32 2147483647, %v2599
    %v2602 = vcvt.s32.f32 %v2595
    %v2603 = vmul.f32 %v2602, %v2600
    %v2604 = vxor.u32 %v2603, 2147483648
    %v2605 = vsel %vm2522, %v2604, %v2603
    %v2606 = vsub.s32 4, %v2582
    %v2607 = vsel %vm2522, %v2606, %v2582
    %v2608 = vsel %vm2521, %v738, %v2605
    %v2609 = vsel %vm2521, 0, %v2607
    %v2610 = vcosq.f32.pop %v2608
    %v2611 = vsinq.f32.pop %v2608
    %vm2612 = vweird.f32 %v738
    %v2613 = vand.u32 %v2609, 3
    %vm2614 = vcmp.lt.s32.totalorder %v2613, 2
    %vm2615 = vcmp.eq.s32.totalorder %v2613, 0
    %v2616 = vxor.u32 %v2611, 2147483648
    %v2617 = vsel %vm2615, %v2610, %v2616
    %vm2618 = vcmp.eq.s32.totalorder %v2613, 2
    %v2619 = vxor.u32 %v2610, 2147483648
    %v2620 = vsel %vm2618, %v2619, %v2611
    %v2621 = vsel %vm2614, %v2617, %v2620
    %v2622 = vsel %vm2612, nan, %v2621
    %v2623 = vand.u32 2147483647, %v739
    %vm2624 = vcmp.le.f32.partialorder %v2623, 0.7853982
    %vm2625 = vcmp.lt.s32.totalorder %v739, 0
    %v2626 = vand.u32 %v739, 2139095040
    %v2627 = vshrl.u32 %v2626, 23
    %v2628 = vsub.s32 %v2627, 127
    %v2629 = vand.u32 2147483647, %v739
    %v2630 = vand.u32 %v2629, 8388607
    %v2631 = vor.u32 %v2630, 8388608
    %v2632 = vsub.s32 0, %v2631
    %v2633 = vadd.s32 %v2628, 1
    %vm2634 = vcmp.gt.s32.totalorder %v2633, 0
    %v2635 = vsel %vm2634, %v2633, 0
    %v2636 = vshrl.u32 %v2635, 5
    %v2637 = vand.u32 %v2635, 31
    %v2638 = vsub.s32 32, %v2637
    %v2639 = vshrl.u32 683565275, %v2638
    %v2640 = vshll.u32 683565275, %v2637
    %v2641 = vshrl.u32 2475754826, %v2638
    %v2642 = vor.u32 %v2640, %v2641
    %v2643 = vshll.u32 2475754826, %v2637
    %v2644 = vshrl.u32 2131351028, %v2638
    %v2645 = vor.u32 %v2643, %v2644
    %v2646 = vshll.u32 2131351028, %v2637
    %v2647 = vshrl.u32 2102212464, %v2638
    %v2648 = vor.u32 %v2646, %v2647
    %v2649 = vshll.u32 2102212464, %v2637
    %v2650 = vshrl.u32 920167782, %v2638
    %v2651 = vor.u32 %v2649, %v2650
    %v2652 = vshll.u32 920167782, %v2637
    %v2653 = vshrl.u32 1326507024, %v2638
    %v2654 = vor.u32 %v2652, %v2653
    %vm2655 = vcmp.lt.s32.totalorder %v2636, 1
    %vm2656 = vcmp.lt.s32.totalorder %v2636, 2
    %vm2657 = vcmp.lt.s32.totalorder %v2636, 3
    %vm2658 = vcmp.lt.s32.totalorder %v2636, 4
    %v2659 = vsel %vm2655, %v2639, %v2642
    %v2660 = vsel %vm2658, %v2648, 2102212464
    %v2661 = vsel %vm2657, %v2645, %v2660
    %v2662 = vsel %vm2656, %v2659, %v2661
    %v2663 = vsel %vm2655, %v2642, %v2645
    %v2664 = vsel %vm2658, %v2651, 920167782
    %v2665 = vsel %vm2657, %v2648, %v2664
    %v2666 = vsel %vm2656, %v2663, %v2665
    %v2667 = vsel %vm2655, %v2645, %v2648
    %v2668 = vsel %vm2658, %v2654, 1326507024
    %v2669 = vsel %vm2657, %v2651, %v2668
    %v2670 = vsel %vm2656, %v2667, %v2669
    %v2671 = vshll.u32 %v2631, 8
    %v2672 = vmul.u32.u64.compose %v2671, %v2670
    %v2673 = vextract.low.u32 %v2672
    %v2674 = vextract.high.u32 %v2672
    %v2675 = vmul.u32.u64.compose %v2671, %v2666
    %v2676 = vextract.low.u32 %v2675
    %v2677 = vextract.high.u32 %v2675
    %v2678 = vmul.u32 %v2671, %v2662
    %v2679 = vadd.s32 %v2674, %v2676
    %vm2680 = vc.u32 %v2674, %v2676
    %v2681 = vadd.s32 %v2677, 1
    %v2682 = vsel %vm2680, %v2681, %v2677
    %v2683 = vadd.s32 %v2678, %v2682
    %v2684 = vadd.s32 %v2683, 536870912
    %v2685 = vshrl.u32 %v2684, 30
    %v2686 = vshll.u32 %v2685, 30
    %v2687 = vsub.s32 %v2683, %v2686
    %vm2688 = vcmp.lt.s32.totalorder %v2687, 0
    %v2689 = vsub.s32 0, %v2687
    %v2690 = vsel %vm2688, %v2689, %v2687
    %v2691 = vclz %v2690
    %v2692 = vsub.s32 %v2691, 2
    %vm2693 = vcmp.gt.s32.totalorder 0, %v2692
    %v2694 = vsel %vm2693, 0, %v2692
    %v2695 = vsub.s32 32, %v2694
    %v2696 = vshll.u32 %v2687, %v2694
    %v2697 = vshrl.u32 %v2679, %v2695
    %v2698 = vor.u32 %v2696, %v2697
    %v2699 = vsub.s32 4294967266, %v2694
    %v2700 = vadd.s32 %v2699, 127
    %v2701 = vshll.u32 %v2700, 23
    %v2702 = vor.u32 4788187, %v2701
    %v2703 = vand.u32 2147483647, %v2702
    %v2705 = vcvt.s32.f32 %v2698
    %v2706 = vmul.f32 %v2705, %v2703
    %v2707 = vxor.u32 %v2706, 2147483648
    %v2708 = vsel %vm2625, %v2707, %v2706
    %v2709 = vsub.s32 4, %v2685
    %v2710 = vsel %vm2625, %v2709, %v2685
    %v2711 = vsel %vm2624, %v739, %v2708
    %v2712 = vsel %vm2624, 0, %v2710
    %v2713 = vcosq.f32.pop %v2711
    %v2714 = vsinq.f32.pop %v2711
    %vm2715 = vweird.f32 %v739
    %v2716 = vand.u32 %v2712, 3
    %vm2717 = vcmp.lt.s32.totalorder %v2716, 2
    %vm2718 = vcmp.eq.s32.totalorder %v2716, 0
    %v2719 = vxor.u32 %v2714, 2147483648
    %v2720 = vsel %vm2718, %v2713, %v2719
    %vm2721 = vcmp.eq.s32.totalorder %v2716, 2
    %v2722 = vxor.u32 %v2713, 2147483648
    %v2723 = vsel %vm2721, %v2722, %v2714
    %v2724 = vsel %vm2717, %v2720, %v2723
    %v2725 = vsel %vm2715, nan, %v2724
    %v2726 = vand.u32 2147483647, %v740
    %vm2727 = vcmp.le.f32.partialorder %v2726, 0.7853982
    %vm2728 = vcmp.lt.s32.totalorder %v740, 0
    %v2729 = vand.u32 %v740, 2139095040
    %v2730 = vshrl.u32 %v2729, 23
    %v2731 = vsub.s32 %v2730, 127
    %v2732 = vand.u32 2147483647, %v740
    %v2733 = vand.u32 %v2732, 8388607
    %v2734 = vor.u32 %v2733, 8388608
    %v2735 = vsub.s32 0, %v2734
    %v2736 = vadd.s32 %v2731, 1
    %vm2737 = vcmp.gt.s32.totalorder %v2736, 0
    %v2738 = vsel %vm2737, %v2736, 0
    %v2739 = vshrl.u32 %v2738, 5
    %v2740 = vand.u32 %v2738, 31
    %v2741 = vsub.s32 32, %v2740
    %v2742 = vshrl.u32 683565275, %v2741
    %v2743 = vshll.u32 683565275, %v2740
    %v2744 = vshrl.u32 2475754826, %v2741
    %v2745 = vor.u32 %v2743, %v2744
    %v2746 = vshll.u32 2475754826, %v2740
    %v2747 = vshrl.u32 2131351028, %v2741
    %v2748 = vor.u32 %v2746, %v2747
    %v2749 = vshll.u32 2131351028, %v2740
    %v2750 = vshrl.u32 2102212464, %v2741
    %v2751 = vor.u32 %v2749, %v2750
    %v2752 = vshll.u32 2102212464, %v2740
    %v2753 = vshrl.u32 920167782, %v2741
    %v2754 = vor.u32 %v2752, %v2753
    %v2755 = vshll.u32 920167782, %v2740
    %v2756 = vshrl.u32 1326507024, %v2741
    %v2757 = vor.u32 %v2755, %v2756
    %vm2758 = vcmp.lt.s32.totalorder %v2739, 1
    %vm2759 = vcmp.lt.s32.totalorder %v2739, 2
    %vm2760 = vcmp.lt.s32.totalorder %v2739, 3
    %vm2761 = vcmp.lt.s32.totalorder %v2739, 4
    %v2762 = vsel %vm2758, %v2742, %v2745
    %v2763 = vsel %vm2761, %v2751, 2102212464
    %v2764 = vsel %vm2760, %v2748, %v2763
    %v2765 = vsel %vm2759, %v2762, %v2764
    %v2766 = vsel %vm2758, %v2745, %v2748
    %v2767 = vsel %vm2761, %v2754, 920167782
    %v2768 = vsel %vm2760, %v2751, %v2767
    %v2769 = vsel %vm2759, %v2766, %v2768
    %v2770 = vsel %vm2758, %v2748, %v2751
    %v2771 = vsel %vm2761, %v2757, 1326507024
    %v2772 = vsel %vm2760, %v2754, %v2771
    %v2773 = vsel %vm2759, %v2770, %v2772
    %v2774 = vshll.u32 %v2734, 8
    %v2775 = vmul.u32.u64.compose %v2774, %v2773
    %v2776 = vextract.low.u32 %v2775
    %v2777 = vextract.high.u32 %v2775
    %v2778 = vmul.u32.u64.compose %v2774, %v2769
    %v2779 = vextract.low.u32 %v2778
    %v2780 = vextract.high.u32 %v2778
    %v2781 = vmul.u32 %v2774, %v2765
    %v2782 = vadd.s32 %v2777, %v2779
    %vm2783 = vc.u32 %v2777, %v2779
    %v2784 = vadd.s32 %v2780, 1
    %v2785 = vsel %vm2783, %v2784, %v2780
    %v2786 = vadd.s32 %v2781, %v2785
    %v2787 = vadd.s32 %v2786, 536870912
    %v2788 = vshrl.u32 %v2787, 30
    %v2789 = vshll.u32 %v2788, 30
    %v2790 = vsub.s32 %v2786, %v2789
    %vm2791 = vcmp.lt.s32.totalorder %v2790, 0
    %v2792 = vsub.s32 0, %v2790
    %v2793 = vsel %vm2791, %v2792, %v2790
    %v2794 = vclz %v2793
    %v2795 = vsub.s32 %v2794, 2
    %vm2796 = vcmp.gt.s32.totalorder 0, %v2795
    %v2797 = vsel %vm2796, 0, %v2795
    %v2798 = vsub.s32 32, %v2797
    %v2799 = vshll.u32 %v2790, %v2797
    %v2800 = vshrl.u32 %v2782, %v2798
    %v2801 = vor.u32 %v2799, %v2800
    %v2802 = vsub.s32 4294967266, %v2797
    %v2803 = vadd.s32 %v2802, 127
    %v2804 = vshll.u32 %v2803, 23
    %v2805 = vor.u32 4788187, %v2804
    %v2806 = vand.u32 2147483647, %v2805
    %v2808 = vcvt.s32.f32 %v2801
    %v2809 = vmul.f32 %v2808, %v2806
    %v2810 = vxor.u32 %v2809, 2147483648
    %v2811 = vsel %vm2728, %v2810, %v2809
    %v2812 = vsub.s32 4, %v2788
    %v2813 = vsel %vm2728, %v2812, %v2788
    %v2814 = vsel %vm2727, %v740, %v2811
    %v2815 = vsel %vm2727, 0, %v2813
    %v2816 = vcosq.f32.pop %v2814
    %v2817 = vsinq.f32.pop %v2814
    %vm2818 = vweird.f32 %v740
    %v2819 = vand.u32 %v2815, 3
    %vm2820 = vcmp.lt.s32.totalorder %v2819, 2
    %vm2821 = vcmp.eq.s32.totalorder %v2819, 0
    %v2822 = vxor.u32 %v2817, 2147483648
    %v2823 = vsel %vm2821, %v2816, %v2822
    %vm2824 = vcmp.eq.s32.totalorder %v2819, 2
    %v2825 = vxor.u32 %v2816, 2147483648
    %v2826 = vsel %vm2824, %v2825, %v2817
    %v2827 = vsel %vm2820, %v2823, %v2826
    %v2828 = vsel %vm2818, nan, %v2827
    %v2829 = vand.u32 2147483647, %v741
    %vm2830 = vcmp.le.f32.partialorder %v2829, 0.7853982
    %vm2831 = vcmp.lt.s32.totalorder %v741, 0
    %v2832 = vand.u32 %v741, 2139095040
    %v2833 = vshrl.u32 %v2832, 23
    %v2834 = vsub.s32 %v2833, 127
    %v2835 = vand.u32 2147483647, %v741
    %v2836 = vand.u32 %v2835, 8388607
    %v2837 = vor.u32 %v2836, 8388608
    %v2838 = vsub.s32 0, %v2837
    %v2839 = vadd.s32 %v2834, 1
    %vm2840 = vcmp.gt.s32.totalorder %v2839, 0
    %v2841 = vsel %vm2840, %v2839, 0
    %v2842 = vshrl.u32 %v2841, 5
    %v2843 = vand.u32 %v2841, 31
    %v2844 = vsub.s32 32, %v2843
    %v2845 = vshrl.u32 683565275, %v2844
    %v2846 = vshll.u32 683565275, %v2843
    %v2847 = vshrl.u32 2475754826, %v2844
    %v2848 = vor.u32 %v2846, %v2847
    %v2849 = vshll.u32 2475754826, %v2843
    %v2850 = vshrl.u32 2131351028, %v2844
    %v2851 = vor.u32 %v2849, %v2850
    %v2852 = vshll.u32 2131351028, %v2843
    %v2853 = vshrl.u32 2102212464, %v2844
    %v2854 = vor.u32 %v2852, %v2853
    %v2855 = vshll.u32 2102212464, %v2843
    %v2856 = vshrl.u32 920167782, %v2844
    %v2857 = vor.u32 %v2855, %v2856
    %v2858 = vshll.u32 920167782, %v2843
    %v2859 = vshrl.u32 1326507024, %v2844
    %v2860 = vor.u32 %v2858, %v2859
    %vm2861 = vcmp.lt.s32.totalorder %v2842, 1
    %vm2862 = vcmp.lt.s32.totalorder %v2842, 2
    %vm2863 = vcmp.lt.s32.totalorder %v2842, 3
    %vm2864 = vcmp.lt.s32.totalorder %v2842, 4
    %v2865 = vsel %vm2861, %v2845, %v2848
    %v2866 = vsel %vm2864, %v2854, 2102212464
    %v2867 = vsel %vm2863, %v2851, %v2866
    %v2868 = vsel %vm2862, %v2865, %v2867
    %v2869 = vsel %vm2861, %v2848, %v2851
    %v2870 = vsel %vm2864, %v2857, 920167782
    %v2871 = vsel %vm2863, %v2854, %v2870
    %v2872 = vsel %vm2862, %v2869, %v2871
    %v2873 = vsel %vm2861, %v2851, %v2854
    %v2874 = vsel %vm2864, %v2860, 1326507024
    %v2875 = vsel %vm2863, %v2857, %v2874
    %v2876 = vsel %vm2862, %v2873, %v2875
    %v2877 = vshll.u32 %v2837, 8
    %v2878 = vmul.u32.u64.compose %v2877, %v2876
    %v2879 = vextract.low.u32 %v2878
    %v2880 = vextract.high.u32 %v2878
    %v2881 = vmul.u32.u64.compose %v2877, %v2872
    %v2882 = vextract.low.u32 %v2881
    %v2883 = vextract.high.u32 %v2881
    %v2884 = vmul.u32 %v2877, %v2868
    %v2885 = vadd.s32 %v2880, %v2882
    %vm2886 = vc.u32 %v2880, %v2882
    %v2887 = vadd.s32 %v2883, 1
    %v2888 = vsel %vm2886, %v2887, %v2883
    %v2889 = vadd.s32 %v2884, %v2888
    %v2890 = vadd.s32 %v2889, 536870912
    %v2891 = vshrl.u32 %v2890, 30
    %v2892 = vshll.u32 %v2891, 30
    %v2893 = vsub.s32 %v2889, %v2892
    %vm2894 = vcmp.lt.s32.totalorder %v2893, 0
    %v2895 = vsub.s32 0, %v2893
    %v2896 = vsel %vm2894, %v2895, %v2893
    %v2897 = vclz %v2896
    %v2898 = vsub.s32 %v2897, 2
    %vm2899 = vcmp.gt.s32.totalorder 0, %v2898
    %v2900 = vsel %vm2899, 0, %v2898
    %v2901 = vsub.s32 32, %v2900
    %v2902 = vshll.u32 %v2893, %v2900
    %v2903 = vshrl.u32 %v2885, %v2901
    %v2904 = vor.u32 %v2902, %v2903
    %v2905 = vsub.s32 4294967266, %v2900
    %v2906 = vadd.s32 %v2905, 127
    %v2907 = vshll.u32 %v2906, 23
    %v2908 = vor.u32 4788187, %v2907
    %v2909 = vand.u32 2147483647, %v2908
    %v2911 = vcvt.s32.f32 %v2904
    %v2912 = vmul.f32 %v2911, %v2909
    %v2913 = vxor.u32 %v2912, 2147483648
    %v2914 = vsel %vm2831, %v2913, %v2912
    %v2915 = vsub.s32 4, %v2891
    %v2916 = vsel %vm2831, %v2915, %v2891
    %v2917 = vsel %vm2830, %v741, %v2914
    %v2918 = vsel %vm2830, 0, %v2916
    %v2919 = vcosq.f32.pop %v2917
    %v2920 = vsinq.f32.pop %v2917
    %vm2921 = vweird.f32 %v741
    %v2922 = vand.u32 %v2918, 3
    %vm2923 = vcmp.lt.s32.totalorder %v2922, 2
    %vm2924 = vcmp.eq.s32.totalorder %v2922, 0
    %v2925 = vxor.u32 %v2920, 2147483648
    %v2926 = vsel %vm2924, %v2919, %v2925
    %vm2927 = vcmp.eq.s32.totalorder %v2922, 2
    %v2928 = vxor.u32 %v2919, 2147483648
    %v2929 = vsel %vm2927, %v2928, %v2920
    %v2930 = vsel %vm2923, %v2926, %v2929
    %v2931 = vsel %vm2921, nan, %v2930
    %v2932 = vand.u32 2147483647, %v742
    %vm2933 = vcmp.le.f32.partialorder %v2932, 0.7853982
    %vm2934 = vcmp.lt.s32.totalorder %v742, 0
    %v2935 = vand.u32 %v742, 2139095040
    %v2936 = vshrl.u32 %v2935, 23
    %v2937 = vsub.s32 %v2936, 127
    %v2938 = vand.u32 2147483647, %v742
    %v2939 = vand.u32 %v2938, 8388607
    %v2940 = vor.u32 %v2939, 8388608
    %v2941 = vsub.s32 0, %v2940
    %v2942 = vadd.s32 %v2937, 1
    %vm2943 = vcmp.gt.s32.totalorder %v2942, 0
    %v2944 = vsel %vm2943, %v2942, 0
    %v2945 = vshrl.u32 %v2944, 5
    %v2946 = vand.u32 %v2944, 31
    %v2947 = vsub.s32 32, %v2946
    %v2948 = vshrl.u32 683565275, %v2947
    %v2949 = vshll.u32 683565275, %v2946
    %v2950 = vshrl.u32 2475754826, %v2947
    %v2951 = vor.u32 %v2949, %v2950
    %v2952 = vshll.u32 2475754826, %v2946
    %v2953 = vshrl.u32 2131351028, %v2947
    %v2954 = vor.u32 %v2952, %v2953
    %v2955 = vshll.u32 2131351028, %v2946
    %v2956 = vshrl.u32 2102212464, %v2947
    %v2957 = vor.u32 %v2955, %v2956
    %v2958 = vshll.u32 2102212464, %v2946
    %v2959 = vshrl.u32 920167782, %v2947
    %v2960 = vor.u32 %v2958, %v2959
    %v2961 = vshll.u32 920167782, %v2946
    %v2962 = vshrl.u32 1326507024, %v2947
    %v2963 = vor.u32 %v2961, %v2962
    %vm2964 = vcmp.lt.s32.totalorder %v2945, 1
    %vm2965 = vcmp.lt.s32.totalorder %v2945, 2
    %vm2966 = vcmp.lt.s32.totalorder %v2945, 3
    %vm2967 = vcmp.lt.s32.totalorder %v2945, 4
    %v2968 = vsel %vm2964, %v2948, %v2951
    %v2969 = vsel %vm2967, %v2957, 2102212464
    %v2970 = vsel %vm2966, %v2954, %v2969
    %v2971 = vsel %vm2965, %v2968, %v2970
    %v2972 = vsel %vm2964, %v2951, %v2954
    %v2973 = vsel %vm2967, %v2960, 920167782
    %v2974 = vsel %vm2966, %v2957, %v2973
    %v2975 = vsel %vm2965, %v2972, %v2974
    %v2976 = vsel %vm2964, %v2954, %v2957
    %v2977 = vsel %vm2967, %v2963, 1326507024
    %v2978 = vsel %vm2966, %v2960, %v2977
    %v2979 = vsel %vm2965, %v2976, %v2978
    %v2980 = vshll.u32 %v2940, 8
    %v2981 = vmul.u32.u64.compose %v2980, %v2979
    %v2982 = vextract.low.u32 %v2981
    %v2983 = vextract.high.u32 %v2981
    %v2984 = vmul.u32.u64.compose %v2980, %v2975
    %v2985 = vextract.low.u32 %v2984
    %v2986 = vextract.high.u32 %v2984
    %v2987 = vmul.u32 %v2980, %v2971
    %v2988 = vadd.s32 %v2983, %v2985
    %vm2989 = vc.u32 %v2983, %v2985
    %v2990 = vadd.s32 %v2986, 1
    %v2991 = vsel %vm2989, %v2990, %v2986
    %v2992 = vadd.s32 %v2987, %v2991
    %v2993 = vadd.s32 %v2992, 536870912
    %v2994 = vshrl.u32 %v2993, 30
    %v2995 = vshll.u32 %v2994, 30
    %v2996 = vsub.s32 %v2992, %v2995
    %vm2997 = vcmp.lt.s32.totalorder %v2996, 0
    %v2998 = vsub.s32 0, %v2996
    %v2999 = vsel %vm2997, %v2998, %v2996
    %v3000 = vclz %v2999
    %v3001 = vsub.s32 %v3000, 2
    %vm3002 = vcmp.gt.s32.totalorder 0, %v3001
    %v3003 = vsel %vm3002, 0, %v3001
    %v3004 = vsub.s32 32, %v3003
    %v3005 = vshll.u32 %v2996, %v3003
    %v3006 = vshrl.u32 %v2988, %v3004
    %v3007 = vor.u32 %v3005, %v3006
    %v3008 = vsub.s32 4294967266, %v3003
    %v3009 = vadd.s32 %v3008, 127
    %v3010 = vshll.u32 %v3009, 23
    %v3011 = vor.u32 4788187, %v3010
    %v3012 = vand.u32 2147483647, %v3011
    %v3014 = vcvt.s32.f32 %v3007
    %v3015 = vmul.f32 %v3014, %v3012
    %v3016 = vxor.u32 %v3015, 2147483648
    %v3017 = vsel %vm2934, %v3016, %v3015
    %v3018 = vsub.s32 4, %v2994
    %v3019 = vsel %vm2934, %v3018, %v2994
    %v3020 = vsel %vm2933, %v742, %v3017
    %v3021 = vsel %vm2933, 0, %v3019
    %v3022 = vcosq.f32.pop %v3020
    %v3023 = vsinq.f32.pop %v3020
    %vm3024 = vweird.f32 %v742
    %v3025 = vand.u32 %v3021, 3
    %vm3026 = vcmp.lt.s32.totalorder %v3025, 2
    %vm3027 = vcmp.eq.s32.totalorder %v3025, 0
    %v3028 = vxor.u32 %v3023, 2147483648
    %v3029 = vsel %vm3027, %v3022, %v3028
    %vm3030 = vcmp.eq.s32.totalorder %v3025, 2
    %v3031 = vxor.u32 %v3022, 2147483648
    %v3032 = vsel %vm3030, %v3031, %v3023
    %v3033 = vsel %vm3026, %v3029, %v3032
    %v3034 = vsel %vm3024, nan, %v3033
    %v3035 = vand.u32 2147483647, %v743
    %vm3036 = vcmp.le.f32.partialorder %v3035, 0.7853982
    %vm3037 = vcmp.lt.s32.totalorder %v743, 0
    %v3038 = vand.u32 %v743, 2139095040
    %v3039 = vshrl.u32 %v3038, 23
    %v3040 = vsub.s32 %v3039, 127
    %v3041 = vand.u32 2147483647, %v743
    %v3042 = vand.u32 %v3041, 8388607
    %v3043 = vor.u32 %v3042, 8388608
    %v3044 = vsub.s32 0, %v3043
    %v3045 = vadd.s32 %v3040, 1
    %vm3046 = vcmp.gt.s32.totalorder %v3045, 0
    %v3047 = vsel %vm3046, %v3045, 0
    %v3048 = vshrl.u32 %v3047, 5
    %v3049 = vand.u32 %v3047, 31
    %v3050 = vsub.s32 32, %v3049
    %v3051 = vshrl.u32 683565275, %v3050
    %v3052 = vshll.u32 683565275, %v3049
    %v3053 = vshrl.u32 2475754826, %v3050
    %v3054 = vor.u32 %v3052, %v3053
    %v3055 = vshll.u32 2475754826, %v3049
    %v3056 = vshrl.u32 2131351028, %v3050
    %v3057 = vor.u32 %v3055, %v3056
    %v3058 = vshll.u32 2131351028, %v3049
    %v3059 = vshrl.u32 2102212464, %v3050
    %v3060 = vor.u32 %v3058, %v3059
    %v3061 = vshll.u32 2102212464, %v3049
    %v3062 = vshrl.u32 920167782, %v3050
    %v3063 = vor.u32 %v3061, %v3062
    %v3064 = vshll.u32 920167782, %v3049
    %v3065 = vshrl.u32 1326507024, %v3050
    %v3066 = vor.u32 %v3064, %v3065
    %vm3067 = vcmp.lt.s32.totalorder %v3048, 1
    %vm3068 = vcmp.lt.s32.totalorder %v3048, 2
    %vm3069 = vcmp.lt.s32.totalorder %v3048, 3
    %vm3070 = vcmp.lt.s32.totalorder %v3048, 4
    %v3071 = vsel %vm3067, %v3051, %v3054
    %v3072 = vsel %vm3070, %v3060, 2102212464
    %v3073 = vsel %vm3069, %v3057, %v3072
    %v3074 = vsel %vm3068, %v3071, %v3073
    %v3075 = vsel %vm3067, %v3054, %v3057
    %v3076 = vsel %vm3070, %v3063, 920167782
    %v3077 = vsel %vm3069, %v3060, %v3076
    %v3078 = vsel %vm3068, %v3075, %v3077
    %v3079 = vsel %vm3067, %v3057, %v3060
    %v3080 = vsel %vm3070, %v3066, 1326507024
    %v3081 = vsel %vm3069, %v3063, %v3080
    %v3082 = vsel %vm3068, %v3079, %v3081
    %v3083 = vshll.u32 %v3043, 8
    %v3084 = vmul.u32.u64.compose %v3083, %v3082
    %v3085 = vextract.low.u32 %v3084
    %v3086 = vextract.high.u32 %v3084
    %v3087 = vmul.u32.u64.compose %v3083, %v3078
    %v3088 = vextract.low.u32 %v3087
    %v3089 = vextract.high.u32 %v3087
    %v3090 = vmul.u32 %v3083, %v3074
    %v3091 = vadd.s32 %v3086, %v3088
    %vm3092 = vc.u32 %v3086, %v3088
    %v3093 = vadd.s32 %v3089, 1
    %v3094 = vsel %vm3092, %v3093, %v3089
    %v3095 = vadd.s32 %v3090, %v3094
    %v3096 = vadd.s32 %v3095, 536870912
    %v3097 = vshrl.u32 %v3096, 30
    %v3098 = vshll.u32 %v3097, 30
    %v3099 = vsub.s32 %v3095, %v3098
    %vm3100 = vcmp.lt.s32.totalorder %v3099, 0
    %v3101 = vsub.s32 0, %v3099
    %v3102 = vsel %vm3100, %v3101, %v3099
    %v3103 = vclz %v3102
    %v3104 = vsub.s32 %v3103, 2
    %vm3105 = vcmp.gt.s32.totalorder 0, %v3104
    %v3106 = vsel %vm3105, 0, %v3104
    %v3107 = vsub.s32 32, %v3106
    %v3108 = vshll.u32 %v3099, %v3106
    %v3109 = vshrl.u32 %v3091, %v3107
    %v3110 = vor.u32 %v3108, %v3109
    %v3111 = vsub.s32 4294967266, %v3106
    %v3112 = vadd.s32 %v3111, 127
    %v3113 = vshll.u32 %v3112, 23
    %v3114 = vor.u32 4788187, %v3113
    %v3115 = vand.u32 2147483647, %v3114
    %v3117 = vcvt.s32.f32 %v3110
    %v3118 = vmul.f32 %v3117, %v3115
    %v3119 = vxor.u32 %v3118, 2147483648
    %v3120 = vsel %vm3037, %v3119, %v3118
    %v3121 = vsub.s32 4, %v3097
    %v3122 = vsel %vm3037, %v3121, %v3097
    %v3123 = vsel %vm3036, %v743, %v3120
    %v3124 = vsel %vm3036, 0, %v3122
    %v3125 = vcosq.f32.pop %v3123
    %v3126 = vsinq.f32.pop %v3123
    %vm3127 = vweird.f32 %v743
    %v3128 = vand.u32 %v3124, 3
    %vm3129 = vcmp.lt.s32.totalorder %v3128, 2
    %vm3130 = vcmp.eq.s32.totalorder %v3128, 0
    %v3131 = vxor.u32 %v3126, 2147483648
    %v3132 = vsel %vm3130, %v3125, %v3131
    %vm3133 = vcmp.eq.s32.totalorder %v3128, 2
    %v3134 = vxor.u32 %v3125, 2147483648
    %v3135 = vsel %vm3133, %v3134, %v3126
    %v3136 = vsel %vm3129, %v3132, %v3135
    %v3137 = vsel %vm3127, nan, %v3136
    %v3138 = vand.u32 2147483647, %v744
    %vm3139 = vcmp.le.f32.partialorder %v3138, 0.7853982
    %vm3140 = vcmp.lt.s32.totalorder %v744, 0
    %v3141 = vand.u32 %v744, 2139095040
    %v3142 = vshrl.u32 %v3141, 23
    %v3143 = vsub.s32 %v3142, 127
    %v3144 = vand.u32 2147483647, %v744
    %v3145 = vand.u32 %v3144, 8388607
    %v3146 = vor.u32 %v3145, 8388608
    %v3147 = vsub.s32 0, %v3146
    %v3148 = vadd.s32 %v3143, 1
    %vm3149 = vcmp.gt.s32.totalorder %v3148, 0
    %v3150 = vsel %vm3149, %v3148, 0
    %v3151 = vshrl.u32 %v3150, 5
    %v3152 = vand.u32 %v3150, 31
    %v3153 = vsub.s32 32, %v3152
    %v3154 = vshrl.u32 683565275, %v3153
    %v3155 = vshll.u32 683565275, %v3152
    %v3156 = vshrl.u32 2475754826, %v3153
    %v3157 = vor.u32 %v3155, %v3156
    %v3158 = vshll.u32 2475754826, %v3152
    %v3159 = vshrl.u32 2131351028, %v3153
    %v3160 = vor.u32 %v3158, %v3159
    %v3161 = vshll.u32 2131351028, %v3152
    %v3162 = vshrl.u32 2102212464, %v3153
    %v3163 = vor.u32 %v3161, %v3162
    %v3164 = vshll.u32 2102212464, %v3152
    %v3165 = vshrl.u32 920167782, %v3153
    %v3166 = vor.u32 %v3164, %v3165
    %v3167 = vshll.u32 920167782, %v3152
    %v3168 = vshrl.u32 1326507024, %v3153
    %v3169 = vor.u32 %v3167, %v3168
    %vm3170 = vcmp.lt.s32.totalorder %v3151, 1
    %vm3171 = vcmp.lt.s32.totalorder %v3151, 2
    %vm3172 = vcmp.lt.s32.totalorder %v3151, 3
    %vm3173 = vcmp.lt.s32.totalorder %v3151, 4
    %v3174 = vsel %vm3170, %v3154, %v3157
    %v3175 = vsel %vm3173, %v3163, 2102212464
    %v3176 = vsel %vm3172, %v3160, %v3175
    %v3177 = vsel %vm3171, %v3174, %v3176
    %v3178 = vsel %vm3170, %v3157, %v3160
    %v3179 = vsel %vm3173, %v3166, 920167782
    %v3180 = vsel %vm3172, %v3163, %v3179
    %v3181 = vsel %vm3171, %v3178, %v3180
    %v3182 = vsel %vm3170, %v3160, %v3163
    %v3183 = vsel %vm3173, %v3169, 1326507024
    %v3184 = vsel %vm3172, %v3166, %v3183
    %v3185 = vsel %vm3171, %v3182, %v3184
    %v3186 = vshll.u32 %v3146, 8
    %v3187 = vmul.u32.u64.compose %v3186, %v3185
    %v3188 = vextract.low.u32 %v3187
    %v3189 = vextract.high.u32 %v3187
    %v3190 = vmul.u32.u64.compose %v3186, %v3181
    %v3191 = vextract.low.u32 %v3190
    %v3192 = vextract.high.u32 %v3190
    %v3193 = vmul.u32 %v3186, %v3177
    %v3194 = vadd.s32 %v3189, %v3191
    %vm3195 = vc.u32 %v3189, %v3191
    %v3196 = vadd.s32 %v3192, 1
    %v3197 = vsel %vm3195, %v3196, %v3192
    %v3198 = vadd.s32 %v3193, %v3197
    %v3199 = vadd.s32 %v3198, 536870912
    %v3200 = vshrl.u32 %v3199, 30
    %v3201 = vshll.u32 %v3200, 30
    %v3202 = vsub.s32 %v3198, %v3201
    %vm3203 = vcmp.lt.s32.totalorder %v3202, 0
    %v3204 = vsub.s32 0, %v3202
    %v3205 = vsel %vm3203, %v3204, %v3202
    %v3206 = vclz %v3205
    %v3207 = vsub.s32 %v3206, 2
    %vm3208 = vcmp.gt.s32.totalorder 0, %v3207
    %v3209 = vsel %vm3208, 0, %v3207
    %v3210 = vsub.s32 32, %v3209
    %v3211 = vshll.u32 %v3202, %v3209
    %v3212 = vshrl.u32 %v3194, %v3210
    %v3213 = vor.u32 %v3211, %v3212
    %v3214 = vsub.s32 4294967266, %v3209
    %v3215 = vadd.s32 %v3214, 127
    %v3216 = vshll.u32 %v3215, 23
    %v3217 = vor.u32 4788187, %v3216
    %v3218 = vand.u32 2147483647, %v3217
    %v3220 = vcvt.s32.f32 %v3213
    %v3221 = vmul.f32 %v3220, %v3218
    %v3222 = vxor.u32 %v3221, 2147483648
    %v3223 = vsel %vm3140, %v3222, %v3221
    %v3224 = vsub.s32 4, %v3200
    %v3225 = vsel %vm3140, %v3224, %v3200
    %v3226 = vsel %vm3139, %v744, %v3223
    %v3227 = vsel %vm3139, 0, %v3225
    %v3228 = vcosq.f32.pop %v3226
    %v3229 = vsinq.f32.pop %v3226
    %vm3230 = vweird.f32 %v744
    %v3231 = vand.u32 %v3227, 3
    %vm3232 = vcmp.lt.s32.totalorder %v3231, 2
    %vm3233 = vcmp.eq.s32.totalorder %v3231, 0
    %v3234 = vxor.u32 %v3229, 2147483648
    %v3235 = vsel %vm3233, %v3228, %v3234
    %vm3236 = vcmp.eq.s32.totalorder %v3231, 2
    %v3237 = vxor.u32 %v3228, 2147483648
    %v3238 = vsel %vm3236, %v3237, %v3229
    %v3239 = vsel %vm3232, %v3235, %v3238
    %v3240 = vsel %vm3230, nan, %v3239
    %v3241 = vand.u32 2147483647, %v745
    %vm3242 = vcmp.le.f32.partialorder %v3241, 0.7853982
    %vm3243 = vcmp.lt.s32.totalorder %v745, 0
    %v3244 = vand.u32 %v745, 2139095040
    %v3245 = vshrl.u32 %v3244, 23
    %v3246 = vsub.s32 %v3245, 127
    %v3247 = vand.u32 2147483647, %v745
    %v3248 = vand.u32 %v3247, 8388607
    %v3249 = vor.u32 %v3248, 8388608
    %v3250 = vsub.s32 0, %v3249
    %v3251 = vadd.s32 %v3246, 1
    %vm3252 = vcmp.gt.s32.totalorder %v3251, 0
    %v3253 = vsel %vm3252, %v3251, 0
    %v3254 = vshrl.u32 %v3253, 5
    %v3255 = vand.u32 %v3253, 31
    %v3256 = vsub.s32 32, %v3255
    %v3257 = vshrl.u32 683565275, %v3256
    %v3258 = vshll.u32 683565275, %v3255
    %v3259 = vshrl.u32 2475754826, %v3256
    %v3260 = vor.u32 %v3258, %v3259
    %v3261 = vshll.u32 2475754826, %v3255
    %v3262 = vshrl.u32 2131351028, %v3256
    %v3263 = vor.u32 %v3261, %v3262
    %v3264 = vshll.u32 2131351028, %v3255
    %v3265 = vshrl.u32 2102212464, %v3256
    %v3266 = vor.u32 %v3264, %v3265
    %v3267 = vshll.u32 2102212464, %v3255
    %v3268 = vshrl.u32 920167782, %v3256
    %v3269 = vor.u32 %v3267, %v3268
    %v3270 = vshll.u32 920167782, %v3255
    %v3271 = vshrl.u32 1326507024, %v3256
    %v3272 = vor.u32 %v3270, %v3271
    %vm3273 = vcmp.lt.s32.totalorder %v3254, 1
    %vm3274 = vcmp.lt.s32.totalorder %v3254, 2
    %vm3275 = vcmp.lt.s32.totalorder %v3254, 3
    %vm3276 = vcmp.lt.s32.totalorder %v3254, 4
    %v3277 = vsel %vm3273, %v3257, %v3260
    %v3278 = vsel %vm3276, %v3266, 2102212464
    %v3279 = vsel %vm3275, %v3263, %v3278
    %v3280 = vsel %vm3274, %v3277, %v3279
    %v3281 = vsel %vm3273, %v3260, %v3263
    %v3282 = vsel %vm3276, %v3269, 920167782
    %v3283 = vsel %vm3275, %v3266, %v3282
    %v3284 = vsel %vm3274, %v3281, %v3283
    %v3285 = vsel %vm3273, %v3263, %v3266
    %v3286 = vsel %vm3276, %v3272, 1326507024
    %v3287 = vsel %vm3275, %v3269, %v3286
    %v3288 = vsel %vm3274, %v3285, %v3287
    %v3289 = vshll.u32 %v3249, 8
    %v3290 = vmul.u32.u64.compose %v3289, %v3288
    %v3291 = vextract.low.u32 %v3290
    %v3292 = vextract.high.u32 %v3290
    %v3293 = vmul.u32.u64.compose %v3289, %v3284
    %v3294 = vextract.low.u32 %v3293
    %v3295 = vextract.high.u32 %v3293
    %v3296 = vmul.u32 %v3289, %v3280
    %v3297 = vadd.s32 %v3292, %v3294
    %vm3298 = vc.u32 %v3292, %v3294
    %v3299 = vadd.s32 %v3295, 1
    %v3300 = vsel %vm3298, %v3299, %v3295
    %v3301 = vadd.s32 %v3296, %v3300
    %v3302 = vadd.s32 %v3301, 536870912
    %v3303 = vshrl.u32 %v3302, 30
    %v3304 = vshll.u32 %v3303, 30
    %v3305 = vsub.s32 %v3301, %v3304
    %vm3306 = vcmp.lt.s32.totalorder %v3305, 0
    %v3307 = vsub.s32 0, %v3305
    %v3308 = vsel %vm3306, %v3307, %v3305
    %v3309 = vclz %v3308
    %v3310 = vsub.s32 %v3309, 2
    %vm3311 = vcmp.gt.s32.totalorder 0, %v3310
    %v3312 = vsel %vm3311, 0, %v3310
    %v3313 = vsub.s32 32, %v3312
    %v3314 = vshll.u32 %v3305, %v3312
    %v3315 = vshrl.u32 %v3297, %v3313
    %v3316 = vor.u32 %v3314, %v3315
    %v3317 = vsub.s32 4294967266, %v3312
    %v3318 = vadd.s32 %v3317, 127
    %v3319 = vshll.u32 %v3318, 23
    %v3320 = vor.u32 4788187, %v3319
    %v3321 = vand.u32 2147483647, %v3320
    %v3323 = vcvt.s32.f32 %v3316
    %v3324 = vmul.f32 %v3323, %v3321
    %v3325 = vxor.u32 %v3324, 2147483648
    %v3326 = vsel %vm3243, %v3325, %v3324
    %v3327 = vsub.s32 4, %v3303
    %v3328 = vsel %vm3243, %v3327, %v3303
    %v3329 = vsel %vm3242, %v745, %v3326
    %v3330 = vsel %vm3242, 0, %v3328
    %v3331 = vcosq.f32.pop %v3329
    %v3332 = vsinq.f32.pop %v3329
    %vm3333 = vweird.f32 %v745
    %v3334 = vand.u32 %v3330, 3
    %vm3335 = vcmp.lt.s32.totalorder %v3334, 2
    %vm3336 = vcmp.eq.s32.totalorder %v3334, 0
    %v3337 = vxor.u32 %v3332, 2147483648
    %v3338 = vsel %vm3336, %v3331, %v3337
    %vm3339 = vcmp.eq.s32.totalorder %v3334, 2
    %v3340 = vxor.u32 %v3331, 2147483648
    %v3341 = vsel %vm3339, %v3340, %v3332
    %v3342 = vsel %vm3335, %v3338, %v3341
    %v3343 = vsel %vm3333, nan, %v3342
    %v3344 = vand.u32 2147483647, %v746
    %vm3345 = vcmp.le.f32.partialorder %v3344, 0.7853982
    %vm3346 = vcmp.lt.s32.totalorder %v746, 0
    %v3347 = vand.u32 %v746, 2139095040
    %v3348 = vshrl.u32 %v3347, 23
    %v3349 = vsub.s32 %v3348, 127
    %v3350 = vand.u32 2147483647, %v746
    %v3351 = vand.u32 %v3350, 8388607
    %v3352 = vor.u32 %v3351, 8388608
    %v3353 = vsub.s32 0, %v3352
    %v3354 = vadd.s32 %v3349, 1
    %vm3355 = vcmp.gt.s32.totalorder %v3354, 0
    %v3356 = vsel %vm3355, %v3354, 0
    %v3357 = vshrl.u32 %v3356, 5
    %v3358 = vand.u32 %v3356, 31
    %v3359 = vsub.s32 32, %v3358
    %v3360 = vshrl.u32 683565275, %v3359
    %v3361 = vshll.u32 683565275, %v3358
    %v3362 = vshrl.u32 2475754826, %v3359
    %v3363 = vor.u32 %v3361, %v3362
    %v3364 = vshll.u32 2475754826, %v3358
    %v3365 = vshrl.u32 2131351028, %v3359
    %v3366 = vor.u32 %v3364, %v3365
    %v3367 = vshll.u32 2131351028, %v3358
    %v3368 = vshrl.u32 2102212464, %v3359
    %v3369 = vor.u32 %v3367, %v3368
    %v3370 = vshll.u32 2102212464, %v3358
    %v3371 = vshrl.u32 920167782, %v3359
    %v3372 = vor.u32 %v3370, %v3371
    %v3373 = vshll.u32 920167782, %v3358
    %v3374 = vshrl.u32 1326507024, %v3359
    %v3375 = vor.u32 %v3373, %v3374
    %vm3376 = vcmp.lt.s32.totalorder %v3357, 1
    %vm3377 = vcmp.lt.s32.totalorder %v3357, 2
    %vm3378 = vcmp.lt.s32.totalorder %v3357, 3
    %vm3379 = vcmp.lt.s32.totalorder %v3357, 4
    %v3380 = vsel %vm3376, %v3360, %v3363
    %v3381 = vsel %vm3379, %v3369, 2102212464
    %v3382 = vsel %vm3378, %v3366, %v3381
    %v3383 = vsel %vm3377, %v3380, %v3382
    %v3384 = vsel %vm3376, %v3363, %v3366
    %v3385 = vsel %vm3379, %v3372, 920167782
    %v3386 = vsel %vm3378, %v3369, %v3385
    %v3387 = vsel %vm3377, %v3384, %v3386
    %v3388 = vsel %vm3376, %v3366, %v3369
    %v3389 = vsel %vm3379, %v3375, 1326507024
    %v3390 = vsel %vm3378, %v3372, %v3389
    %v3391 = vsel %vm3377, %v3388, %v3390
    %v3392 = vshll.u32 %v3352, 8
    %v3393 = vmul.u32.u64.compose %v3392, %v3391
    %v3394 = vextract.low.u32 %v3393
    %v3395 = vextract.high.u32 %v3393
    %v3396 = vmul.u32.u64.compose %v3392, %v3387
    %v3397 = vextract.low.u32 %v3396
    %v3398 = vextract.high.u32 %v3396
    %v3399 = vmul.u32 %v3392, %v3383
    %v3400 = vadd.s32 %v3395, %v3397
    %vm3401 = vc.u32 %v3395, %v3397
    %v3402 = vadd.s32 %v3398, 1
    %v3403 = vsel %vm3401, %v3402, %v3398
    %v3404 = vadd.s32 %v3399, %v3403
    %v3405 = vadd.s32 %v3404, 536870912
    %v3406 = vshrl.u32 %v3405, 30
    %v3407 = vshll.u32 %v3406, 30
    %v3408 = vsub.s32 %v3404, %v3407
    %vm3409 = vcmp.lt.s32.totalorder %v3408, 0
    %v3410 = vsub.s32 0, %v3408
    %v3411 = vsel %vm3409, %v3410, %v3408
    %v3412 = vclz %v3411
    %v3413 = vsub.s32 %v3412, 2
    %vm3414 = vcmp.gt.s32.totalorder 0, %v3413
    %v3415 = vsel %vm3414, 0, %v3413
    %v3416 = vsub.s32 32, %v3415
    %v3417 = vshll.u32 %v3408, %v3415
    %v3418 = vshrl.u32 %v3400, %v3416
    %v3419 = vor.u32 %v3417, %v3418
    %v3420 = vsub.s32 4294967266, %v3415
    %v3421 = vadd.s32 %v3420, 127
    %v3422 = vshll.u32 %v3421, 23
    %v3423 = vor.u32 4788187, %v3422
    %v3424 = vand.u32 2147483647, %v3423
    %v3426 = vcvt.s32.f32 %v3419
    %v3427 = vmul.f32 %v3426, %v3424
    %v3428 = vxor.u32 %v3427, 2147483648
    %v3429 = vsel %vm3346, %v3428, %v3427
    %v3430 = vsub.s32 4, %v3406
    %v3431 = vsel %vm3346, %v3430, %v3406
    %v3432 = vsel %vm3345, %v746, %v3429
    %v3433 = vsel %vm3345, 0, %v3431
    %v3434 = vcosq.f32.pop %v3432
    %v3435 = vsinq.f32.pop %v3432
    %vm3436 = vweird.f32 %v746
    %v3437 = vand.u32 %v3433, 3
    %vm3438 = vcmp.lt.s32.totalorder %v3437, 2
    %vm3439 = vcmp.eq.s32.totalorder %v3437, 0
    %v3440 = vxor.u32 %v3435, 2147483648
    %v3441 = vsel %vm3439, %v3434, %v3440
    %vm3442 = vcmp.eq.s32.totalorder %v3437, 2
    %v3443 = vxor.u32 %v3434, 2147483648
    %v3444 = vsel %vm3442, %v3443, %v3435
    %v3445 = vsel %vm3438, %v3441, %v3444
    %v3446 = vsel %vm3436, nan, %v3445
    %v3447 = vand.u32 2147483647, %v747
    %vm3448 = vcmp.le.f32.partialorder %v3447, 0.7853982
    %vm3449 = vcmp.lt.s32.totalorder %v747, 0
    %v3450 = vand.u32 %v747, 2139095040
    %v3451 = vshrl.u32 %v3450, 23
    %v3452 = vsub.s32 %v3451, 127
    %v3453 = vand.u32 2147483647, %v747
    %v3454 = vand.u32 %v3453, 8388607
    %v3455 = vor.u32 %v3454, 8388608
    %v3456 = vsub.s32 0, %v3455
    %v3457 = vadd.s32 %v3452, 1
    %vm3458 = vcmp.gt.s32.totalorder %v3457, 0
    %v3459 = vsel %vm3458, %v3457, 0
    %v3460 = vshrl.u32 %v3459, 5
    %v3461 = vand.u32 %v3459, 31
    %v3462 = vsub.s32 32, %v3461
    %v3463 = vshrl.u32 683565275, %v3462
    %v3464 = vshll.u32 683565275, %v3461
    %v3465 = vshrl.u32 2475754826, %v3462
    %v3466 = vor.u32 %v3464, %v3465
    %v3467 = vshll.u32 2475754826, %v3461
    %v3468 = vshrl.u32 2131351028, %v3462
    %v3469 = vor.u32 %v3467, %v3468
    %v3470 = vshll.u32 2131351028, %v3461
    %v3471 = vshrl.u32 2102212464, %v3462
    %v3472 = vor.u32 %v3470, %v3471
    %v3473 = vshll.u32 2102212464, %v3461
    %v3474 = vshrl.u32 920167782, %v3462
    %v3475 = vor.u32 %v3473, %v3474
    %v3476 = vshll.u32 920167782, %v3461
    %v3477 = vshrl.u32 1326507024, %v3462
    %v3478 = vor.u32 %v3476, %v3477
    %vm3479 = vcmp.lt.s32.totalorder %v3460, 1
    %vm3480 = vcmp.lt.s32.totalorder %v3460, 2
    %vm3481 = vcmp.lt.s32.totalorder %v3460, 3
    %vm3482 = vcmp.lt.s32.totalorder %v3460, 4
    %v3483 = vsel %vm3479, %v3463, %v3466
    %v3484 = vsel %vm3482, %v3472, 2102212464
    %v3485 = vsel %vm3481, %v3469, %v3484
    %v3486 = vsel %vm3480, %v3483, %v3485
    %v3487 = vsel %vm3479, %v3466, %v3469
    %v3488 = vsel %vm3482, %v3475, 920167782
    %v3489 = vsel %vm3481, %v3472, %v3488
    %v3490 = vsel %vm3480, %v3487, %v3489
    %v3491 = vsel %vm3479, %v3469, %v3472
    %v3492 = vsel %vm3482, %v3478, 1326507024
    %v3493 = vsel %vm3481, %v3475, %v3492
    %v3494 = vsel %vm3480, %v3491, %v3493
    %v3495 = vshll.u32 %v3455, 8
    %v3496 = vmul.u32.u64.compose %v3495, %v3494
    %v3497 = vextract.low.u32 %v3496
    %v3498 = vextract.high.u32 %v3496
    %v3499 = vmul.u32.u64.compose %v3495, %v3490
    %v3500 = vextract.low.u32 %v3499
    %v3501 = vextract.high.u32 %v3499
    %v3502 = vmul.u32 %v3495, %v3486
    %v3503 = vadd.s32 %v3498, %v3500
    %vm3504 = vc.u32 %v3498, %v3500
    %v3505 = vadd.s32 %v3501, 1
    %v3506 = vsel %vm3504, %v3505, %v3501
    %v3507 = vadd.s32 %v3502, %v3506
    %v3508 = vadd.s32 %v3507, 536870912
    %v3509 = vshrl.u32 %v3508, 30
    %v3510 = vshll.u32 %v3509, 30
    %v3511 = vsub.s32 %v3507, %v3510
    %vm3512 = vcmp.lt.s32.totalorder %v3511, 0
    %v3513 = vsub.s32 0, %v3511
    %v3514 = vsel %vm3512, %v3513, %v3511
    %v3515 = vclz %v3514
    %v3516 = vsub.s32 %v3515, 2
    %vm3517 = vcmp.gt.s32.totalorder 0, %v3516
    %v3518 = vsel %vm3517, 0, %v3516
    %v3519 = vsub.s32 32, %v3518
    %v3520 = vshll.u32 %v3511, %v3518
    %v3521 = vshrl.u32 %v3503, %v3519
    %v3522 = vor.u32 %v3520, %v3521
    %v3523 = vsub.s32 4294967266, %v3518
    %v3524 = vadd.s32 %v3523, 127
    %v3525 = vshll.u32 %v3524, 23
    %v3526 = vor.u32 4788187, %v3525
    %v3527 = vand.u32 2147483647, %v3526
    %v3529 = vcvt.s32.f32 %v3522
    %v3530 = vmul.f32 %v3529, %v3527
    %v3531 = vxor.u32 %v3530, 2147483648
    %v3532 = vsel %vm3449, %v3531, %v3530
    %v3533 = vsub.s32 4, %v3509
    %v3534 = vsel %vm3449, %v3533, %v3509
    %v3535 = vsel %vm3448, %v747, %v3532
    %v3536 = vsel %vm3448, 0, %v3534
    %v3537 = vcosq.f32.pop %v3535
    %v3538 = vsinq.f32.pop %v3535
    %vm3539 = vweird.f32 %v747
    %v3540 = vand.u32 %v3536, 3
    %vm3541 = vcmp.lt.s32.totalorder %v3540, 2
    %vm3542 = vcmp.eq.s32.totalorder %v3540, 0
    %v3543 = vxor.u32 %v3538, 2147483648
    %v3544 = vsel %vm3542, %v3537, %v3543
    %vm3545 = vcmp.eq.s32.totalorder %v3540, 2
    %v3546 = vxor.u32 %v3537, 2147483648
    %v3547 = vsel %vm3545, %v3546, %v3538
    %v3548 = vsel %vm3541, %v3544, %v3547
    %v3549 = vsel %vm3539, nan, %v3548
    %v3550 = vand.u32 2147483647, %v748
    %vm3551 = vcmp.le.f32.partialorder %v3550, 0.7853982
    %vm3552 = vcmp.lt.s32.totalorder %v748, 0
    %v3553 = vand.u32 %v748, 2139095040
    %v3554 = vshrl.u32 %v3553, 23
    %v3555 = vsub.s32 %v3554, 127
    %v3556 = vand.u32 2147483647, %v748
    %v3557 = vand.u32 %v3556, 8388607
    %v3558 = vor.u32 %v3557, 8388608
    %v3559 = vsub.s32 0, %v3558
    %v3560 = vadd.s32 %v3555, 1
    %vm3561 = vcmp.gt.s32.totalorder %v3560, 0
    %v3562 = vsel %vm3561, %v3560, 0
    %v3563 = vshrl.u32 %v3562, 5
    %v3564 = vand.u32 %v3562, 31
    %v3565 = vsub.s32 32, %v3564
    %v3566 = vshrl.u32 683565275, %v3565
    %v3567 = vshll.u32 683565275, %v3564
    %v3568 = vshrl.u32 2475754826, %v3565
    %v3569 = vor.u32 %v3567, %v3568
    %v3570 = vshll.u32 2475754826, %v3564
    %v3571 = vshrl.u32 2131351028, %v3565
    %v3572 = vor.u32 %v3570, %v3571
    %v3573 = vshll.u32 2131351028, %v3564
    %v3574 = vshrl.u32 2102212464, %v3565
    %v3575 = vor.u32 %v3573, %v3574
    %v3576 = vshll.u32 2102212464, %v3564
    %v3577 = vshrl.u32 920167782, %v3565
    %v3578 = vor.u32 %v3576, %v3577
    %v3579 = vshll.u32 920167782, %v3564
    %v3580 = vshrl.u32 1326507024, %v3565
    %v3581 = vor.u32 %v3579, %v3580
    %vm3582 = vcmp.lt.s32.totalorder %v3563, 1
    %vm3583 = vcmp.lt.s32.totalorder %v3563, 2
    %vm3584 = vcmp.lt.s32.totalorder %v3563, 3
    %vm3585 = vcmp.lt.s32.totalorder %v3563, 4
    %v3586 = vsel %vm3582, %v3566, %v3569
    %v3587 = vsel %vm3585, %v3575, 2102212464
    %v3588 = vsel %vm3584, %v3572, %v3587
    %v3589 = vsel %vm3583, %v3586, %v3588
    %v3590 = vsel %vm3582, %v3569, %v3572
    %v3591 = vsel %vm3585, %v3578, 920167782
    %v3592 = vsel %vm3584, %v3575, %v3591
    %v3593 = vsel %vm3583, %v3590, %v3592
    %v3594 = vsel %vm3582, %v3572, %v3575
    %v3595 = vsel %vm3585, %v3581, 1326507024
    %v3596 = vsel %vm3584, %v3578, %v3595
    %v3597 = vsel %vm3583, %v3594, %v3596
    %v3598 = vshll.u32 %v3558, 8
    %v3599 = vmul.u32.u64.compose %v3598, %v3597
    %v3600 = vextract.low.u32 %v3599
    %v3601 = vextract.high.u32 %v3599
    %v3602 = vmul.u32.u64.compose %v3598, %v3593
    %v3603 = vextract.low.u32 %v3602
    %v3604 = vextract.high.u32 %v3602
    %v3605 = vmul.u32 %v3598, %v3589
    %v3606 = vadd.s32 %v3601, %v3603
    %vm3607 = vc.u32 %v3601, %v3603
    %v3608 = vadd.s32 %v3604, 1
    %v3609 = vsel %vm3607, %v3608, %v3604
    %v3610 = vadd.s32 %v3605, %v3609
    %v3611 = vadd.s32 %v3610, 536870912
    %v3612 = vshrl.u32 %v3611, 30
    %v3613 = vshll.u32 %v3612, 30
    %v3614 = vsub.s32 %v3610, %v3613
    %vm3615 = vcmp.lt.s32.totalorder %v3614, 0
    %v3616 = vsub.s32 0, %v3614
    %v3617 = vsel %vm3615, %v3616, %v3614
    %v3618 = vclz %v3617
    %v3619 = vsub.s32 %v3618, 2
    %vm3620 = vcmp.gt.s32.totalorder 0, %v3619
    %v3621 = vsel %vm3620, 0, %v3619
    %v3622 = vsub.s32 32, %v3621
    %v3623 = vshll.u32 %v3614, %v3621
    %v3624 = vshrl.u32 %v3606, %v3622
    %v3625 = vor.u32 %v3623, %v3624
    %v3626 = vsub.s32 4294967266, %v3621
    %v3627 = vadd.s32 %v3626, 127
    %v3628 = vshll.u32 %v3627, 23
    %v3629 = vor.u32 4788187, %v3628
    %v3630 = vand.u32 2147483647, %v3629
    %v3632 = vcvt.s32.f32 %v3625
    %v3633 = vmul.f32 %v3632, %v3630
    %v3634 = vxor.u32 %v3633, 2147483648
    %v3635 = vsel %vm3552, %v3634, %v3633
    %v3636 = vsub.s32 4, %v3612
    %v3637 = vsel %vm3552, %v3636, %v3612
    %v3638 = vsel %vm3551, %v748, %v3635
    %v3639 = vsel %vm3551, 0, %v3637
    %v3640 = vcosq.f32.pop %v3638
    %v3641 = vsinq.f32.pop %v3638
    %vm3642 = vweird.f32 %v748
    %v3643 = vand.u32 %v3639, 3
    %vm3644 = vcmp.lt.s32.totalorder %v3643, 2
    %vm3645 = vcmp.eq.s32.totalorder %v3643, 0
    %v3646 = vxor.u32 %v3641, 2147483648
    %v3647 = vsel %vm3645, %v3640, %v3646
    %vm3648 = vcmp.eq.s32.totalorder %v3643, 2
    %v3649 = vxor.u32 %v3640, 2147483648
    %v3650 = vsel %vm3648, %v3649, %v3641
    %v3651 = vsel %vm3644, %v3647, %v3650
    %v3652 = vsel %vm3642, nan, %v3651
    %v3653 = vand.u32 2147483647, %v749
    %vm3654 = vcmp.le.f32.partialorder %v3653, 0.7853982
    %vm3655 = vcmp.lt.s32.totalorder %v749, 0
    %v3656 = vand.u32 %v749, 2139095040
    %v3657 = vshrl.u32 %v3656, 23
    %v3658 = vsub.s32 %v3657, 127
    %v3659 = vand.u32 2147483647, %v749
    %v3660 = vand.u32 %v3659, 8388607
    %v3661 = vor.u32 %v3660, 8388608
    %v3662 = vsub.s32 0, %v3661
    %v3663 = vadd.s32 %v3658, 1
    %vm3664 = vcmp.gt.s32.totalorder %v3663, 0
    %v3665 = vsel %vm3664, %v3663, 0
    %v3666 = vshrl.u32 %v3665, 5
    %v3667 = vand.u32 %v3665, 31
    %v3668 = vsub.s32 32, %v3667
    %v3669 = vshrl.u32 683565275, %v3668
    %v3670 = vshll.u32 683565275, %v3667
    %v3671 = vshrl.u32 2475754826, %v3668
    %v3672 = vor.u32 %v3670, %v3671
    %v3673 = vshll.u32 2475754826, %v3667
    %v3674 = vshrl.u32 2131351028, %v3668
    %v3675 = vor.u32 %v3673, %v3674
    %v3676 = vshll.u32 2131351028, %v3667
    %v3677 = vshrl.u32 2102212464, %v3668
    %v3678 = vor.u32 %v3676, %v3677
    %v3679 = vshll.u32 2102212464, %v3667
    %v3680 = vshrl.u32 920167782, %v3668
    %v3681 = vor.u32 %v3679, %v3680
    %v3682 = vshll.u32 920167782, %v3667
    %v3683 = vshrl.u32 1326507024, %v3668
    %v3684 = vor.u32 %v3682, %v3683
    %vm3685 = vcmp.lt.s32.totalorder %v3666, 1
    %vm3686 = vcmp.lt.s32.totalorder %v3666, 2
    %vm3687 = vcmp.lt.s32.totalorder %v3666, 3
    %vm3688 = vcmp.lt.s32.totalorder %v3666, 4
    %v3689 = vsel %vm3685, %v3669, %v3672
    %v3690 = vsel %vm3688, %v3678, 2102212464
    %v3691 = vsel %vm3687, %v3675, %v3690
    %v3692 = vsel %vm3686, %v3689, %v3691
    %v3693 = vsel %vm3685, %v3672, %v3675
    %v3694 = vsel %vm3688, %v3681, 920167782
    %v3695 = vsel %vm3687, %v3678, %v3694
    %v3696 = vsel %vm3686, %v3693, %v3695
    %v3697 = vsel %vm3685, %v3675, %v3678
    %v3698 = vsel %vm3688, %v3684, 1326507024
    %v3699 = vsel %vm3687, %v3681, %v3698
    %v3700 = vsel %vm3686, %v3697, %v3699
    %v3701 = vshll.u32 %v3661, 8
    %v3702 = vmul.u32.u64.compose %v3701, %v3700
    %v3703 = vextract.low.u32 %v3702
    %v3704 = vextract.high.u32 %v3702
    %v3705 = vmul.u32.u64.compose %v3701, %v3696
    %v3706 = vextract.low.u32 %v3705
    %v3707 = vextract.high.u32 %v3705
    %v3708 = vmul.u32 %v3701, %v3692
    %v3709 = vadd.s32 %v3704, %v3706
    %vm3710 = vc.u32 %v3704, %v3706
    %v3711 = vadd.s32 %v3707, 1
    %v3712 = vsel %vm3710, %v3711, %v3707
    %v3713 = vadd.s32 %v3708, %v3712
    %v3714 = vadd.s32 %v3713, 536870912
    %v3715 = vshrl.u32 %v3714, 30
    %v3716 = vshll.u32 %v3715, 30
    %v3717 = vsub.s32 %v3713, %v3716
    %vm3718 = vcmp.lt.s32.totalorder %v3717, 0
    %v3719 = vsub.s32 0, %v3717
    %v3720 = vsel %vm3718, %v3719, %v3717
    %v3721 = vclz %v3720
    %v3722 = vsub.s32 %v3721, 2
    %vm3723 = vcmp.gt.s32.totalorder 0, %v3722
    %v3724 = vsel %vm3723, 0, %v3722
    %v3725 = vsub.s32 32, %v3724
    %v3726 = vshll.u32 %v3717, %v3724
    %v3727 = vshrl.u32 %v3709, %v3725
    %v3728 = vor.u32 %v3726, %v3727
    %v3729 = vsub.s32 4294967266, %v3724
    %v3730 = vadd.s32 %v3729, 127
    %v3731 = vshll.u32 %v3730, 23
    %v3732 = vor.u32 4788187, %v3731
    %v3733 = vand.u32 2147483647, %v3732
    %v3735 = vcvt.s32.f32 %v3728
    %v3736 = vmul.f32 %v3735, %v3733
    %v3737 = vxor.u32 %v3736, 2147483648
    %v3738 = vsel %vm3655, %v3737, %v3736
    %v3739 = vsub.s32 4, %v3715
    %v3740 = vsel %vm3655, %v3739, %v3715
    %v3741 = vsel %vm3654, %v749, %v3738
    %v3742 = vsel %vm3654, 0, %v3740
    %v3743 = vcosq.f32.pop %v3741
    %v3744 = vsinq.f32.pop %v3741
    %vm3745 = vweird.f32 %v749
    %v3746 = vand.u32 %v3742, 3
    %vm3747 = vcmp.lt.s32.totalorder %v3746, 2
    %vm3748 = vcmp.eq.s32.totalorder %v3746, 0
    %v3749 = vxor.u32 %v3744, 2147483648
    %v3750 = vsel %vm3748, %v3743, %v3749
    %vm3751 = vcmp.eq.s32.totalorder %v3746, 2
    %v3752 = vxor.u32 %v3743, 2147483648
    %v3753 = vsel %vm3751, %v3752, %v3744
    %v3754 = vsel %vm3747, %v3750, %v3753
    %v3755 = vsel %vm3745, nan, %v3754
    %v3756 = vand.u32 2147483647, %v750
    %vm3757 = vcmp.le.f32.partialorder %v3756, 0.7853982
    %vm3758 = vcmp.lt.s32.totalorder %v750, 0
    %v3759 = vand.u32 %v750, 2139095040
    %v3760 = vshrl.u32 %v3759, 23
    %v3761 = vsub.s32 %v3760, 127
    %v3762 = vand.u32 2147483647, %v750
    %v3763 = vand.u32 %v3762, 8388607
    %v3764 = vor.u32 %v3763, 8388608
    %v3765 = vsub.s32 0, %v3764
    %v3766 = vadd.s32 %v3761, 1
    %vm3767 = vcmp.gt.s32.totalorder %v3766, 0
    %v3768 = vsel %vm3767, %v3766, 0
    %v3769 = vshrl.u32 %v3768, 5
    %v3770 = vand.u32 %v3768, 31
    %v3771 = vsub.s32 32, %v3770
    %v3772 = vshrl.u32 683565275, %v3771
    %v3773 = vshll.u32 683565275, %v3770
    %v3774 = vshrl.u32 2475754826, %v3771
    %v3775 = vor.u32 %v3773, %v3774
    %v3776 = vshll.u32 2475754826, %v3770
    %v3777 = vshrl.u32 2131351028, %v3771
    %v3778 = vor.u32 %v3776, %v3777
    %v3779 = vshll.u32 2131351028, %v3770
    %v3780 = vshrl.u32 2102212464, %v3771
    %v3781 = vor.u32 %v3779, %v3780
    %v3782 = vshll.u32 2102212464, %v3770
    %v3783 = vshrl.u32 920167782, %v3771
    %v3784 = vor.u32 %v3782, %v3783
    %v3785 = vshll.u32 920167782, %v3770
    %v3786 = vshrl.u32 1326507024, %v3771
    %v3787 = vor.u32 %v3785, %v3786
    %vm3788 = vcmp.lt.s32.totalorder %v3769, 1
    %vm3789 = vcmp.lt.s32.totalorder %v3769, 2
    %vm3790 = vcmp.lt.s32.totalorder %v3769, 3
    %vm3791 = vcmp.lt.s32.totalorder %v3769, 4
    %v3792 = vsel %vm3788, %v3772, %v3775
    %v3793 = vsel %vm3791, %v3781, 2102212464
    %v3794 = vsel %vm3790, %v3778, %v3793
    %v3795 = vsel %vm3789, %v3792, %v3794
    %v3796 = vsel %vm3788, %v3775, %v3778
    %v3797 = vsel %vm3791, %v3784, 920167782
    %v3798 = vsel %vm3790, %v3781, %v3797
    %v3799 = vsel %vm3789, %v3796, %v3798
    %v3800 = vsel %vm3788, %v3778, %v3781
    %v3801 = vsel %vm3791, %v3787, 1326507024
    %v3802 = vsel %vm3790, %v3784, %v3801
    %v3803 = vsel %vm3789, %v3800, %v3802
    %v3804 = vshll.u32 %v3764, 8
    %v3805 = vmul.u32.u64.compose %v3804, %v3803
    %v3806 = vextract.low.u32 %v3805
    %v3807 = vextract.high.u32 %v3805
    %v3808 = vmul.u32.u64.compose %v3804, %v3799
    %v3809 = vextract.low.u32 %v3808
    %v3810 = vextract.high.u32 %v3808
    %v3811 = vmul.u32 %v3804, %v3795
    %v3812 = vadd.s32 %v3807, %v3809
    %vm3813 = vc.u32 %v3807, %v3809
    %v3814 = vadd.s32 %v3810, 1
    %v3815 = vsel %vm3813, %v3814, %v3810
    %v3816 = vadd.s32 %v3811, %v3815
    %v3817 = vadd.s32 %v3816, 536870912
    %v3818 = vshrl.u32 %v3817, 30
    %v3819 = vshll.u32 %v3818, 30
    %v3820 = vsub.s32 %v3816, %v3819
    %vm3821 = vcmp.lt.s32.totalorder %v3820, 0
    %v3822 = vsub.s32 0, %v3820
    %v3823 = vsel %vm3821, %v3822, %v3820
    %v3824 = vclz %v3823
    %v3825 = vsub.s32 %v3824, 2
    %vm3826 = vcmp.gt.s32.totalorder 0, %v3825
    %v3827 = vsel %vm3826, 0, %v3825
    %v3828 = vsub.s32 32, %v3827
    %v3829 = vshll.u32 %v3820, %v3827
    %v3830 = vshrl.u32 %v3812, %v3828
    %v3831 = vor.u32 %v3829, %v3830
    %v3832 = vsub.s32 4294967266, %v3827
    %v3833 = vadd.s32 %v3832, 127
    %v3834 = vshll.u32 %v3833, 23
    %v3835 = vor.u32 4788187, %v3834
    %v3836 = vand.u32 2147483647, %v3835
    %v3838 = vcvt.s32.f32 %v3831
    %v3839 = vmul.f32 %v3838, %v3836
    %v3840 = vxor.u32 %v3839, 2147483648
    %v3841 = vsel %vm3758, %v3840, %v3839
    %v3842 = vsub.s32 4, %v3818
    %v3843 = vsel %vm3758, %v3842, %v3818
    %v3844 = vsel %vm3757, %v750, %v3841
    %v3845 = vsel %vm3757, 0, %v3843
    %v3846 = vcosq.f32.pop %v3844
    %v3847 = vsinq.f32.pop %v3844
    %vm3848 = vweird.f32 %v750
    %v3849 = vand.u32 %v3845, 3
    %vm3850 = vcmp.lt.s32.totalorder %v3849, 2
    %vm3851 = vcmp.eq.s32.totalorder %v3849, 0
    %v3852 = vxor.u32 %v3847, 2147483648
    %v3853 = vsel %vm3851, %v3846, %v3852
    %vm3854 = vcmp.eq.s32.totalorder %v3849, 2
    %v3855 = vxor.u32 %v3846, 2147483648
    %v3856 = vsel %vm3854, %v3855, %v3847
    %v3857 = vsel %vm3850, %v3853, %v3856
    %v3858 = vsel %vm3848, nan, %v3857
    %v3859 = vand.u32 2147483647, %v751
    %vm3860 = vcmp.le.f32.partialorder %v3859, 0.7853982
    %vm3861 = vcmp.lt.s32.totalorder %v751, 0
    %v3862 = vand.u32 %v751, 2139095040
    %v3863 = vshrl.u32 %v3862, 23
    %v3864 = vsub.s32 %v3863, 127
    %v3865 = vand.u32 2147483647, %v751
    %v3866 = vand.u32 %v3865, 8388607
    %v3867 = vor.u32 %v3866, 8388608
    %v3868 = vsub.s32 0, %v3867
    %v3869 = vadd.s32 %v3864, 1
    %vm3870 = vcmp.gt.s32.totalorder %v3869, 0
    %v3871 = vsel %vm3870, %v3869, 0
    %v3872 = vshrl.u32 %v3871, 5
    %v3873 = vand.u32 %v3871, 31
    %v3874 = vsub.s32 32, %v3873
    %v3875 = vshrl.u32 683565275, %v3874
    %v3876 = vshll.u32 683565275, %v3873
    %v3877 = vshrl.u32 2475754826, %v3874
    %v3878 = vor.u32 %v3876, %v3877
    %v3879 = vshll.u32 2475754826, %v3873
    %v3880 = vshrl.u32 2131351028, %v3874
    %v3881 = vor.u32 %v3879, %v3880
    %v3882 = vshll.u32 2131351028, %v3873
    %v3883 = vshrl.u32 2102212464, %v3874
    %v3884 = vor.u32 %v3882, %v3883
    %v3885 = vshll.u32 2102212464, %v3873
    %v3886 = vshrl.u32 920167782, %v3874
    %v3887 = vor.u32 %v3885, %v3886
    %v3888 = vshll.u32 920167782, %v3873
    %v3889 = vshrl.u32 1326507024, %v3874
    %v3890 = vor.u32 %v3888, %v3889
    %vm3891 = vcmp.lt.s32.totalorder %v3872, 1
    %vm3892 = vcmp.lt.s32.totalorder %v3872, 2
    %vm3893 = vcmp.lt.s32.totalorder %v3872, 3
    %vm3894 = vcmp.lt.s32.totalorder %v3872, 4
    %v3895 = vsel %vm3891, %v3875, %v3878
    %v3896 = vsel %vm3894, %v3884, 2102212464
    %v3897 = vsel %vm3893, %v3881, %v3896
    %v3898 = vsel %vm3892, %v3895, %v3897
    %v3899 = vsel %vm3891, %v3878, %v3881
    %v3900 = vsel %vm3894, %v3887, 920167782
    %v3901 = vsel %vm3893, %v3884, %v3900
    %v3902 = vsel %vm3892, %v3899, %v3901
    %v3903 = vsel %vm3891, %v3881, %v3884
    %v3904 = vsel %vm3894, %v3890, 1326507024
    %v3905 = vsel %vm3893, %v3887, %v3904
    %v3906 = vsel %vm3892, %v3903, %v3905
    %v3907 = vshll.u32 %v3867, 8
    %v3908 = vmul.u32.u64.compose %v3907, %v3906
    %v3909 = vextract.low.u32 %v3908
    %v3910 = vextract.high.u32 %v3908
    %v3911 = vmul.u32.u64.compose %v3907, %v3902
    %v3912 = vextract.low.u32 %v3911
    %v3913 = vextract.high.u32 %v3911
    %v3914 = vmul.u32 %v3907, %v3898
    %v3915 = vadd.s32 %v3910, %v3912
    %vm3916 = vc.u32 %v3910, %v3912
    %v3917 = vadd.s32 %v3913, 1
    %v3918 = vsel %vm3916, %v3917, %v3913
    %v3919 = vadd.s32 %v3914, %v3918
    %v3920 = vadd.s32 %v3919, 536870912
    %v3921 = vshrl.u32 %v3920, 30
    %v3922 = vshll.u32 %v3921, 30
    %v3923 = vsub.s32 %v3919, %v3922
    %vm3924 = vcmp.lt.s32.totalorder %v3923, 0
    %v3925 = vsub.s32 0, %v3923
    %v3926 = vsel %vm3924, %v3925, %v3923
    %v3927 = vclz %v3926
    %v3928 = vsub.s32 %v3927, 2
    %vm3929 = vcmp.gt.s32.totalorder 0, %v3928
    %v3930 = vsel %vm3929, 0, %v3928
    %v3931 = vsub.s32 32, %v3930
    %v3932 = vshll.u32 %v3923, %v3930
    %v3933 = vshrl.u32 %v3915, %v3931
    %v3934 = vor.u32 %v3932, %v3933
    %v3935 = vsub.s32 4294967266, %v3930
    %v3936 = vadd.s32 %v3935, 127
    %v3937 = vshll.u32 %v3936, 23
    %v3938 = vor.u32 4788187, %v3937
    %v3939 = vand.u32 2147483647, %v3938
    %v3941 = vcvt.s32.f32 %v3934
    %v3942 = vmul.f32 %v3941, %v3939
    %v3943 = vxor.u32 %v3942, 2147483648
    %v3944 = vsel %vm3861, %v3943, %v3942
    %v3945 = vsub.s32 4, %v3921
    %v3946 = vsel %vm3861, %v3945, %v3921
    %v3947 = vsel %vm3860, %v751, %v3944
    %v3948 = vsel %vm3860, 0, %v3946
    %v3949 = vcosq.f32.pop %v3947
    %v3950 = vsinq.f32.pop %v3947
    %vm3951 = vweird.f32 %v751
    %v3952 = vand.u32 %v3948, 3
    %vm3953 = vcmp.lt.s32.totalorder %v3952, 2
    %vm3954 = vcmp.eq.s32.totalorder %v3952, 0
    %v3955 = vxor.u32 %v3950, 2147483648
    %v3956 = vsel %vm3954, %v3949, %v3955
    %vm3957 = vcmp.eq.s32.totalorder %v3952, 2
    %v3958 = vxor.u32 %v3949, 2147483648
    %v3959 = vsel %vm3957, %v3958, %v3950
    %v3960 = vsel %vm3953, %v3956, %v3959
    %v3961 = vsel %vm3951, nan, %v3960
    %v3962 = vand.u32 2147483647, %v752
    %vm3963 = vcmp.le.f32.partialorder %v3962, 0.7853982
    %vm3964 = vcmp.lt.s32.totalorder %v752, 0
    %v3965 = vand.u32 %v752, 2139095040
    %v3966 = vshrl.u32 %v3965, 23
    %v3967 = vsub.s32 %v3966, 127
    %v3968 = vand.u32 2147483647, %v752
    %v3969 = vand.u32 %v3968, 8388607
    %v3970 = vor.u32 %v3969, 8388608
    %v3971 = vsub.s32 0, %v3970
    %v3972 = vadd.s32 %v3967, 1
    %vm3973 = vcmp.gt.s32.totalorder %v3972, 0
    %v3974 = vsel %vm3973, %v3972, 0
    %v3975 = vshrl.u32 %v3974, 5
    %v3976 = vand.u32 %v3974, 31
    %v3977 = vsub.s32 32, %v3976
    %v3978 = vshrl.u32 683565275, %v3977
    %v3979 = vshll.u32 683565275, %v3976
    %v3980 = vshrl.u32 2475754826, %v3977
    %v3981 = vor.u32 %v3979, %v3980
    %v3982 = vshll.u32 2475754826, %v3976
    %v3983 = vshrl.u32 2131351028, %v3977
    %v3984 = vor.u32 %v3982, %v3983
    %v3985 = vshll.u32 2131351028, %v3976
    %v3986 = vshrl.u32 2102212464, %v3977
    %v3987 = vor.u32 %v3985, %v3986
    %v3988 = vshll.u32 2102212464, %v3976
    %v3989 = vshrl.u32 920167782, %v3977
    %v3990 = vor.u32 %v3988, %v3989
    %v3991 = vshll.u32 920167782, %v3976
    %v3992 = vshrl.u32 1326507024, %v3977
    %v3993 = vor.u32 %v3991, %v3992
    %vm3994 = vcmp.lt.s32.totalorder %v3975, 1
    %vm3995 = vcmp.lt.s32.totalorder %v3975, 2
    %vm3996 = vcmp.lt.s32.totalorder %v3975, 3
    %vm3997 = vcmp.lt.s32.totalorder %v3975, 4
    %v3998 = vsel %vm3994, %v3978, %v3981
    %v3999 = vsel %vm3997, %v3987, 2102212464
    %v4000 = vsel %vm3996, %v3984, %v3999
    %v4001 = vsel %vm3995, %v3998, %v4000
    %v4002 = vsel %vm3994, %v3981, %v3984
    %v4003 = vsel %vm3997, %v3990, 920167782
    %v4004 = vsel %vm3996, %v3987, %v4003
    %v4005 = vsel %vm3995, %v4002, %v4004
    %v4006 = vsel %vm3994, %v3984, %v3987
    %v4007 = vsel %vm3997, %v3993, 1326507024
    %v4008 = vsel %vm3996, %v3990, %v4007
    %v4009 = vsel %vm3995, %v4006, %v4008
    %v4010 = vshll.u32 %v3970, 8
    %v4011 = vmul.u32.u64.compose %v4010, %v4009
    %v4012 = vextract.low.u32 %v4011
    %v4013 = vextract.high.u32 %v4011
    %v4014 = vmul.u32.u64.compose %v4010, %v4005
    %v4015 = vextract.low.u32 %v4014
    %v4016 = vextract.high.u32 %v4014
    %v4017 = vmul.u32 %v4010, %v4001
    %v4018 = vadd.s32 %v4013, %v4015
    %vm4019 = vc.u32 %v4013, %v4015
    %v4020 = vadd.s32 %v4016, 1
    %v4021 = vsel %vm4019, %v4020, %v4016
    %v4022 = vadd.s32 %v4017, %v4021
    %v4023 = vadd.s32 %v4022, 536870912
    %v4024 = vshrl.u32 %v4023, 30
    %v4025 = vshll.u32 %v4024, 30
    %v4026 = vsub.s32 %v4022, %v4025
    %vm4027 = vcmp.lt.s32.totalorder %v4026, 0
    %v4028 = vsub.s32 0, %v4026
    %v4029 = vsel %vm4027, %v4028, %v4026
    %v4030 = vclz %v4029
    %v4031 = vsub.s32 %v4030, 2
    %vm4032 = vcmp.gt.s32.totalorder 0, %v4031
    %v4033 = vsel %vm4032, 0, %v4031
    %v4034 = vsub.s32 32, %v4033
    %v4035 = vshll.u32 %v4026, %v4033
    %v4036 = vshrl.u32 %v4018, %v4034
    %v4037 = vor.u32 %v4035, %v4036
    %v4038 = vsub.s32 4294967266, %v4033
    %v4039 = vadd.s32 %v4038, 127
    %v4040 = vshll.u32 %v4039, 23
    %v4041 = vor.u32 4788187, %v4040
    %v4042 = vand.u32 2147483647, %v4041
    %v4044 = vcvt.s32.f32 %v4037
    %v4045 = vmul.f32 %v4044, %v4042
    %v4046 = vxor.u32 %v4045, 2147483648
    %v4047 = vsel %vm3964, %v4046, %v4045
    %v4048 = vsub.s32 4, %v4024
    %v4049 = vsel %vm3964, %v4048, %v4024
    %v4050 = vsel %vm3963, %v752, %v4047
    %v4051 = vsel %vm3963, 0, %v4049
    %v4052 = vcosq.f32.pop %v4050
    %v4053 = vsinq.f32.pop %v4050
    %vm4054 = vweird.f32 %v752
    %v4055 = vand.u32 %v4051, 3
    %vm4056 = vcmp.lt.s32.totalorder %v4055, 2
    %vm4057 = vcmp.eq.s32.totalorder %v4055, 0
    %v4058 = vxor.u32 %v4053, 2147483648
    %v4059 = vsel %vm4057, %v4052, %v4058
    %vm4060 = vcmp.eq.s32.totalorder %v4055, 2
    %v4061 = vxor.u32 %v4052, 2147483648
    %v4062 = vsel %vm4060, %v4061, %v4053
    %v4063 = vsel %vm4056, %v4059, %v4062
    %v4064 = vsel %vm4054, nan, %v4063
    %4097 = vrot.lane.b32.xlu0 %v856, 64
    %v4098 = vpop.permute.xlu0 %4097
    %4099 = vrot.lane.b32.xlu0 %v960, 64
    %v4100 = vpop.permute.xlu0 %4099
    %4101 = vrot.lane.b32.xlu0 %v1064, 64
    %v4102 = vpop.permute.xlu0 %4101
    %4103 = vrot.lane.b32.xlu0 %v1168, 64
    %v4104 = vpop.permute.xlu0 %4103
    %4105 = vrot.lane.b32.xlu0 %v1272, 64
    %v4106 = vpop.permute.xlu0 %4105
    %4107 = vrot.lane.b32.xlu0 %v1376, 64
    %v4108 = vpop.permute.xlu0 %4107
    %4109 = vrot.lane.b32.xlu0 %v1480, 64
    %v4110 = vpop.permute.xlu0 %4109
    %4111 = vrot.lane.b32.xlu0 %v1584, 64
    %v4112 = vpop.permute.xlu0 %4111
    %4113 = vrot.lane.b32.xlu0 %v1688, 64
    %v4114 = vpop.permute.xlu0 %4113
    %4115 = vrot.lane.b32.xlu0 %v1792, 64
    %v4116 = vpop.permute.xlu0 %4115
    %4117 = vrot.lane.b32.xlu0 %v1896, 64
    %v4118 = vpop.permute.xlu0 %4117
    %4119 = vrot.lane.b32.xlu0 %v2000, 64
    %v4120 = vpop.permute.xlu0 %4119
    %4121 = vrot.lane.b32.xlu0 %v2104, 64
    %v4122 = vpop.permute.xlu0 %4121
    %4123 = vrot.lane.b32.xlu0 %v2208, 64
    %v4124 = vpop.permute.xlu0 %4123
    %4125 = vrot.lane.b32.xlu0 %v2312, 64
    %v4126 = vpop.permute.xlu0 %4125
    %4127 = vrot.lane.b32.xlu0 %v2416, 64
    %v4128 = vpop.permute.xlu0 %4127
    %4129 = vrot.lane.b32.xlu0 %v2519, 64
    %v4130 = vpop.permute.xlu0 %4129
    %4131 = vrot.lane.b32.xlu0 %v2622, 64
    %v4132 = vpop.permute.xlu0 %4131
    %4133 = vrot.lane.b32.xlu0 %v2725, 64
    %v4134 = vpop.permute.xlu0 %4133
    %4135 = vrot.lane.b32.xlu0 %v2828, 64
    %v4136 = vpop.permute.xlu0 %4135
    %4137 = vrot.lane.b32.xlu0 %v2931, 64
    %v4138 = vpop.permute.xlu0 %4137
    %4139 = vrot.lane.b32.xlu0 %v3034, 64
    %v4140 = vpop.permute.xlu0 %4139
    %4141 = vrot.lane.b32.xlu0 %v3137, 64
    %v4142 = vpop.permute.xlu0 %4141
    %4143 = vrot.lane.b32.xlu0 %v3240, 64
    %v4144 = vpop.permute.xlu0 %4143
    %4145 = vrot.lane.b32.xlu0 %v3343, 64
    %v4146 = vpop.permute.xlu0 %4145
    %4147 = vrot.lane.b32.xlu0 %v3446, 64
    %v4148 = vpop.permute.xlu0 %4147
    %4149 = vrot.lane.b32.xlu0 %v3549, 64
    %v4150 = vpop.permute.xlu0 %4149
    %4151 = vrot.lane.b32.xlu0 %v3652, 64
    %v4152 = vpop.permute.xlu0 %4151
    %4153 = vrot.lane.b32.xlu0 %v3755, 64
    %v4154 = vpop.permute.xlu0 %4153
    %4155 = vrot.lane.b32.xlu0 %v3858, 64
    %v4156 = vpop.permute.xlu0 %4155
    %4157 = vrot.lane.b32.xlu0 %v3961, 64
    %v4158 = vpop.permute.xlu0 %4157
    %4159 = vrot.lane.b32.xlu0 %v4064, 64
    %v4160 = vpop.permute.xlu0 %4159
    %vm4193 = vcmask 523264
    %v4194 = vsel %vm4193, %v856, %v4098
    %v4195 = vsel %vm4193, %v960, %v4100
    %v4196 = vsel %vm4193, %v1064, %v4102
    %v4197 = vsel %vm4193, %v1168, %v4104
    %v4198 = vsel %vm4193, %v1272, %v4106
    %v4199 = vsel %vm4193, %v1376, %v4108
    %v4200 = vsel %vm4193, %v1480, %v4110
    %v4201 = vsel %vm4193, %v1584, %v4112
    %v4202 = vsel %vm4193, %v1688, %v4114
    %v4203 = vsel %vm4193, %v1792, %v4116
    %v4204 = vsel %vm4193, %v1896, %v4118
    %v4205 = vsel %vm4193, %v2000, %v4120
    %v4206 = vsel %vm4193, %v2104, %v4122
    %v4207 = vsel %vm4193, %v2208, %v4124
    %v4208 = vsel %vm4193, %v2312, %v4126
    %v4209 = vsel %vm4193, %v2416, %v4128
    %v4210 = vsel %vm4193, %v2519, %v4130
    %v4211 = vsel %vm4193, %v2622, %v4132
    %v4212 = vsel %vm4193, %v2725, %v4134
    %v4213 = vsel %vm4193, %v2828, %v4136
    %v4214 = vsel %vm4193, %v2931, %v4138
    %v4215 = vsel %vm4193, %v3034, %v4140
    %v4216 = vsel %vm4193, %v3137, %v4142
    %v4217 = vsel %vm4193, %v3240, %v4144
    %v4218 = vsel %vm4193, %v3343, %v4146
    %v4219 = vsel %vm4193, %v3446, %v4148
    %v4220 = vsel %vm4193, %v3549, %v4150
    %v4221 = vsel %vm4193, %v3652, %v4152
    %v4222 = vsel %vm4193, %v3755, %v4154
    %v4223 = vsel %vm4193, %v3858, %v4156
    %v4224 = vsel %vm4193, %v3961, %v4158
    %v4225 = vsel %vm4193, %v4064, %v4160
    %v4226 = vadd.f32 %v390, %v4194
    %v4227 = vadd.f32 %v393, %v4195
    %v4228 = vadd.f32 %v398, %v4196
    %v4229 = vadd.f32 %v401, %v4197
    %v4230 = vadd.f32 %v406, %v4198
    %v4231 = vadd.f32 %v409, %v4199
    %v4232 = vadd.f32 %v414, %v4200
    %v4233 = vadd.f32 %v417, %v4201
    %v4234 = vadd.f32 %v422, %v4202
    %v4235 = vadd.f32 %v425, %v4203
    %v4236 = vadd.f32 %v430, %v4204
    %v4237 = vadd.f32 %v433, %v4205
    %v4238 = vadd.f32 %v438, %v4206
    %v4239 = vadd.f32 %v441, %v4207
    %v4240 = vadd.f32 %v446, %v4208
    %v4241 = vadd.f32 %v449, %v4209
    %v4242 = vadd.f32 %v454, %v4210
    %v4243 = vadd.f32 %v457, %v4211
    %v4244 = vadd.f32 %v462, %v4212
    %v4245 = vadd.f32 %v465, %v4213
    %v4246 = vadd.f32 %v470, %v4214
    %v4247 = vadd.f32 %v473, %v4215
    %v4248 = vadd.f32 %v478, %v4216
    %v4249 = vadd.f32 %v481, %v4217
    %v4250 = vadd.f32 %v486, %v4218
    %v4251 = vadd.f32 %v489, %v4219
    %v4252 = vadd.f32 %v494, %v4220
    %v4253 = vadd.f32 %v497, %v4221
    %v4254 = vadd.f32 %v502, %v4222
    %v4255 = vadd.f32 %v505, %v4223
    %v4256 = vadd.f32 %v510, %v4224
    %v4257 = vadd.f32 %v513, %v4225
    %v4258 = vpack.c.bf16 %v4227, %v4226
    %v4259 = vpack.c.bf16 %v4229, %v4228
    %v4260 = vpack.c.bf16 %v4231, %v4230
    %v4261 = vpack.c.bf16 %v4233, %v4232
    %v4262 = vpack.c.bf16 %v4235, %v4234
    %v4263 = vpack.c.bf16 %v4237, %v4236
    %v4264 = vpack.c.bf16 %v4239, %v4238
    %v4265 = vpack.c.bf16 %v4241, %v4240
    %v4266 = vpack.c.bf16 %v4243, %v4242
    %v4267 = vpack.c.bf16 %v4245, %v4244
    %v4268 = vpack.c.bf16 %v4247, %v4246
    %v4269 = vpack.c.bf16 %v4249, %v4248
    %v4270 = vpack.c.bf16 %v4251, %v4250
    %v4271 = vpack.c.bf16 %v4253, %v4252
    %v4272 = vpack.c.bf16 %v4255, %v4254
    %v4273 = vpack.c.bf16 %v4257, %v4256
    %v4274 = vld [vmem:[%s4] sm:$0xff]
    %v4275 = vld [vmem:[%s4 + $0x8] sm:$0xff]
    %v4276 = vld [vmem:[%s4 + $0x10] sm:$0xff]
    %v4277 = vld [vmem:[%s4 + $0x18] sm:$0xff]
    %v4278 = vld [vmem:[%s4 + $0x20] sm:$0xff]
    %v4279 = vld [vmem:[%s4 + $0x28] sm:$0xff]
    %v4280 = vld [vmem:[%s4 + $0x30] sm:$0xff]
    %v4281 = vld [vmem:[%s4 + $0x38] sm:$0xff]
    %v4282 = vld [vmem:[%s4 + $0x40] sm:$0xff]
    %v4283 = vld [vmem:[%s4 + $0x48] sm:$0xff]
    %v4284 = vld [vmem:[%s4 + $0x50] sm:$0xff]
    %v4285 = vld [vmem:[%s4 + $0x58] sm:$0xff]
    %v4286 = vld [vmem:[%s4 + $0x60] sm:$0xff]
    %v4287 = vld [vmem:[%s4 + $0x68] sm:$0xff]
    %v4288 = vld [vmem:[%s4 + $0x70] sm:$0xff]
    %v4289 = vld [vmem:[%s4 + $0x78] sm:$0xff]
    %v4290 = vpack.c.bf16 %v4276, %v4274
    %v4291 = vpack.c.bf16 %v4277, %v4275
    %v4292 = vpack.c.bf16 %v4280, %v4278
    %v4293 = vpack.c.bf16 %v4281, %v4279
    %v4294 = vpack.c.bf16 %v4284, %v4282
    %v4295 = vpack.c.bf16 %v4285, %v4283
    %v4296 = vpack.c.bf16 %v4288, %v4286
    %v4297 = vpack.c.bf16 %v4289, %v4287
    %v4298 = vld [vmem:[%s5] sm:$0xff]
    %v4299 = vld [vmem:[%s5 + $0x8] sm:$0xff]
    %v4300 = vld [vmem:[%s5 + $0x10] sm:$0xff]
    %v4301 = vld [vmem:[%s5 + $0x18] sm:$0xff]
    %v4302 = vld [vmem:[%s5 + $0x20] sm:$0xff]
    %v4303 = vld [vmem:[%s5 + $0x28] sm:$0xff]
    %v4304 = vld [vmem:[%s5 + $0x30] sm:$0xff]
    %v4305 = vld [vmem:[%s5 + $0x38] sm:$0xff]
    %4307 = vset.pattern.permute.xlu0 0
    %4308 = vperm.xlu0 %4307, %v4298
    %v4309 = vpop.permute.xlu0 %4308
    %4312 = vset.pattern.permute.xlu0 0
    %4313 = vperm.xlu0 %4312, %v4299
    %v4314 = vpop.permute.xlu0 %4313
    %4317 = vset.pattern.permute.xlu0 0
    %4318 = vperm.xlu0 %4317, %v4300
    %v4319 = vpop.permute.xlu0 %4318
    %4322 = vset.pattern.permute.xlu0 0
    %4323 = vperm.xlu0 %4322, %v4301
    %v4324 = vpop.permute.xlu0 %4323
    %4327 = vset.pattern.permute.xlu0 0
    %4328 = vperm.xlu0 %4327, %v4302
    %v4329 = vpop.permute.xlu0 %4328
    %4332 = vset.pattern.permute.xlu0 0
    %4333 = vperm.xlu0 %4332, %v4303
    %v4334 = vpop.permute.xlu0 %4333
    %4337 = vset.pattern.permute.xlu0 0
    %4338 = vperm.xlu0 %4337, %v4304
    %v4339 = vpop.permute.xlu0 %4338
    %4342 = vset.pattern.permute.xlu0 0
    %4343 = vperm.xlu0 %4342, %v4305
    %v4344 = vpop.permute.xlu0 %4343
    %4346 = vmatprep.subr.bf16.mxu0 0
    %4347 = vmatpush1.bf16.msra.mxu0 %v4258
    %4348 = vmatprep.subr.bf16.mxu0 0
    %4349 = vmatpush1.bf16.msra.mxu0 %v4259
    %4350 = vmatprep.subr.bf16.mxu0 0
    %4351 = vmatpush1.bf16.msra.mxu0 %v4260
    %4352 = vmatprep.subr.bf16.mxu0 0
    %4353 = vmatpush1.bf16.msra.mxu0 %v4261
    %4354 = vmatprep.subr.bf16.mxu0 0
    %4355 = vmatpush1.bf16.msra.mxu0 %v4262
    %4356 = vmatprep.subr.bf16.mxu0 0
    %4357 = vmatpush1.bf16.msra.mxu0 %v4263
    %4358 = vmatprep.subr.bf16.mxu0 0
    %4359 = vmatpush1.bf16.msra.mxu0 %v4264
    %4360 = vmatprep.subr.bf16.mxu0 0
    %4361 = vmatpush1.bf16.msra.mxu0 %v4265
    %4362 = vmatprep.subr.bf16.mxu0 0
    %4363 = vmatpush1.bf16.msra.mxu0 %v4266
    %4364 = vmatprep.subr.bf16.mxu0 0
    %4365 = vmatpush1.bf16.msra.mxu0 %v4267
    %4366 = vmatprep.subr.bf16.mxu0 0
    %4367 = vmatpush1.bf16.msra.mxu0 %v4268
    %4368 = vmatprep.subr.bf16.mxu0 0
    %4369 = vmatpush1.bf16.msra.mxu0 %v4269
    %4370 = vmatprep.subr.bf16.mxu0 0
    %4371 = vmatpush1.bf16.msra.mxu0 %v4270
    %4372 = vmatprep.subr.bf16.mxu0 0
    %4373 = vmatpush1.bf16.msra.mxu0 %v4271
    %4374 = vmatprep.subr.bf16.mxu0 0
    %4375 = vmatpush1.bf16.msra.mxu0 %v4272
    %4376 = vmatprep.subr.bf16.mxu0 0
    %4377 = vmatpush1.bf16.msra.mxu0 %v4273
    %4378 = vmatprep.mubr.bf16.mxu0 %v4291
    %4379 = vmatmul.mubr.bf16.gmra.mrb[0].mxu0 %v4290
    %v4380 = vpop.f32.mrb[0].mxu0
    %v4381 = vadd.f32 %v4309, %v4380
    %v4382 = vpop.f32.mrb[0].mxu0
    %v4383 = vpop.f32.mrb[0].mxu0
    %v4384 = vadd.f32 %v4314, %v4383
    %v4385 = vpop.f32.mrb[0].mxu0
    %4386 = vmatprep.mubr.bf16.mxu0 %v4293
    %4387 = vmatmul.mubr.bf16.gmra.mrb[0].mxu0 %v4292
    %v4388 = vpop.f32.mrb[0].mxu0
    %v4389 = vadd.f32 %v4319, %v4388
    %v4390 = vpop.f32.mrb[0].mxu0
    %v4391 = vpop.f32.mrb[0].mxu0
    %v4392 = vadd.f32 %v4324, %v4391
    %v4393 = vpop.f32.mrb[0].mxu0
    %4394 = vmatprep.mubr.bf16.mxu0 %v4295
    %4395 = vmatmul.mubr.bf16.gmra.mrb[0].mxu0 %v4294
    %v4396 = vpop.f32.mrb[0].mxu0
    %v4397 = vadd.f32 %v4329, %v4396
    %v4398 = vpop.f32.mrb[0].mxu0
    %v4399 = vpop.f32.mrb[0].mxu0
    %v4400 = vadd.f32 %v4334, %v4399
    %v4401 = vpop.f32.mrb[0].mxu0
    %4402 = vmatprep.mubr.bf16.mxu0 %v4297
    %4403 = vmatmul.mubr.bf16.gmra.mrb[0].mxu0 %v4296
    %v4404 = vpop.f32.mrb[0].mxu0
    %v4405 = vadd.f32 %v4339, %v4404
    %v4406 = vpop.f32.mrb[0].mxu0
    %v4407 = vpop.f32.mrb[0].mxu0
    %v4408 = vadd.f32 %v4344, %v4407
    %v4409 = vpop.f32.mrb[0].mxu0
    %4410 = vdwg.mxu0
    %v4411 = vmax.f32 %v4381, 0.0
    %v4412 = vmax.f32 %v4384, 0.0
    %v4413 = vmax.f32 %v4389, 0.0
    %v4414 = vmax.f32 %v4392, 0.0
    %v4415 = vmax.f32 %v4397, 0.0
    %v4416 = vmax.f32 %v4400, 0.0
    %v4417 = vmax.f32 %v4405, 0.0
    %v4418 = vmax.f32 %v4408, 0.0
    %v4419 = vpack.c.bf16 %v4412, %v4411
    %v4420 = vpack.c.bf16 %v4414, %v4413
    %v4421 = vpack.c.bf16 %v4416, %v4415
    %v4422 = vpack.c.bf16 %v4418, %v4417
    %v4423 = vld [vmem:[%s6] sm:$0x3]
    %v4424 = vpack.c.bf16 %v4423, %v4423
    %v4425 = vld [vmem:[%s7] sm:$0x3]
    %4427 = vset.pattern.permute.xlu0 0
    %4428 = vperm.xlu0 %4427, %v4425
    %v4429 = vpop.permute.xlu0 %4428
    %v4432 = vsel %vm4193, %v4424, 0
    %4434 = vmatprep.subr.bf16.mxu0 0
    %4435 = vmatpush1.bf16.msra.mxu0 %v4419
    %4436 = vmatprep.subr.bf16.mxu0 0
    %4437 = vmatpush1.bf16.msra.mxu0 %v4420
    %4438 = vmatprep.subr.bf16.mxu0 0
    %4439 = vmatpush1.bf16.msra.mxu0 %v4421
    %4440 = vmatprep.subr.bf16.mxu0 0
    %4441 = vmatpush1.bf16.msra.mxu0 %v4422
    %4442 = vmatprep.subr.bf16.mxu0 0
    %4443 = vmatpush1.bf16.msra.mxu0 0
    %4444 = vmatprep.subr.bf16.mxu0 0
    %4445 = vmatpush1.bf16.msra.mxu0 0
    %4446 = vmatprep.subr.bf16.mxu0 0
    %4447 = vmatpush1.bf16.msra.mxu0 0
    %4448 = vmatprep.subr.bf16.mxu0 0
    %4449 = vmatpush1.bf16.msra.mxu0 0
    %4450 = vmatprep.subr.bf16.mxu0 0
    %4451 = vmatpush1.bf16.msra.mxu0 0
    %4452 = vmatprep.subr.bf16.mxu0 0
    %4453 = vmatpush1.bf16.msra.mxu0 0
    %4454 = vmatprep.subr.bf16.mxu0 0
    %4455 = vmatpush1.bf16.msra.mxu0 0
    %4456 = vmatprep.subr.bf16.mxu0 0
    %4457 = vmatpush1.bf16.msra.mxu0 0
    %4458 = vmatprep.subr.bf16.mxu0 0
    %4459 = vmatpush1.bf16.msra.mxu0 0
    %4460 = vmatprep.subr.bf16.mxu0 0
    %4461 = vmatpush1.bf16.msra.mxu0 0
    %4462 = vmatprep.subr.bf16.mxu0 0
    %4463 = vmatpush1.bf16.msra.mxu0 0
    %4464 = vmatprep.subr.bf16.mxu0 0
    %4465 = vmatpush1.bf16.msra.mxu0 0
    %4466 = vmatprep.mubr.bf16.mxu0 0
    %4467 = vmatmul.mubr.bf16.gmra.mrb[0].mxu0 %v4432
    %v4468 = vpop.f32.mrb[0].mxu0
    %v4469 = vadd.f32 %v4429, %v4468
    %v4470 = vpop.f32.mrb[0].mxu0
    %v4471 = vpop.f32.mrb[0].mxu0
    %v4472 = vpop.f32.mrb[0].mxu0
    %4473 = vdwg.mxu0
    %v4475 = vrot.slane %v4469, 6
    %4476 = vrot.lane.b32.xlu0 %v4475, 64
    %v4477 = vpop.permute.xlu0 %4476
    %vm4479 = vcmask 1041408
    %v4480 = vsel %vm4479, %v4469, %v4477
    %v4481 = vpack.c.bf16 %v4480, %v4480
    %v4482 = vld [vmem:[%s10] sm:$0xff]
    %v4483 = vld [vmem:[%s10 + $0x8] sm:$0xff]
    %v4484 = vld [vmem:[%s10 + $0x10] sm:$0xff]
    %v4485 = vld [vmem:[%s10 + $0x18] sm:$0xff]
    %v4486 = vld [vmem:[%s10 + $0x20] sm:$0xff]
    %v4487 = vld [vmem:[%s10 + $0x28] sm:$0xff]
    %v4488 = vld [vmem:[%s10 + $0x30] sm:$0xff]
    %v4489 = vld [vmem:[%s10 + $0x38] sm:$0xff]
    %v4498 = vunpack.c.l.b16 %v4482
    %v4499 = vunpack.c.h.b16 %v4482
    %v4500 = vunpack.c.l.b16 %v4483
    %v4501 = vunpack.c.h.b16 %v4483
    %v4502 = vunpack.c.l.b16 %v4484
    %v4503 = vunpack.c.h.b16 %v4484
    %v4504 = vunpack.c.l.b16 %v4485
    %v4505 = vunpack.c.h.b16 %v4485
    %v4506 = vunpack.c.l.b16 %v4486
    %v4507 = vunpack.c.h.b16 %v4486
    %v4508 = vunpack.c.l.b16 %v4487
    %v4509 = vunpack.c.h.b16 %v4487
    %v4510 = vunpack.c.l.b16 %v4488
    %v4511 = vunpack.c.h.b16 %v4488
    %v4512 = vunpack.c.l.b16 %v4489
    %v4513 = vunpack.c.h.b16 %v4489
    %v4514 = vpack.c.b16 %v4500, %v4498
    %v4515 = vpack.c.b16 %v4501, %v4499
    %v4516 = vpack.c.b16 %v4504, %v4502
    %v4517 = vpack.c.b16 %v4505, %v4503
    %v4518 = vpack.c.b16 %v4508, %v4506
    %v4519 = vpack.c.b16 %v4509, %v4507
    %v4520 = vpack.c.b16 %v4512, %v4510
    %v4521 = vpack.c.b16 %v4513, %v4511
    %v4531 = vsel %vm4193, %v4481, 0
    %4533 = vmatprep.subr.bf16.mxu0 %v4515
    %4534 = vmatpush1.bf16.msra.mxu0 %v4514
    %4535 = vmatprep.subr.bf16.mxu0 %v4517
    %4536 = vmatpush1.bf16.msra.mxu0 %v4516
    %4537 = vmatprep.subr.bf16.mxu0 %v4519
    %4538 = vmatpush1.bf16.msra.mxu0 %v4518
    %4539 = vmatprep.subr.bf16.mxu0 %v4521
    %4540 = vmatpush1.bf16.msra.mxu0 %v4520
    %4541 = vmatprep.subr.bf16.mxu0 0
    %4542 = vmatpush1.bf16.msra.mxu0 0
    %4543 = vmatprep.subr.bf16.mxu0 0
    %4544 = vmatpush1.bf16.msra.mxu0 0
    %4545 = vmatprep.subr.bf16.mxu0 0
    %4546 = vmatpush1.bf16.msra.mxu0 0
    %4547 = vmatprep.subr.bf16.mxu0 0
    %4548 = vmatpush1.bf16.msra.mxu0 0
    %4549 = vmatprep.subr.bf16.mxu0 0
    %4550 = vmatpush1.bf16.msra.mxu0 0
    %4551 = vmatprep.subr.bf16.mxu0 0
    %4552 = vmatpush1.bf16.msra.mxu0 0
    %4553 = vmatprep.subr.bf16.mxu0 0
    %4554 = vmatpush1.bf16.msra.mxu0 0
    %4555 = vmatprep.subr.bf16.mxu0 0
    %4556 = vmatpush1.bf16.msra.mxu0 0
    %4557 = vmatprep.subr.bf16.mxu0 0
    %4558 = vmatpush1.bf16.msra.mxu0 0
    %4559 = vmatprep.subr.bf16.mxu0 0
    %4560 = vmatpush1.bf16.msra.mxu0 0
    %4561 = vmatprep.subr.bf16.mxu0 0
    %4562 = vmatpush1.bf16.msra.mxu0 0
    %4563 = vmatprep.subr.bf16.mxu0 0
    %4564 = vmatpush1.bf16.msra.mxu0 0
    %4565 = vmatprep.mubr.bf16.mxu0 0
    %4566 = vmatmul.mubr.bf16.gmra.mrb[0].mxu0 %v4531
    %v4567 = vpop.f32.mrb[0].mxu0
    %v4568 = vadd.f32 0.0, %v4567
    %v4569 = vpop.f32.mrb[0].mxu0
    %v4570 = vadd.f32 0.0, %v4569
    %v4571 = vpop.f32.mrb[0].mxu0
    %v4572 = vpop.f32.mrb[0].mxu0
    %4573 = vdwg.mxu0
    %v4576 = vcombine.low %v4568, %v4570
    %4578 = vst [vmem:[%s11] sm:$0xff] %v4576
    %v4579 = vsel %vm4193, %v390, 0.0
    %4580 = vadd.xlane.f32.xlu0 %v4579
    %v4581 = vpop.xlane.xlu0 %4580
    %v4582 = vsel %vm4193, %v393, 0.0
    %4583 = vadd.xlane.f32.xlu0 %v4582
    %v4584 = vpop.xlane.xlu0 %4583
    %v4585 = vsel %vm4193, %v398, 0.0
    %4586 = vadd.xlane.f32.xlu0 %v4585
    %v4587 = vpop.xlane.xlu0 %4586
    %v4588 = vsel %vm4193, %v401, 0.0
    %4589 = vadd.xlane.f32.xlu0 %v4588
    %v4590 = vpop.xlane.xlu0 %4589
    %v4591 = vsel %vm4193, %v406, 0.0
    %4592 = vadd.xlane.f32.xlu0 %v4591
    %v4593 = vpop.xlane.xlu0 %4592
    %v4594 = vsel %vm4193, %v409, 0.0
    %4595 = vadd.xlane.f32.xlu0 %v4594
    %v4596 = vpop.xlane.xlu0 %4595
    %v4597 = vsel %vm4193, %v414, 0.0
    %4598 = vadd.xlane.f32.xlu0 %v4597
    %v4599 = vpop.xlane.xlu0 %4598
    %v4600 = vsel %vm4193, %v417, 0.0
    %4601 = vadd.xlane.f32.xlu0 %v4600
    %v4602 = vpop.xlane.xlu0 %4601
    %v4603 = vsel %vm4193, %v422, 0.0
    %4604 = vadd.xlane.f32.xlu0 %v4603
    %v4605 = vpop.xlane.xlu0 %4604
    %v4606 = vsel %vm4193, %v425, 0.0
    %4607 = vadd.xlane.f32.xlu0 %v4606
    %v4608 = vpop.xlane.xlu0 %4607
    %v4609 = vsel %vm4193, %v430, 0.0
    %4610 = vadd.xlane.f32.xlu0 %v4609
    %v4611 = vpop.xlane.xlu0 %4610
    %v4612 = vsel %vm4193, %v433, 0.0
    %4613 = vadd.xlane.f32.xlu0 %v4612
    %v4614 = vpop.xlane.xlu0 %4613
    %v4615 = vsel %vm4193, %v438, 0.0
    %4616 = vadd.xlane.f32.xlu0 %v4615
    %v4617 = vpop.xlane.xlu0 %4616
    %v4618 = vsel %vm4193, %v441, 0.0
    %4619 = vadd.xlane.f32.xlu0 %v4618
    %v4620 = vpop.xlane.xlu0 %4619
    %v4621 = vsel %vm4193, %v446, 0.0
    %4622 = vadd.xlane.f32.xlu0 %v4621
    %v4623 = vpop.xlane.xlu0 %4622
    %v4624 = vsel %vm4193, %v449, 0.0
    %4625 = vadd.xlane.f32.xlu0 %v4624
    %v4626 = vpop.xlane.xlu0 %4625
    %v4627 = vsel %vm4193, %v454, 0.0
    %4628 = vadd.xlane.f32.xlu0 %v4627
    %v4629 = vpop.xlane.xlu0 %4628
    %v4630 = vsel %vm4193, %v457, 0.0
    %4631 = vadd.xlane.f32.xlu0 %v4630
    %v4632 = vpop.xlane.xlu0 %4631
    %v4633 = vsel %vm4193, %v462, 0.0
    %4634 = vadd.xlane.f32.xlu0 %v4633
    %v4635 = vpop.xlane.xlu0 %4634
    %v4636 = vsel %vm4193, %v465, 0.0
    %4637 = vadd.xlane.f32.xlu0 %v4636
    %v4638 = vpop.xlane.xlu0 %4637
    %v4639 = vsel %vm4193, %v470, 0.0
    %4640 = vadd.xlane.f32.xlu0 %v4639
    %v4641 = vpop.xlane.xlu0 %4640
    %v4642 = vsel %vm4193, %v473, 0.0
    %4643 = vadd.xlane.f32.xlu0 %v4642
    %v4644 = vpop.xlane.xlu0 %4643
    %v4645 = vsel %vm4193, %v478, 0.0
    %4646 = vadd.xlane.f32.xlu0 %v4645
    %v4647 = vpop.xlane.xlu0 %4646
    %v4648 = vsel %vm4193, %v481, 0.0
    %4649 = vadd.xlane.f32.xlu0 %v4648
    %v4650 = vpop.xlane.xlu0 %4649
    %v4651 = vsel %vm4193, %v486, 0.0
    %4652 = vadd.xlane.f32.xlu0 %v4651
    %v4653 = vpop.xlane.xlu0 %4652
    %v4654 = vsel %vm4193, %v489, 0.0
    %4655 = vadd.xlane.f32.xlu0 %v4654
    %v4656 = vpop.xlane.xlu0 %4655
    %v4657 = vsel %vm4193, %v494, 0.0
    %4658 = vadd.xlane.f32.xlu0 %v4657
    %v4659 = vpop.xlane.xlu0 %4658
    %v4660 = vsel %vm4193, %v497, 0.0
    %4661 = vadd.xlane.f32.xlu0 %v4660
    %v4662 = vpop.xlane.xlu0 %4661
    %v4663 = vsel %vm4193, %v502, 0.0
    %4664 = vadd.xlane.f32.xlu0 %v4663
    %v4665 = vpop.xlane.xlu0 %4664
    %v4666 = vsel %vm4193, %v505, 0.0
    %4667 = vadd.xlane.f32.xlu0 %v4666
    %v4668 = vpop.xlane.xlu0 %4667
    %v4669 = vsel %vm4193, %v510, 0.0
    %4670 = vadd.xlane.f32.xlu0 %v4669
    %v4671 = vpop.xlane.xlu0 %4670
    %v4672 = vsel %vm4193, %v513, 0.0
    %4673 = vadd.xlane.f32.xlu0 %v4672
    %v4674 = vpop.xlane.xlu0 %4673
    %v4675 = vrcp.pop 64.0
    %v4676 = vmul.f32 %v4581, %v4675
    %v4677 = vmul.f32 %v4584, %v4675
    %v4678 = vmul.f32 %v4587, %v4675
    %v4679 = vmul.f32 %v4590, %v4675
    %v4680 = vmul.f32 %v4593, %v4675
    %v4681 = vmul.f32 %v4596, %v4675
    %v4682 = vmul.f32 %v4599, %v4675
    %v4683 = vmul.f32 %v4602, %v4675
    %v4684 = vmul.f32 %v4605, %v4675
    %v4685 = vmul.f32 %v4608, %v4675
    %v4686 = vmul.f32 %v4611, %v4675
    %v4687 = vmul.f32 %v4614, %v4675
    %v4688 = vmul.f32 %v4617, %v4675
    %v4689 = vmul.f32 %v4620, %v4675
    %v4690 = vmul.f32 %v4623, %v4675
    %v4691 = vmul.f32 %v4626, %v4675
    %v4692 = vmul.f32 %v4629, %v4675
    %v4693 = vmul.f32 %v4632, %v4675
    %v4694 = vmul.f32 %v4635, %v4675
    %v4695 = vmul.f32 %v4638, %v4675
    %v4696 = vmul.f32 %v4641, %v4675
    %v4697 = vmul.f32 %v4644, %v4675
    %v4698 = vmul.f32 %v4647, %v4675
    %v4699 = vmul.f32 %v4650, %v4675
    %v4700 = vmul.f32 %v4653, %v4675
    %v4701 = vmul.f32 %v4656, %v4675
    %v4702 = vmul.f32 %v4659, %v4675
    %v4703 = vmul.f32 %v4662, %v4675
    %v4704 = vmul.f32 %v4665, %v4675
    %v4705 = vmul.f32 %v4668, %v4675
    %v4706 = vmul.f32 %v4671, %v4675
    %v4707 = vmul.f32 %v4674, %v4675
    %v4708 = vld [vmem:[%s8] sm:$0xff]
    %v4709 = vld [vmem:[%s8 + $0x8] sm:$0xff]
    %v4710 = vld [vmem:[%s8 + $0x10] sm:$0xff]
    %v4711 = vld [vmem:[%s8 + $0x18] sm:$0xff]
    %v4712 = vld [vmem:[%s8 + $0x20] sm:$0xff]
    %v4713 = vld [vmem:[%s8 + $0x28] sm:$0xff]
    %v4714 = vld [vmem:[%s8 + $0x30] sm:$0xff]
    %v4715 = vld [vmem:[%s8 + $0x38] sm:$0xff]
    %v4716 = vld [vmem:[%s8 + $0x40] sm:$0xff]
    %v4717 = vld [vmem:[%s8 + $0x48] sm:$0xff]
    %v4718 = vld [vmem:[%s8 + $0x50] sm:$0xff]
    %v4719 = vld [vmem:[%s8 + $0x58] sm:$0xff]
    %v4720 = vld [vmem:[%s8 + $0x60] sm:$0xff]
    %v4721 = vld [vmem:[%s8 + $0x68] sm:$0xff]
    %v4722 = vld [vmem:[%s8 + $0x70] sm:$0xff]
    %v4723 = vld [vmem:[%s8 + $0x78] sm:$0xff]
    %v4724 = vld [vmem:[%s8 + $0x80] sm:$0xff]
    %v4725 = vld [vmem:[%s8 + $0x88] sm:$0xff]
    %v4726 = vld [vmem:[%s8 + $0x90] sm:$0xff]
    %v4727 = vld [vmem:[%s8 + $0x98] sm:$0xff]
    %v4728 = vld [vmem:[%s8 + $0xa0] sm:$0xff]
    %v4729 = vld [vmem:[%s8 + $0xa8] sm:$0xff]
    %v4730 = vld [vmem:[%s8 + $0xb0] sm:$0xff]
    %v4731 = vld [vmem:[%s8 + $0xb8] sm:$0xff]
    %v4732 = vld [vmem:[%s8 + $0xc0] sm:$0xff]
    %v4733 = vld [vmem:[%s8 + $0xc8] sm:$0xff]
    %v4734 = vld [vmem:[%s8 + $0xd0] sm:$0xff]
    %v4735 = vld [vmem:[%s8 + $0xd8] sm:$0xff]
    %v4736 = vld [vmem:[%s8 + $0xe0] sm:$0xff]
    %v4737 = vld [vmem:[%s8 + $0xe8] sm:$0xff]
    %v4738 = vld [vmem:[%s8 + $0xf0] sm:$0xff]
    %v4739 = vld [vmem:[%s8 + $0xf8] sm:$0xff]
    %v4740 = vmul.f32 %v4676, %v4708
    %v4741 = vmul.f32 %v4677, %v4709
    %v4742 = vmul.f32 %v4678, %v4710
    %v4743 = vmul.f32 %v4679, %v4711
    %v4744 = vmul.f32 %v4680, %v4712
    %v4745 = vmul.f32 %v4681, %v4713
    %v4746 = vmul.f32 %v4682, %v4714
    %v4747 = vmul.f32 %v4683, %v4715
    %v4748 = vmul.f32 %v4684, %v4716
    %v4749 = vmul.f32 %v4685, %v4717
    %v4750 = vmul.f32 %v4686, %v4718
    %v4751 = vmul.f32 %v4687, %v4719
    %v4752 = vmul.f32 %v4688, %v4720
    %v4753 = vmul.f32 %v4689, %v4721
    %v4754 = vmul.f32 %v4690, %v4722
    %v4755 = vmul.f32 %v4691, %v4723
    %v4756 = vmul.f32 %v4692, %v4724
    %v4757 = vmul.f32 %v4693, %v4725
    %v4758 = vmul.f32 %v4694, %v4726
    %v4759 = vmul.f32 %v4695, %v4727
    %v4760 = vmul.f32 %v4696, %v4728
    %v4761 = vmul.f32 %v4697, %v4729
    %v4762 = vmul.f32 %v4698, %v4730
    %v4763 = vmul.f32 %v4699, %v4731
    %v4764 = vmul.f32 %v4700, %v4732
    %v4765 = vmul.f32 %v4701, %v4733
    %v4766 = vmul.f32 %v4702, %v4734
    %v4767 = vmul.f32 %v4703, %v4735
    %v4768 = vmul.f32 %v4704, %v4736
    %v4769 = vmul.f32 %v4705, %v4737
    %v4770 = vmul.f32 %v4706, %v4738
    %v4771 = vmul.f32 %v4707, %v4739
    %vm4772 = vcmask 15360
    %v4773 = vsel %vm4772, %v4740, 0.0
    %v4774 = vsel %vm4772, %v4741, 0.0
    %v4775 = vadd.f32 %v4773, %v4774
    %v4776 = vsel %vm4772, %v4742, 0.0
    %v4777 = vadd.f32 %v4775, %v4776
    %v4778 = vsel %vm4772, %v4743, 0.0
    %v4779 = vadd.f32 %v4777, %v4778
    %v4780 = vsel %vm4772, %v4744, 0.0
    %v4781 = vadd.f32 %v4779, %v4780
    %v4782 = vsel %vm4772, %v4745, 0.0
    %v4783 = vadd.f32 %v4781, %v4782
    %v4784 = vsel %vm4772, %v4746, 0.0
    %v4785 = vadd.f32 %v4783, %v4784
    %v4786 = vsel %vm4772, %v4747, 0.0
    %v4787 = vadd.f32 %v4785, %v4786
    %v4788 = vsel %vm4772, %v4748, 0.0
    %v4789 = vadd.f32 %v4787, %v4788
    %v4790 = vsel %vm4772, %v4749, 0.0
    %v4791 = vadd.f32 %v4789, %v4790
    %v4792 = vsel %vm4772, %v4750, 0.0
    %v4793 = vadd.f32 %v4791, %v4792
    %v4794 = vsel %vm4772, %v4751, 0.0
    %v4795 = vadd.f32 %v4793, %v4794
    %v4796 = vsel %vm4772, %v4752, 0.0
    %v4797 = vadd.f32 %v4795, %v4796
    %v4798 = vsel %vm4772, %v4753, 0.0
    %v4799 = vadd.f32 %v4797, %v4798
    %v4800 = vsel %vm4772, %v4754, 0.0
    %v4801 = vadd.f32 %v4799, %v4800
    %v4802 = vsel %vm4772, %v4755, 0.0
    %v4803 = vadd.f32 %v4801, %v4802
    %v4804 = vsel %vm4772, %v4756, 0.0
    %v4805 = vadd.f32 %v4803, %v4804
    %v4806 = vsel %vm4772, %v4757, 0.0
    %v4807 = vadd.f32 %v4805, %v4806
    %v4808 = vsel %vm4772, %v4758, 0.0
    %v4809 = vadd.f32 %v4807, %v4808
    %v4810 = vsel %vm4772, %v4759, 0.0
    %v4811 = vadd.f32 %v4809, %v4810
    %v4812 = vsel %vm4772, %v4760, 0.0
    %v4813 = vadd.f32 %v4811, %v4812
    %v4814 = vsel %vm4772, %v4761, 0.0
    %v4815 = vadd.f32 %v4813, %v4814
    %v4816 = vsel %vm4772, %v4762, 0.0
    %v4817 = vadd.f32 %v4815, %v4816
    %v4818 = vsel %vm4772, %v4763, 0.0
    %v4819 = vadd.f32 %v4817, %v4818
    %v4820 = vsel %vm4772, %v4764, 0.0
    %v4821 = vadd.f32 %v4819, %v4820
    %v4822 = vsel %vm4772, %v4765, 0.0
    %v4823 = vadd.f32 %v4821, %v4822
    %v4824 = vsel %vm4772, %v4766, 0.0
    %v4825 = vadd.f32 %v4823, %v4824
    %v4826 = vsel %vm4772, %v4767, 0.0
    %v4827 = vadd.f32 %v4825, %v4826
    %v4828 = vsel %vm4772, %v4768, 0.0
    %v4829 = vadd.f32 %v4827, %v4828
    %v4830 = vsel %vm4772, %v4769, 0.0
    %v4831 = vadd.f32 %v4829, %v4830
    %v4832 = vsel %vm4772, %v4770, 0.0
    %v4833 = vadd.f32 %v4831, %v4832
    %v4834 = vsel %vm4772, %v4771, 0.0
    %v4835 = vadd.f32 %v4833, %v4834
    %v4836 = vrot.slane %v4835, 4
    %v4837 = vadd.f32 %v4835, %v4836
    %v4838 = vrot.slane %v4837, 2
    %v4839 = vadd.f32 %v4837, %v4838
    %v4840 = vrot.slane %v4839, 1
    %v4841 = vadd.f32 %v4839, %v4840
    %4874 = vrot.lane.b32.xlu0 %v390, 64
    %v4875 = vpop.permute.xlu0 %4874
    %4876 = vrot.lane.b32.xlu0 %v393, 64
    %v4877 = vpop.permute.xlu0 %4876
    %4878 = vrot.lane.b32.xlu0 %v398, 64
    %v4879 = vpop.permute.xlu0 %4878
    %4880 = vrot.lane.b32.xlu0 %v401, 64
    %v4881 = vpop.permute.xlu0 %4880
    %4882 = vrot.lane.b32.xlu0 %v406, 64
    %v4883 = vpop.permute.xlu0 %4882
    %4884 = vrot.lane.b32.xlu0 %v409, 64
    %v4885 = vpop.permute.xlu0 %4884
    %4886 = vrot.lane.b32.xlu0 %v414, 64
    %v4887 = vpop.permute.xlu0 %4886
    %4888 = vrot.lane.b32.xlu0 %v417, 64
    %v4889 = vpop.permute.xlu0 %4888
    %4890 = vrot.lane.b32.xlu0 %v422, 64
    %v4891 = vpop.permute.xlu0 %4890
    %4892 = vrot.lane.b32.xlu0 %v425, 64
    %v4893 = vpop.permute.xlu0 %4892
    %4894 = vrot.lane.b32.xlu0 %v430, 64
    %v4895 = vpop.permute.xlu0 %4894
    %4896 = vrot.lane.b32.xlu0 %v433, 64
    %v4897 = vpop.permute.xlu0 %4896
    %4898 = vrot.lane.b32.xlu0 %v438, 64
    %v4899 = vpop.permute.xlu0 %4898
    %4900 = vrot.lane.b32.xlu0 %v441, 64
    %v4901 = vpop.permute.xlu0 %4900
    %4902 = vrot.lane.b32.xlu0 %v446, 64
    %v4903 = vpop.permute.xlu0 %4902
    %4904 = vrot.lane.b32.xlu0 %v449, 64
    %v4905 = vpop.permute.xlu0 %4904
    %4906 = vrot.lane.b32.xlu0 %v454, 64
    %v4907 = vpop.permute.xlu0 %4906
    %4908 = vrot.lane.b32.xlu0 %v457, 64
    %v4909 = vpop.permute.xlu0 %4908
    %4910 = vrot.lane.b32.xlu0 %v462, 64
    %v4911 = vpop.permute.xlu0 %4910
    %4912 = vrot.lane.b32.xlu0 %v465, 64
    %v4913 = vpop.permute.xlu0 %4912
    %4914 = vrot.lane.b32.xlu0 %v470, 64
    %v4915 = vpop.permute.xlu0 %4914
    %4916 = vrot.lane.b32.xlu0 %v473, 64
    %v4917 = vpop.permute.xlu0 %4916
    %4918 = vrot.lane.b32.xlu0 %v478, 64
    %v4919 = vpop.permute.xlu0 %4918
    %4920 = vrot.lane.b32.xlu0 %v481, 64
    %v4921 = vpop.permute.xlu0 %4920
    %4922 = vrot.lane.b32.xlu0 %v486, 64
    %v4923 = vpop.permute.xlu0 %4922
    %4924 = vrot.lane.b32.xlu0 %v489, 64
    %v4925 = vpop.permute.xlu0 %4924
    %4926 = vrot.lane.b32.xlu0 %v494, 64
    %v4927 = vpop.permute.xlu0 %4926
    %4928 = vrot.lane.b32.xlu0 %v497, 64
    %v4929 = vpop.permute.xlu0 %4928
    %4930 = vrot.lane.b32.xlu0 %v502, 64
    %v4931 = vpop.permute.xlu0 %4930
    %4932 = vrot.lane.b32.xlu0 %v505, 64
    %v4933 = vpop.permute.xlu0 %4932
    %4934 = vrot.lane.b32.xlu0 %v510, 64
    %v4935 = vpop.permute.xlu0 %4934
    %4936 = vrot.lane.b32.xlu0 %v513, 64
    %v4937 = vpop.permute.xlu0 %4936
    %v4970 = vsel %vm4193, %v4875, 0.0
    %4971 = vadd.xlane.f32.xlu0 %v4970
    %v4972 = vpop.xlane.xlu0 %4971
    %v4973 = vsel %vm4193, %v4877, 0.0
    %4974 = vadd.xlane.f32.xlu0 %v4973
    %v4975 = vpop.xlane.xlu0 %4974
    %v4976 = vsel %vm4193, %v4879, 0.0
    %4977 = vadd.xlane.f32.xlu0 %v4976
    %v4978 = vpop.xlane.xlu0 %4977
    %v4979 = vsel %vm4193, %v4881, 0.0
    %4980 = vadd.xlane.f32.xlu0 %v4979
    %v4981 = vpop.xlane.xlu0 %4980
    %v4982 = vsel %vm4193, %v4883, 0.0
    %4983 = vadd.xlane.f32.xlu0 %v4982
    %v4984 = vpop.xlane.xlu0 %4983
    %v4985 = vsel %vm4193, %v4885, 0.0
    %4986 = vadd.xlane.f32.xlu0 %v4985
    %v4987 = vpop.xlane.xlu0 %4986
    %v4988 = vsel %vm4193, %v4887, 0.0
    %4989 = vadd.xlane.f32.xlu0 %v4988
    %v4990 = vpop.xlane.xlu0 %4989
    %v4991 = vsel %vm4193, %v4889, 0.0
    %4992 = vadd.xlane.f32.xlu0 %v4991
    %v4993 = vpop.xlane.xlu0 %4992
    %v4994 = vsel %vm4193, %v4891, 0.0
    %4995 = vadd.xlane.f32.xlu0 %v4994
    %v4996 = vpop.xlane.xlu0 %4995
    %v4997 = vsel %vm4193, %v4893, 0.0
    %4998 = vadd.xlane.f32.xlu0 %v4997
    %v4999 = vpop.xlane.xlu0 %4998
    %v5000 = vsel %vm4193, %v4895, 0.0
    %5001 = vadd.xlane.f32.xlu0 %v5000
    %v5002 = vpop.xlane.xlu0 %5001
    %v5003 = vsel %vm4193, %v4897, 0.0
    %5004 = vadd.xlane.f32.xlu0 %v5003
    %v5005 = vpop.xlane.xlu0 %5004
    %v5006 = vsel %vm4193, %v4899, 0.0
    %5007 = vadd.xlane.f32.xlu0 %v5006
    %v5008 = vpop.xlane.xlu0 %5007
    %v5009 = vsel %vm4193, %v4901, 0.0
    %5010 = vadd.xlane.f32.xlu0 %v5009
    %v5011 = vpop.xlane.xlu0 %5010
    %v5012 = vsel %vm4193, %v4903, 0.0
    %5013 = vadd.xlane.f32.xlu0 %v5012
    %v5014 = vpop.xlane.xlu0 %5013
    %v5015 = vsel %vm4193, %v4905, 0.0
    %5016 = vadd.xlane.f32.xlu0 %v5015
    %v5017 = vpop.xlane.xlu0 %5016
    %v5018 = vsel %vm4193, %v4907, 0.0
    %5019 = vadd.xlane.f32.xlu0 %v5018
    %v5020 = vpop.xlane.xlu0 %5019
    %v5021 = vsel %vm4193, %v4909, 0.0
    %5022 = vadd.xlane.f32.xlu0 %v5021
    %v5023 = vpop.xlane.xlu0 %5022
    %v5024 = vsel %vm4193, %v4911, 0.0
    %5025 = vadd.xlane.f32.xlu0 %v5024
    %v5026 = vpop.xlane.xlu0 %5025
    %v5027 = vsel %vm4193, %v4913, 0.0
    %5028 = vadd.xlane.f32.xlu0 %v5027
    %v5029 = vpop.xlane.xlu0 %5028
    %v5030 = vsel %vm4193, %v4915, 0.0
    %5031 = vadd.xlane.f32.xlu0 %v5030
    %v5032 = vpop.xlane.xlu0 %5031
    %v5033 = vsel %vm4193, %v4917, 0.0
    %5034 = vadd.xlane.f32.xlu0 %v5033
    %v5035 = vpop.xlane.xlu0 %5034
    %v5036 = vsel %vm4193, %v4919, 0.0
    %5037 = vadd.xlane.f32.xlu0 %v5036
    %v5038 = vpop.xlane.xlu0 %5037
    %v5039 = vsel %vm4193, %v4921, 0.0
    %5040 = vadd.xlane.f32.xlu0 %v5039
    %v5041 = vpop.xlane.xlu0 %5040
    %v5042 = vsel %vm4193, %v4923, 0.0
    %5043 = vadd.xlane.f32.xlu0 %v5042
    %v5044 = vpop.xlane.xlu0 %5043
    %v5045 = vsel %vm4193, %v4925, 0.0
    %5046 = vadd.xlane.f32.xlu0 %v5045
    %v5047 = vpop.xlane.xlu0 %5046
    %v5048 = vsel %vm4193, %v4927, 0.0
    %5049 = vadd.xlane.f32.xlu0 %v5048
    %v5050 = vpop.xlane.xlu0 %5049
    %v5051 = vsel %vm4193, %v4929, 0.0
    %5052 = vadd.xlane.f32.xlu0 %v5051
    %v5053 = vpop.xlane.xlu0 %5052
    %v5054 = vsel %vm4193, %v4931, 0.0
    %5055 = vadd.xlane.f32.xlu0 %v5054
    %v5056 = vpop.xlane.xlu0 %5055
    %v5057 = vsel %vm4193, %v4933, 0.0
    %5058 = vadd.xlane.f32.xlu0 %v5057
    %v5059 = vpop.xlane.xlu0 %5058
    %v5060 = vsel %vm4193, %v4935, 0.0
    %5061 = vadd.xlane.f32.xlu0 %v5060
    %v5062 = vpop.xlane.xlu0 %5061
    %v5063 = vsel %vm4193, %v4937, 0.0
    %5064 = vadd.xlane.f32.xlu0 %v5063
    %v5065 = vpop.xlane.xlu0 %5064
    %v5066 = vmul.f32 %v4972, %v4675
    %v5067 = vmul.f32 %v4975, %v4675
    %v5068 = vmul.f32 %v4978, %v4675
    %v5069 = vmul.f32 %v4981, %v4675
    %v5070 = vmul.f32 %v4984, %v4675
    %v5071 = vmul.f32 %v4987, %v4675
    %v5072 = vmul.f32 %v4990, %v4675
    %v5073 = vmul.f32 %v4993, %v4675
    %v5074 = vmul.f32 %v4996, %v4675
    %v5075 = vmul.f32 %v4999, %v4675
    %v5076 = vmul.f32 %v5002, %v4675
    %v5077 = vmul.f32 %v5005, %v4675
    %v5078 = vmul.f32 %v5008, %v4675
    %v5079 = vmul.f32 %v5011, %v4675
    %v5080 = vmul.f32 %v5014, %v4675
    %v5081 = vmul.f32 %v5017, %v4675
    %v5082 = vmul.f32 %v5020, %v4675
    %v5083 = vmul.f32 %v5023, %v4675
    %v5084 = vmul.f32 %v5026, %v4675
    %v5085 = vmul.f32 %v5029, %v4675
    %v5086 = vmul.f32 %v5032, %v4675
    %v5087 = vmul.f32 %v5035, %v4675
    %v5088 = vmul.f32 %v5038, %v4675
    %v5089 = vmul.f32 %v5041, %v4675
    %v5090 = vmul.f32 %v5044, %v4675
    %v5091 = vmul.f32 %v5047, %v4675
    %v5092 = vmul.f32 %v5050, %v4675
    %v5093 = vmul.f32 %v5053, %v4675
    %v5094 = vmul.f32 %v5056, %v4675
    %v5095 = vmul.f32 %v5059, %v4675
    %v5096 = vmul.f32 %v5062, %v4675
    %v5097 = vmul.f32 %v5065, %v4675
    %v5098 = vmul.f32 %v5066, %v4708
    %v5099 = vmul.f32 %v5067, %v4709
    %v5100 = vmul.f32 %v5068, %v4710
    %v5101 = vmul.f32 %v5069, %v4711
    %v5102 = vmul.f32 %v5070, %v4712
    %v5103 = vmul.f32 %v5071, %v4713
    %v5104 = vmul.f32 %v5072, %v4714
    %v5105 = vmul.f32 %v5073, %v4715
    %v5106 = vmul.f32 %v5074, %v4716
    %v5107 = vmul.f32 %v5075, %v4717
    %v5108 = vmul.f32 %v5076, %v4718
    %v5109 = vmul.f32 %v5077, %v4719
    %v5110 = vmul.f32 %v5078, %v4720
    %v5111 = vmul.f32 %v5079, %v4721
    %v5112 = vmul.f32 %v5080, %v4722
    %v5113 = vmul.f32 %v5081, %v4723
    %v5114 = vmul.f32 %v5082, %v4724
    %v5115 = vmul.f32 %v5083, %v4725
    %v5116 = vmul.f32 %v5084, %v4726
    %v5117 = vmul.f32 %v5085, %v4727
    %v5118 = vmul.f32 %v5086, %v4728
    %v5119 = vmul.f32 %v5087, %v4729
    %v5120 = vmul.f32 %v5088, %v4730
    %v5121 = vmul.f32 %v5089, %v4731
    %v5122 = vmul.f32 %v5090, %v4732
    %v5123 = vmul.f32 %v5091, %v4733
    %v5124 = vmul.f32 %v5092, %v4734
    %v5125 = vmul.f32 %v5093, %v4735
    %v5126 = vmul.f32 %v5094, %v4736
    %v5127 = vmul.f32 %v5095, %v4737
    %v5128 = vmul.f32 %v5096, %v4738
    %v5129 = vmul.f32 %v5097, %v4739
    %v5130 = vsel %vm4772, %v5098, 0.0
    %v5131 = vsel %vm4772, %v5099, 0.0
    %v5132 = vadd.f32 %v5130, %v5131
    %v5133 = vsel %vm4772, %v5100, 0.0
    %v5134 = vadd.f32 %v5132, %v5133
    %v5135 = vsel %vm4772, %v5101, 0.0
    %v5136 = vadd.f32 %v5134, %v5135
    %v5137 = vsel %vm4772, %v5102, 0.0
    %v5138 = vadd.f32 %v5136, %v5137
    %v5139 = vsel %vm4772, %v5103, 0.0
    %v5140 = vadd.f32 %v5138, %v5139
    %v5141 = vsel %vm4772, %v5104, 0.0
    %v5142 = vadd.f32 %v5140, %v5141
    %v5143 = vsel %vm4772, %v5105, 0.0
    %v5144 = vadd.f32 %v5142, %v5143
    %v5145 = vsel %vm4772, %v5106, 0.0
    %v5146 = vadd.f32 %v5144, %v5145
    %v5147 = vsel %vm4772, %v5107, 0.0
    %v5148 = vadd.f32 %v5146, %v5147
    %v5149 = vsel %vm4772, %v5108, 0.0
    %v5150 = vadd.f32 %v5148, %v5149
    %v5151 = vsel %vm4772, %v5109, 0.0
    %v5152 = vadd.f32 %v5150, %v5151
    %v5153 = vsel %vm4772, %v5110, 0.0
    %v5154 = vadd.f32 %v5152, %v5153
    %v5155 = vsel %vm4772, %v5111, 0.0
    %v5156 = vadd.f32 %v5154, %v5155
    %v5157 = vsel %vm4772, %v5112, 0.0
    %v5158 = vadd.f32 %v5156, %v5157
    %v5159 = vsel %vm4772, %v5113, 0.0
    %v5160 = vadd.f32 %v5158, %v5159
    %v5161 = vsel %vm4772, %v5114, 0.0
    %v5162 = vadd.f32 %v5160, %v5161
    %v5163 = vsel %vm4772, %v5115, 0.0
    %v5164 = vadd.f32 %v5162, %v5163
    %v5165 = vsel %vm4772, %v5116, 0.0
    %v5166 = vadd.f32 %v5164, %v5165
    %v5167 = vsel %vm4772, %v5117, 0.0
    %v5168 = vadd.f32 %v5166, %v5167
    %v5169 = vsel %vm4772, %v5118, 0.0
    %v5170 = vadd.f32 %v5168, %v5169
    %v5171 = vsel %vm4772, %v5119, 0.0
    %v5172 = vadd.f32 %v5170, %v5171
    %v5173 = vsel %vm4772, %v5120, 0.0
    %v5174 = vadd.f32 %v5172, %v5173
    %v5175 = vsel %vm4772, %v5121, 0.0
    %v5176 = vadd.f32 %v5174, %v5175
    %v5177 = vsel %vm4772, %v5122, 0.0
    %v5178 = vadd.f32 %v5176, %v5177
    %v5179 = vsel %vm4772, %v5123, 0.0
    %v5180 = vadd.f32 %v5178, %v5179
    %v5181 = vsel %vm4772, %v5124, 0.0
    %v5182 = vadd.f32 %v5180, %v5181
    %v5183 = vsel %vm4772, %v5125, 0.0
    %v5184 = vadd.f32 %v5182, %v5183
    %v5185 = vsel %vm4772, %v5126, 0.0
    %v5186 = vadd.f32 %v5184, %v5185
    %v5187 = vsel %vm4772, %v5127, 0.0
    %v5188 = vadd.f32 %v5186, %v5187
    %v5189 = vsel %vm4772, %v5128, 0.0
    %v5190 = vadd.f32 %v5188, %v5189
    %v5191 = vsel %vm4772, %v5129, 0.0
    %v5192 = vadd.f32 %v5190, %v5191
    %v5193 = vrot.slane %v5192, 4
    %v5194 = vadd.f32 %v5192, %v5193
    %v5195 = vrot.slane %v5194, 2
    %v5196 = vadd.f32 %v5194, %v5195
    %v5197 = vrot.slane %v5196, 1
    %v5198 = vadd.f32 %v5196, %v5197
    %vm5199 = vcmask 1040384
    %v5200 = vsel %vm5199, %v4841, %v5198
    %v5201 = vld [vmem:[%s9] sm:$0x1]
    %v5203 = vlaneseq
    %v5204 = vshrl.u32 %v5203, 7
    %v5205 = vsub.s32 0, %v5204
    %v5206 = vrot.slane %v5201, %v5205
    %v5208 = vadd.f32 %v5200, %v5206
    %vm5209 = vcmask 9216
    %5210 = vst.msk [vmem:[#allocation2] sm:$0x3] %vm5209, %v5208
    // Predicated region
    $region46: #{auto_sam_seg_forward.3} parent=1 // pred_check
      _
    $region47: #{auto_sam_seg_forward.3} parent=1 // pred_check_branch
      %5212 = sbr.rel (0) target = $region49
    $region48: #{auto_sam_seg_forward.3} parent=1 // pred_region
      _
    $region49: #{auto_sam_seg_forward.3} parent=1 // pred_fallthru
      _
    // Predicated region
    $region50: #{auto_sam_seg_forward.3} parent=1 // pred_check
      _
    $region51: #{auto_sam_seg_forward.3} parent=1 // pred_check_branch
      %5214 = sbr.rel (0) target = $region53
    $region52: #{auto_sam_seg_forward.3} parent=1 // pred_region
      %s5216 = ssub.s32 32, 32
      %5217 = vsyncadd [#allocation3], %s5216
      %s5219 = sshll.u32 [#allocation2], 4
      %s5220 = int_to_ptr.vmem [resolvable:$true] %s5219
      %5222 = dma.vmem_to_hbm [thread:$0]  %s5220, 32, %s12, [#allocation3]
    $region53: #{auto_sam_seg_forward.3} parent=1 // pred_fallthru
      _
    // Predicated region
    $region54: #{auto_sam_seg_forward.3} parent=1 // pred_check
      _
    $region55: #{auto_sam_seg_forward.3} parent=1 // pred_check_branch
      %5224 = sbr.rel (0) target = $region57
    $region56: #{auto_sam_seg_forward.3} parent=1 // pred_region
      _
    $region57: #{auto_sam_seg_forward.3} parent=1 // pred_fallthru
      _
    // Predicated region
    $region58: #{auto_sam_seg_forward.3} parent=1 // pred_check
      _
    $region59: #{auto_sam_seg_forward.3} parent=1 // pred_check_branch
      %5226 = sbr.rel (0) target = $region61
    $region60: #{auto_sam_seg_forward.3} parent=1 // pred_region
      %5227 = dma.done [#allocation3], 32
    $region61: #{auto_sam_seg_forward.3} parent=1 // pred_fallthru
      _
    %5228 = vsyncpa [#allocation3], 1

</llo_original>
